<compile_context>
chip_gen: v5e
topology: v5e:2x2
jax: 0.10.0
libtpu: 0.0.40
codegen_flags: <defaults>
</compile_context>

<pallas_src>
import functools

import jax
import jax.numpy as jnp
from jax import lax
from jax.experimental import pallas as pl
from jax.experimental.pallas import tpu as pltpu


def _round_up(x, m):
    return (x + m - 1) // m * m


def _strips(total, pref):
    """Static (start, size) strips covering [0, total); sizes multiples of 8."""
    out, start = [], 0
    while start < total:
        size = min(pref, total - start)
        out.append((start, size))
        start += size
    return out


# ----------------------------------------------------------------------------
# Fused kernel, per batch element:
#   phase A (per 128-row strip of the zero-padded image):
#       y = relu(x_aug @ w1_aug)          (VPU FMAs; indicator channel = BN shift
#                                          + zero-pad ring in one shot)
#       z = y(bf16) @ Wpacked(bf16)       (ONE MXU matmul; 9 taps packed on N,
#                                          BN scale folded)        -> z scratch
#   phase B (per 128-row strip of the output rows):
#       acc = sum over 9 taps of lane-rolled, row-shifted z slices  (XLU+VPU)
#       out = relu(acc + t2)              single lane-dense 128-wide store
# ----------------------------------------------------------------------------
def _fused_aspp_br3_kernel(x_ref, w1_ref, wp_ref, t2_ref, o_ref, z_ref, *,
                           Wp, dil, Cout, R1, Mo, Rz, SP_A, SP_B):
    Ca = w1_ref.shape[0]          # Cin + 1 (indicator channel)
    w1v = w1_ref[...]             # (Ca, C1) f32, BN scale + shift folded in
    wpv = wp_ref[...]             # (C1, 128) bf16, 9 taps packed along lanes
    t2v = t2_ref[...]             # (1, 128) f32, zero beyond Cout

    # ---------------- phase A: stage 1 + packed stage-2 matmul ----------------
    for (pb, Sp) in _strips(R1, SP_A):
        xs = x_ref[pl.ds(pb, Sp), :]                       # (Sp, Ca)
        if Ca <= 16:
            # VPU broadcast-FMA path (tiny Cin: avoid a 4-deep MXU RHS)
            acc1 = xs[:, 0:1] * w1v[0:1, :]
            for c in range(1, Ca):
                acc1 = acc1 + xs[:, c:c + 1] * w1v[c:c + 1, :]
        else:
            acc1 = jnp.dot(xs, w1v, preferred_element_type=jnp.float32)
        y = jnp.maximum(acc1, 0.0)                         # pad rows -> exactly 0
        z_ref[pl.ds(pb, Sp), :] = jnp.dot(
            y.astype(jnp.bfloat16), wpv, preferred_element_type=jnp.float32)

    if Rz > R1:   # zero tail so the largest aligned tap window stays in-bounds
        z_ref[pl.ds(R1, Rz - R1), :] = jnp.zeros((Rz - R1, 128), jnp.float32)

    # ---------------- phase B: recombine the 9 packed taps --------------------
    offs = [ky * dil * Wp + kx * dil for ky in range(3) for kx in range(3)]
    for (sb, S) in _strips(Mo, SP_B):
        acc = None
        for t, off in enumerate(offs):
            total = sb + off
            rem = total % 8
            base = total - rem
            if rem == 0:
                tap = z_ref[pl.ds(base, S), :]             # aligned load
            else:
                # 8-aligned window + static sublane roll (XLU), no unaligned slice
                win = z_ref[pl.ds(base, S + 8), :]
                tap = pltpu.roll(win, S + 8 - rem, axis=0)[:S, :]
            if t > 0:
                # move column group [t*Cout, (t+1)*Cout) onto lanes [0, Cout)
                tap = pltpu.roll(tap, 128 - t * Cout, axis=1)
            acc = tap if acc is None else acc + tap
        # fused BN shift + ReLU, ONE lane-dense store per strip (no o_ref RMW)
        o_ref[pl.ds(sb, S), :] = jnp.maximum(acc + t2v, 0.0).astype(o_ref.dtype)


# ----------------------------------------------------------------------------
# Module wrapper (NCHW in / NCHW out, like the PyTorch module)
# ----------------------------------------------------------------------------
def fold_bn(conv_bias, gamma, beta, mean, var, eps=1e-5):
    s = gamma / jnp.sqrt(var + eps)
    t = (conv_bias - mean) * s + beta
    return s.astype(jnp.float32), t.astype(jnp.float32)


def aspp_br3_forward(x_nchw, params, *, dil=4):
    N, Cin, H, W = x_nchw.shape
    C1 = params["w1"].shape[1]                    # 128 intermediate channels
    Cout = params["w2"].shape[-1]
    assert 9 * Cout <= 128, (
        "TODO(synk): fall back to per-tap matmuls when 9*Cout > 128")
    pad = dil                                     # padding=4, dilation=4 -> same
    Hp, Wp = H + 2 * pad, W + 2 * pad

    # fold BN (running stats) into the conv weights / shifts
    s1, t1 = fold_bn(params["b1"], params["g1"], params["be1"],
                     params["m1"], params["v1"])
    s2, t2 = fold_bn(params["b2"], params["g2"], params["be2"],
                     params["m2"], params["v2"])

    # stage-1 weights: BN scale folded in; BN shift appended as the weight row
    # of an extra "indicator" channel (1 inside the HxW image, 0 on pad rows)
    w1f = params["w1"].astype(jnp.float32) * s1[None, :]           # (Cin, C1)
    w1a = jnp.concatenate([w1f, t1.reshape(1, C1)], axis=0)        # (Cin+1, C1)

    # stage-2 weights: 9 taps packed along the MXU N axis, BN scale folded,
    # zero-padded to a lane-dense 128, cast to bf16
    w2 = params["w2"].astype(jnp.float32) * s2[None, None, None, :]  # (3,3,C1,Cout)
    wp = jnp.transpose(w2, (2, 0, 1, 3)).reshape(C1, 9 * Cout)
    wpf = jnp.zeros((C1, 128), jnp.float32).at[:, :9 * Cout].set(wp)
    wpf = wpf.astype(jnp.bfloat16)
    t2p = jnp.zeros((1, 128), jnp.float32).at[:, :Cout].set(t2.reshape(1, Cout))

    # geometry of the flat (rows, channels) layout
    R1 = _round_up(Hp * Wp, 8)                    # padded-image rows (x / z store)
    M = H * Wp                                    # output rows (W-pad depadded later)
    Mo = _round_up(M, 8)
    max_off = 2 * dil * Wp + 2 * dil
    Rz = _round_up(max(R1, Mo + max_off + 8), 8)  # z scratch rows (incl. window slack)

    # NHWC, zero-pad spatially, flatten spatial, pad rows to R1, append indicator
    x = jnp.transpose(x_nchw, (0, 2, 3, 1)).astype(jnp.float32)
    xp = jnp.pad(x, ((0, 0), (pad, pad), (pad, pad), (0, 0))).reshape(N, Hp * Wp, Cin)
    if R1 > Hp * Wp:
        xp = jnp.pad(xp, ((0, 0), (0, R1 - Hp * Wp), (0, 0)))
    hh = jnp.arange(Hp)
    ww = jnp.arange(Wp)
    m2d = (((hh >= pad) & (hh < pad + H))[:, None]
           & ((ww >= pad) & (ww < pad + W))[None, :])
    ind = jnp.pad(m2d.reshape(Hp * Wp).astype(jnp.float32), (0, R1 - Hp * Wp))
    x_aug = jnp.concatenate(
        [xp, jnp.broadcast_to(ind[None, :, None], (N, R1, 1))], axis=-1)

    kern = functools.partial(_fused_aspp_br3_kernel, Wp=Wp, dil=dil, Cout=Cout,
                             R1=R1, Mo=Mo, Rz=Rz, SP_A=128, SP_B=128)

    flops = N * (2 * R1 * (Cin + 1) * C1 + 2 * R1 * C1 * 128 + 10 * Mo * 128)
    bytes_accessed = (4 * x_aug.size + 4 * w1a.size + 2 * wpf.size
                      + 4 * t2p.size + 4 * N * Mo * 128)

    out = pl.pallas_call(
        kern,
        out_shape=jax.ShapeDtypeStruct((N, Mo, 128), jnp.float32),
        grid_spec=pltpu.PrefetchScalarGridSpec(
            num_scalar_prefetch=0,
            grid=(N,),
            in_specs=[
                pl.BlockSpec((None, R1, Cin + 1), lambda n: (n, 0, 0)),  # x (+indicator)
                pl.BlockSpec((Cin + 1, C1), lambda n: (0, 0)),           # w1*s1 | t1
                pl.BlockSpec((C1, 128), lambda n: (0, 0)),               # packed w2*s2 (bf16)
                pl.BlockSpec((1, 128), lambda n: (0, 0)),                # t2 (padded)
            ],
            out_specs=pl.BlockSpec((None, Mo, 128), lambda n: (n, 0, 0)),
            scratch_shapes=[pltpu.VMEM((Rz, 128), jnp.float32)],
        ),
        compiler_params=pltpu.CompilerParams(
            dimension_semantics=("parallel",),
            vmem_limit_bytes=32 * 1024 * 1024),
        cost_estimate=pl.CostEstimate(flops=flops, transcendentals=0,
                                      bytes_accessed=bytes_accessed),
    )(x_aug, w1a, wpf, t2p)

    # de-pad: (N, Mo, 128) -> (N, H, W, Cout) -> NCHW
    out = out[:, :M, :Cout].reshape(N, H, Wp, Cout)[:, :, :W, :]
    return jnp.transpose(out, (0, 3, 1, 2))


# ----------------------------------------------------------------------------
# Pure-JAX reference (for correctness check)
# ----------------------------------------------------------------------------
def aspp_br3_reference(x_nchw, params, eps=1e-5):
    # stage 1
    w1 = jnp.transpose(params["w1"], (1, 0))[:, :, None, None]  # OIHW
    y = lax.conv_general_dilated(x_nchw, w1, (1, 1), "VALID",
                                 dimension_numbers=("NCHW", "OIHW", "NCHW"))
    y = y + params["b1"][None, :, None, None]
    y = (y - params["m1"][None, :, None, None]) / jnp.sqrt(
        params["v1"][None, :, None, None] + eps)
    y = y * params["g1"][None, :, None, None] + params["be1"][None, :, None, None]
    y = jnp.maximum(y, 0.0)
    # stage 2
    w2 = jnp.transpose(params["w2"], (3, 2, 0, 1))               # OIHW
    z = lax.conv_general_dilated(y, w2, (1, 1), [(4, 4), (4, 4)],
                                 rhs_dilation=(4, 4),
                                 dimension_numbers=("NCHW", "OIHW", "NCHW"))
    z = z + params["b2"][None, :, None, None]
    z = (z - params["m2"][None, :, None, None]) / jnp.sqrt(
        params["v2"][None, :, None, None] + eps)
    z = z * params["g2"][None, :, None, None] + params["be2"][None, :, None, None]
    return jnp.maximum(z, 0.0)


if __name__ == "__main__":
    # TODO(synk): Dropout2d is modeled in inference mode (identity); training-
    # mode channel dropout would need pltpu PRNG masking.
    N, Cin, H, W = 2, 4, 16, 16
    Cmid, Cout = 128, 8

    key = jax.random.PRNGKey(0)
    ks = jax.random.split(key, 12)
    params = {
        "w1": 0.1 * jax.random.normal(ks[0], (Cin, Cmid), jnp.float32),
        "b1": 0.1 * jax.random.normal(ks[1], (Cmid,), jnp.float32),
        "g1": 1.0 + 0.1 * jax.random.normal(ks[2], (Cmid,), jnp.float32),
        "be1": 0.1 * jax.random.normal(ks[3], (Cmid,), jnp.float32),
        "m1": 0.1 * jax.random.normal(ks[4], (Cmid,), jnp.float32),
        "v1": 1.0 + 0.1 * jax.random.uniform(ks[5], (Cmid,), jnp.float32),
        "w2": 0.05 * jax.random.normal(ks[6], (3, 3, Cmid, Cout), jnp.float32),
        "b2": 0.1 * jax.random.normal(ks[7], (Cout,), jnp.float32),
        "g2": 1.0 + 0.1 * jax.random.normal(ks[8], (Cout,), jnp.float32),
        "be2": 0.1 * jax.random.normal(ks[9], (Cout,), jnp.float32),
        "m2": 0.1 * jax.random.normal(ks[10], (Cout,), jnp.float32),
        "v2": 1.0 + 0.1 * jax.random.uniform(ks[11], (Cout,), jnp.float32),
    }

    x = jax.random.normal(key, (N, Cin, H, W), jnp.float32)

    out = jax.block_until_ready(aspp_br3_forward(x, params))
    ref = jax.block_until_ready(aspp_br3_reference(x, params))

    assert out.shape == (N, Cout, H, W), out.shape
    err = float(jnp.max(jnp.abs(out - ref)))
    # stage-2 matmul runs in bf16 on the MXU -> loosen the f32 tolerance
    assert err < 2e-2, err
    print("KERNEL_OK")
</pallas_src>

<mosaic_0001>
module attributes {stable_mosaic.version = 11 : i64} {
  func.func @_fused_aspp_br3_kernel(%arg0: i32, %arg1: memref<1x576x5xf32, #tpu.memory_space<vmem>>, %arg2: memref<5x128xf32, #tpu.memory_space<vmem>>, %arg3: memref<128x128xbf16, #tpu.memory_space<vmem>>, %arg4: memref<1x128xf32, #tpu.memory_space<vmem>>, %arg5: memref<1x384x128xf32, #tpu.memory_space<vmem>>, %arg6: memref<592x128xf32, #tpu.memory_space<vmem>>) attributes {dimension_semantics = [#tpu.dimension_semantics<parallel>], iteration_bounds = array<i64: 2>, scalar_prefetch = 0 : i64, scratch_operands = 1 : i64, tpu.core_type = #tpu.core_type<tc>, window_params = [{transform_indices = @transform_0, window_bounds = array<i64: 1, 576, 5>}, {pipeline_mode = #tpu.pipeline_mode<synchronous>, transform_indices = @transform_1, window_bounds = array<i64: 5, 128>}, {pipeline_mode = #tpu.pipeline_mode<synchronous>, transform_indices = @transform_2, window_bounds = array<i64: 128, 128>}, {pipeline_mode = #tpu.pipeline_mode<synchronous>, transform_indices = @transform_3, window_bounds = array<i64: 1, 128>}, {transform_indices = @transform_4, window_bounds = array<i64: 1, 384, 128>}]} {
    %c0 = arith.constant 0 : index
    %c0_0 = arith.constant 0 : index
    %0 = vector.load %arg2[%c0, %c0_0] : memref<5x128xf32, #tpu.memory_space<vmem>>, vector<5x128xf32>
    %c0_1 = arith.constant 0 : index
    %c0_2 = arith.constant 0 : index
    %1 = vector.load %arg3[%c0_1, %c0_2] : memref<128x128xbf16, #tpu.memory_space<vmem>>, vector<128x128xbf16>
    %c0_3 = arith.constant 0 : index
    %c0_4 = arith.constant 0 : index
    %2 = vector.load %arg4[%c0_3, %c0_4] : memref<1x128xf32, #tpu.memory_space<vmem>>, vector<1x128xf32>
    %c0_5 = arith.constant 0 : index
    %c0_6 = arith.constant 0 : index
    %c0_7 = arith.constant 0 : index
    %3 = vector.load %arg1[%c0_5, %c0_6, %c0_7] : memref<1x576x5xf32, #tpu.memory_space<vmem>>, vector<1x128x5xf32>
    %4 = vector.shape_cast %3 : vector<1x128x5xf32> to vector<128x5xf32>
    %5 = vector.extract_strided_slice %4 {offsets = [0, 0], sizes = [128, 1], strides = [1, 1]} : vector<128x5xf32> to vector<128x1xf32>
    %6 = vector.extract_strided_slice %0 {offsets = [0, 0], sizes = [1, 128], strides = [1, 1]} : vector<5x128xf32> to vector<1x128xf32>
    %7 = vector.broadcast %5 : vector<128x1xf32> to vector<128x128xf32>
    %8 = vector.broadcast %6 : vector<1x128xf32> to vector<128x128xf32>
    %9 = arith.mulf %7, %8 : vector<128x128xf32>
    %10 = vector.extract_strided_slice %4 {offsets = [0, 1], sizes = [128, 1], strides = [1, 1]} : vector<128x5xf32> to vector<128x1xf32>
    %11 = vector.extract_strided_slice %0 {offsets = [1, 0], sizes = [1, 128], strides = [1, 1]} : vector<5x128xf32> to vector<1x128xf32>
    %12 = vector.broadcast %10 : vector<128x1xf32> to vector<128x128xf32>
    %13 = vector.broadcast %11 : vector<1x128xf32> to vector<128x128xf32>
    %14 = arith.mulf %12, %13 : vector<128x128xf32>
    %15 = arith.addf %9, %14 : vector<128x128xf32>
    %16 = vector.extract_strided_slice %4 {offsets = [0, 2], sizes = [128, 1], strides = [1, 1]} : vector<128x5xf32> to vector<128x1xf32>
    %17 = vector.extract_strided_slice %0 {offsets = [2, 0], sizes = [1, 128], strides = [1, 1]} : vector<5x128xf32> to vector<1x128xf32>
    %18 = vector.broadcast %16 : vector<128x1xf32> to vector<128x128xf32>
    %19 = vector.broadcast %17 : vector<1x128xf32> to vector<128x128xf32>
    %20 = arith.mulf %18, %19 : vector<128x128xf32>
    %21 = arith.addf %15, %20 : vector<128x128xf32>
    %22 = vector.extract_strided_slice %4 {offsets = [0, 3], sizes = [128, 1], strides = [1, 1]} : vector<128x5xf32> to vector<128x1xf32>
    %23 = vector.extract_strided_slice %0 {offsets = [3, 0], sizes = [1, 128], strides = [1, 1]} : vector<5x128xf32> to vector<1x128xf32>
    %24 = vector.broadcast %22 : vector<128x1xf32> to vector<128x128xf32>
    %25 = vector.broadcast %23 : vector<1x128xf32> to vector<128x128xf32>
    %26 = arith.mulf %24, %25 : vector<128x128xf32>
    %27 = arith.addf %21, %26 : vector<128x128xf32>
    %28 = vector.extract_strided_slice %4 {offsets = [0, 4], sizes = [128, 1], strides = [1, 1]} : vector<128x5xf32> to vector<128x1xf32>
    %29 = vector.extract_strided_slice %0 {offsets = [4, 0], sizes = [1, 128], strides = [1, 1]} : vector<5x128xf32> to vector<1x128xf32>
    %30 = vector.broadcast %28 : vector<128x1xf32> to vector<128x128xf32>
    %31 = vector.broadcast %29 : vector<1x128xf32> to vector<128x128xf32>
    %32 = arith.mulf %30, %31 : vector<128x128xf32>
    %33 = arith.addf %27, %32 : vector<128x128xf32>
    %cst = arith.constant 0.000000e+00 : f32
    %34 = vector.broadcast %cst : f32 to vector<128x128xf32>
    %35 = arith.maximumf %33, %34 : vector<128x128xf32>
    %36 = arith.truncf %35 : vector<128x128xf32> to vector<128x128xbf16>
    %cst_8 = arith.constant dense<0.000000e+00> : vector<128x128xf32>
    %37 = tpu.matmul %36, %1, %cst_8 {dimension_numbers = #tpu.dot_dimension_numbers<[1], [0], [0], [1], [0, 0, 1, 1], [], []>} : vector<128x128xbf16>, vector<128x128xbf16>, vector<128x128xf32> -> vector<128x128xf32>
    %c0_9 = arith.constant 0 : index
    %c0_10 = arith.constant 0 : index
    %38 = vector.load %arg6[%c0_9, %c0_10] : memref<592x128xf32, #tpu.memory_space<vmem>>, vector<128x128xf32>
    tpu.vector_store %arg6[%c0_9, %c0_10], %37 {strides = array<i32>} : memref<592x128xf32, #tpu.memory_space<vmem>>, vector<128x128xf32>,
    %c0_11 = arith.constant 0 : index
    %c128 = arith.constant 128 : index
    %c0_12 = arith.constant 0 : index
    %39 = vector.load %arg1[%c0_11, %c128, %c0_12] : memref<1x576x5xf32, #tpu.memory_space<vmem>>, vector<1x128x5xf32>
    %40 = vector.shape_cast %39 : vector<1x128x5xf32> to vector<128x5xf32>
    %41 = vector.extract_strided_slice %40 {offsets = [0, 0], sizes = [128, 1], strides = [1, 1]} : vector<128x5xf32> to vector<128x1xf32>
    %42 = vector.extract_strided_slice %0 {offsets = [0, 0], sizes = [1, 128], strides = [1, 1]} : vector<5x128xf32> to vector<1x128xf32>
    %43 = vector.broadcast %41 : vector<128x1xf32> to vector<128x128xf32>
    %44 = vector.broadcast %42 : vector<1x128xf32> to vector<128x128xf32>
    %45 = arith.mulf %43, %44 : vector<128x128xf32>
    %46 = vector.extract_strided_slice %40 {offsets = [0, 1], sizes = [128, 1], strides = [1, 1]} : vector<128x5xf32> to vector<128x1xf32>
    %47 = vector.extract_strided_slice %0 {offsets = [1, 0], sizes = [1, 128], strides = [1, 1]} : vector<5x128xf32> to vector<1x128xf32>
    %48 = vector.broadcast %46 : vector<128x1xf32> to vector<128x128xf32>
    %49 = vector.broadcast %47 : vector<1x128xf32> to vector<128x128xf32>
    %50 = arith.mulf %48, %49 : vector<128x128xf32>
    %51 = arith.addf %45, %50 : vector<128x128xf32>
    %52 = vector.extract_strided_slice %40 {offsets = [0, 2], sizes = [128, 1], strides = [1, 1]} : vector<128x5xf32> to vector<128x1xf32>
    %53 = vector.extract_strided_slice %0 {offsets = [2, 0], sizes = [1, 128], strides = [1, 1]} : vector<5x128xf32> to vector<1x128xf32>
    %54 = vector.broadcast %52 : vector<128x1xf32> to vector<128x128xf32>
    %55 = vector.broadcast %53 : vector<1x128xf32> to vector<128x128xf32>
    %56 = arith.mulf %54, %55 : vector<128x128xf32>
    %57 = arith.addf %51, %56 : vector<128x128xf32>
    %58 = vector.extract_strided_slice %40 {offsets = [0, 3], sizes = [128, 1], strides = [1, 1]} : vector<128x5xf32> to vector<128x1xf32>
    %59 = vector.extract_strided_slice %0 {offsets = [3, 0], sizes = [1, 128], strides = [1, 1]} : vector<5x128xf32> to vector<1x128xf32>
    %60 = vector.broadcast %58 : vector<128x1xf32> to vector<128x128xf32>
    %61 = vector.broadcast %59 : vector<1x128xf32> to vector<128x128xf32>
    %62 = arith.mulf %60, %61 : vector<128x128xf32>
    %63 = arith.addf %57, %62 : vector<128x128xf32>
    %64 = vector.extract_strided_slice %40 {offsets = [0, 4], sizes = [128, 1], strides = [1, 1]} : vector<128x5xf32> to vector<128x1xf32>
    %65 = vector.extract_strided_slice %0 {offsets = [4, 0], sizes = [1, 128], strides = [1, 1]} : vector<5x128xf32> to vector<1x128xf32>
    %66 = vector.broadcast %64 : vector<128x1xf32> to vector<128x128xf32>
    %67 = vector.broadcast %65 : vector<1x128xf32> to vector<128x128xf32>
    %68 = arith.mulf %66, %67 : vector<128x128xf32>
    %69 = arith.addf %63, %68 : vector<128x128xf32>
    %cst_13 = arith.constant 0.000000e+00 : f32
    %70 = vector.broadcast %cst_13 : f32 to vector<128x128xf32>
    %71 = arith.maximumf %69, %70 : vector<128x128xf32>
    %72 = arith.truncf %71 : vector<128x128xf32> to vector<128x128xbf16>
    %cst_14 = arith.constant dense<0.000000e+00> : vector<128x128xf32>
    %73 = tpu.matmul %72, %1, %cst_14 {dimension_numbers = #tpu.dot_dimension_numbers<[1], [0], [0], [1], [0, 0, 1, 1], [], []>} : vector<128x128xbf16>, vector<128x128xbf16>, vector<128x128xf32> -> vector<128x128xf32>
    %c128_15 = arith.constant 128 : index
    %c0_16 = arith.constant 0 : index
    %74 = vector.load %arg6[%c128_15, %c0_16] : memref<592x128xf32, #tpu.memory_space<vmem>>, vector<128x128xf32>
    tpu.vector_store %arg6[%c128_15, %c0_16], %73 {strides = array<i32>} : memref<592x128xf32, #tpu.memory_space<vmem>>, vector<128x128xf32>,
    %c0_17 = arith.constant 0 : index
    %c256 = arith.constant 256 : index
    %c0_18 = arith.constant 0 : index
    %75 = vector.load %arg1[%c0_17, %c256, %c0_18] : memref<1x576x5xf32, #tpu.memory_space<vmem>>, vector<1x128x5xf32>
    %76 = vector.shape_cast %75 : vector<1x128x5xf32> to vector<128x5xf32>
    %77 = vector.extract_strided_slice %76 {offsets = [0, 0], sizes = [128, 1], strides = [1, 1]} : vector<128x5xf32> to vector<128x1xf32>
    %78 = vector.extract_strided_slice %0 {offsets = [0, 0], sizes = [1, 128], strides = [1, 1]} : vector<5x128xf32> to vector<1x128xf32>
    %79 = vector.broadcast %77 : vector<128x1xf32> to vector<128x128xf32>
    %80 = vector.broadcast %78 : vector<1x128xf32> to vector<128x128xf32>
    %81 = arith.mulf %79, %80 : vector<128x128xf32>
    %82 = vector.extract_strided_slice %76 {offsets = [0, 1], sizes = [128, 1], strides = [1, 1]} : vector<128x5xf32> to vector<128x1xf32>
    %83 = vector.extract_strided_slice %0 {offsets = [1, 0], sizes = [1, 128], strides = [1, 1]} : vector<5x128xf32> to vector<1x128xf32>
    %84 = vector.broadcast %82 : vector<128x1xf32> to vector<128x128xf32>
    %85 = vector.broadcast %83 : vector<1x128xf32> to vector<128x128xf32>
    %86 = arith.mulf %84, %85 : vector<128x128xf32>
    %87 = arith.addf %81, %86 : vector<128x128xf32>
    %88 = vector.extract_strided_slice %76 {offsets = [0, 2], sizes = [128, 1], strides = [1, 1]} : vector<128x5xf32> to vector<128x1xf32>
    %89 = vector.extract_strided_slice %0 {offsets = [2, 0], sizes = [1, 128], strides = [1, 1]} : vector<5x128xf32> to vector<1x128xf32>
    %90 = vector.broadcast %88 : vector<128x1xf32> to vector<128x128xf32>
    %91 = vector.broadcast %89 : vector<1x128xf32> to vector<128x128xf32>
    %92 = arith.mulf %90, %91 : vector<128x128xf32>
    %93 = arith.addf %87, %92 : vector<128x128xf32>
    %94 = vector.extract_strided_slice %76 {offsets = [0, 3], sizes = [128, 1], strides = [1, 1]} : vector<128x5xf32> to vector<128x1xf32>
    %95 = vector.extract_strided_slice %0 {offsets = [3, 0], sizes = [1, 128], strides = [1, 1]} : vector<5x128xf32> to vector<1x128xf32>
    %96 = vector.broadcast %94 : vector<128x1xf32> to vector<128x128xf32>
    %97 = vector.broadcast %95 : vector<1x128xf32> to vector<128x128xf32>
    %98 = arith.mulf %96, %97 : vector<128x128xf32>
    %99 = arith.addf %93, %98 : vector<128x128xf32>
    %100 = vector.extract_strided_slice %76 {offsets = [0, 4], sizes = [128, 1], strides = [1, 1]} : vector<128x5xf32> to vector<128x1xf32>
    %101 = vector.extract_strided_slice %0 {offsets = [4, 0], sizes = [1, 128], strides = [1, 1]} : vector<5x128xf32> to vector<1x128xf32>
    %102 = vector.broadcast %100 : vector<128x1xf32> to vector<128x128xf32>
    %103 = vector.broadcast %101 : vector<1x128xf32> to vector<128x128xf32>
    %104 = arith.mulf %102, %103 : vector<128x128xf32>
    %105 = arith.addf %99, %104 : vector<128x128xf32>
    %cst_19 = arith.constant 0.000000e+00 : f32
    %106 = vector.broadcast %cst_19 : f32 to vector<128x128xf32>
    %107 = arith.maximumf %105, %106 : vector<128x128xf32>
    %108 = arith.truncf %107 : vector<128x128xf32> to vector<128x128xbf16>
    %cst_20 = arith.constant dense<0.000000e+00> : vector<128x128xf32>
    %109 = tpu.matmul %108, %1, %cst_20 {dimension_numbers = #tpu.dot_dimension_numbers<[1], [0], [0], [1], [0, 0, 1, 1], [], []>} : vector<128x128xbf16>, vector<128x128xbf16>, vector<128x128xf32> -> vector<128x128xf32>
    %c256_21 = arith.constant 256 : index
    %c0_22 = arith.constant 0 : index
    %110 = vector.load %arg6[%c256_21, %c0_22] : memref<592x128xf32, #tpu.memory_space<vmem>>, vector<128x128xf32>
    tpu.vector_store %arg6[%c256_21, %c0_22], %109 {strides = array<i32>} : memref<592x128xf32, #tpu.memory_space<vmem>>, vector<128x128xf32>,
    %c0_23 = arith.constant 0 : index
    %c384 = arith.constant 384 : index
    %c0_24 = arith.constant 0 : index
    %111 = vector.load %arg1[%c0_23, %c384, %c0_24] : memref<1x576x5xf32, #tpu.memory_space<vmem>>, vector<1x128x5xf32>
    %112 = vector.shape_cast %111 : vector<1x128x5xf32> to vector<128x5xf32>
    %113 = vector.extract_strided_slice %112 {offsets = [0, 0], sizes = [128, 1], strides = [1, 1]} : vector<128x5xf32> to vector<128x1xf32>
    %114 = vector.extract_strided_slice %0 {offsets = [0, 0], sizes = [1, 128], strides = [1, 1]} : vector<5x128xf32> to vector<1x128xf32>
    %115 = vector.broadcast %113 : vector<128x1xf32> to vector<128x128xf32>
    %116 = vector.broadcast %114 : vector<1x128xf32> to vector<128x128xf32>
    %117 = arith.mulf %115, %116 : vector<128x128xf32>
    %118 = vector.extract_strided_slice %112 {offsets = [0, 1], sizes = [128, 1], strides = [1, 1]} : vector<128x5xf32> to vector<128x1xf32>
    %119 = vector.extract_strided_slice %0 {offsets = [1, 0], sizes = [1, 128], strides = [1, 1]} : vector<5x128xf32> to vector<1x128xf32>
    %120 = vector.broadcast %118 : vector<128x1xf32> to vector<128x128xf32>
    %121 = vector.broadcast %119 : vector<1x128xf32> to vector<128x128xf32>
    %122 = arith.mulf %120, %121 : vector<128x128xf32>
    %123 = arith.addf %117, %122 : vector<128x128xf32>
    %124 = vector.extract_strided_slice %112 {offsets = [0, 2], sizes = [128, 1], strides = [1, 1]} : vector<128x5xf32> to vector<128x1xf32>
    %125 = vector.extract_strided_slice %0 {offsets = [2, 0], sizes = [1, 128], strides = [1, 1]} : vector<5x128xf32> to vector<1x128xf32>
    %126 = vector.broadcast %124 : vector<128x1xf32> to vector<128x128xf32>
    %127 = vector.broadcast %125 : vector<1x128xf32> to vector<128x128xf32>
    %128 = arith.mulf %126, %127 : vector<128x128xf32>
    %129 = arith.addf %123, %128 : vector<128x128xf32>
    %130 = vector.extract_strided_slice %112 {offsets = [0, 3], sizes = [128, 1], strides = [1, 1]} : vector<128x5xf32> to vector<128x1xf32>
    %131 = vector.extract_strided_slice %0 {offsets = [3, 0], sizes = [1, 128], strides = [1, 1]} : vector<5x128xf32> to vector<1x128xf32>
    %132 = vector.broadcast %130 : vector<128x1xf32> to vector<128x128xf32>
    %133 = vector.broadcast %131 : vector<1x128xf32> to vector<128x128xf32>
    %134 = arith.mulf %132, %133 : vector<128x128xf32>
    %135 = arith.addf %129, %134 : vector<128x128xf32>
    %136 = vector.extract_strided_slice %112 {offsets = [0, 4], sizes = [128, 1], strides = [1, 1]} : vector<128x5xf32> to vector<128x1xf32>
    %137 = vector.extract_strided_slice %0 {offsets = [4, 0], sizes = [1, 128], strides = [1, 1]} : vector<5x128xf32> to vector<1x128xf32>
    %138 = vector.broadcast %136 : vector<128x1xf32> to vector<128x128xf32>
    %139 = vector.broadcast %137 : vector<1x128xf32> to vector<128x128xf32>
    %140 = arith.mulf %138, %139 : vector<128x128xf32>
    %141 = arith.addf %135, %140 : vector<128x128xf32>
    %cst_25 = arith.constant 0.000000e+00 : f32
    %142 = vector.broadcast %cst_25 : f32 to vector<128x128xf32>
    %143 = arith.maximumf %141, %142 : vector<128x128xf32>
    %144 = arith.truncf %143 : vector<128x128xf32> to vector<128x128xbf16>
    %cst_26 = arith.constant dense<0.000000e+00> : vector<128x128xf32>
    %145 = tpu.matmul %144, %1, %cst_26 {dimension_numbers = #tpu.dot_dimension_numbers<[1], [0], [0], [1], [0, 0, 1, 1], [], []>} : vector<128x128xbf16>, vector<128x128xbf16>, vector<128x128xf32> -> vector<128x128xf32>
    %c384_27 = arith.constant 384 : index
    %c0_28 = arith.constant 0 : index
    %146 = vector.load %arg6[%c384_27, %c0_28] : memref<592x128xf32, #tpu.memory_space<vmem>>, vector<128x128xf32>
    tpu.vector_store %arg6[%c384_27, %c0_28], %145 {strides = array<i32>} : memref<592x128xf32, #tpu.memory_space<vmem>>, vector<128x128xf32>,
    %c0_29 = arith.constant 0 : index
    %c512 = arith.constant 512 : index
    %c0_30 = arith.constant 0 : index
    %147 = vector.load %arg1[%c0_29, %c512, %c0_30] : memref<1x576x5xf32, #tpu.memory_space<vmem>>, vector<1x64x5xf32>
    %148 = vector.shape_cast %147 : vector<1x64x5xf32> to vector<64x5xf32>
    %149 = vector.extract_strided_slice %148 {offsets = [0, 0], sizes = [64, 1], strides = [1, 1]} : vector<64x5xf32> to vector<64x1xf32>
    %150 = vector.extract_strided_slice %0 {offsets = [0, 0], sizes = [1, 128], strides = [1, 1]} : vector<5x128xf32> to vector<1x128xf32>
    %151 = vector.broadcast %149 : vector<64x1xf32> to vector<64x128xf32>
    %152 = vector.broadcast %150 : vector<1x128xf32> to vector<64x128xf32>
    %153 = arith.mulf %151, %152 : vector<64x128xf32>
    %154 = vector.extract_strided_slice %148 {offsets = [0, 1], sizes = [64, 1], strides = [1, 1]} : vector<64x5xf32> to vector<64x1xf32>
    %155 = vector.extract_strided_slice %0 {offsets = [1, 0], sizes = [1, 128], strides = [1, 1]} : vector<5x128xf32> to vector<1x128xf32>
    %156 = vector.broadcast %154 : vector<64x1xf32> to vector<64x128xf32>
    %157 = vector.broadcast %155 : vector<1x128xf32> to vector<64x128xf32>
    %158 = arith.mulf %156, %157 : vector<64x128xf32>
    %159 = arith.addf %153, %158 : vector<64x128xf32>
    %160 = vector.extract_strided_slice %148 {offsets = [0, 2], sizes = [64, 1], strides = [1, 1]} : vector<64x5xf32> to vector<64x1xf32>
    %161 = vector.extract_strided_slice %0 {offsets = [2, 0], sizes = [1, 128], strides = [1, 1]} : vector<5x128xf32> to vector<1x128xf32>
    %162 = vector.broadcast %160 : vector<64x1xf32> to vector<64x128xf32>
    %163 = vector.broadcast %161 : vector<1x128xf32> to vector<64x128xf32>
    %164 = arith.mulf %162, %163 : vector<64x128xf32>
    %165 = arith.addf %159, %164 : vector<64x128xf32>
    %166 = vector.extract_strided_slice %148 {offsets = [0, 3], sizes = [64, 1], strides = [1, 1]} : vector<64x5xf32> to vector<64x1xf32>
    %167 = vector.extract_strided_slice %0 {offsets = [3, 0], sizes = [1, 128], strides = [1, 1]} : vector<5x128xf32> to vector<1x128xf32>
    %168 = vector.broadcast %166 : vector<64x1xf32> to vector<64x128xf32>
    %169 = vector.broadcast %167 : vector<1x128xf32> to vector<64x128xf32>
    %170 = arith.mulf %168, %169 : vector<64x128xf32>
    %171 = arith.addf %165, %170 : vector<64x128xf32>
    %172 = vector.extract_strided_slice %148 {offsets = [0, 4], sizes = [64, 1], strides = [1, 1]} : vector<64x5xf32> to vector<64x1xf32>
    %173 = vector.extract_strided_slice %0 {offsets = [4, 0], sizes = [1, 128], strides = [1, 1]} : vector<5x128xf32> to vector<1x128xf32>
    %174 = vector.broadcast %172 : vector<64x1xf32> to vector<64x128xf32>
    %175 = vector.broadcast %173 : vector<1x128xf32> to vector<64x128xf32>
    %176 = arith.mulf %174, %175 : vector<64x128xf32>
    %177 = arith.addf %171, %176 : vector<64x128xf32>
    %cst_31 = arith.constant 0.000000e+00 : f32
    %178 = vector.broadcast %cst_31 : f32 to vector<64x128xf32>
    %179 = arith.maximumf %177, %178 : vector<64x128xf32>
    %180 = arith.truncf %179 : vector<64x128xf32> to vector<64x128xbf16>
    %cst_32 = arith.constant dense<0.000000e+00> : vector<64x128xf32>
    %181 = tpu.matmul %180, %1, %cst_32 {dimension_numbers = #tpu.dot_dimension_numbers<[1], [0], [0], [1], [0, 0, 1, 1], [], []>} : vector<64x128xbf16>, vector<128x128xbf16>, vector<64x128xf32> -> vector<64x128xf32>
    %c512_33 = arith.constant 512 : index
    %c0_34 = arith.constant 0 : index
    %182 = vector.load %arg6[%c512_33, %c0_34] : memref<592x128xf32, #tpu.memory_space<vmem>>, vector<64x128xf32>
    tpu.vector_store %arg6[%c512_33, %c0_34], %181 {strides = array<i32>} : memref<592x128xf32, #tpu.memory_space<vmem>>, vector<64x128xf32>,
    %cst_35 = arith.constant 0.000000e+00 : f32
    %183 = vector.broadcast %cst_35 : f32 to vector<16x128xf32>
    %c576 = arith.constant 576 : index
    %c0_36 = arith.constant 0 : index
    %184 = vector.load %arg6[%c576, %c0_36] : memref<592x128xf32, #tpu.memory_space<vmem>>, vector<16x128xf32>
    tpu.vector_store %arg6[%c576, %c0_36], %183 {strides = array<i32>} : memref<592x128xf32, #tpu.memory_space<vmem>>, vector<16x128xf32>,
    %c0_37 = arith.constant 0 : index
    %c0_38 = arith.constant 0 : index
    %185 = vector.load %arg6[%c0_37, %c0_38] : memref<592x128xf32, #tpu.memory_space<vmem>>, vector<128x128xf32>
    %c0_39 = arith.constant 0 : index
    %c0_40 = arith.constant 0 : index
    %186 = vector.load %arg6[%c0_39, %c0_40] : memref<592x128xf32, #tpu.memory_space<vmem>>, vector<136x128xf32>
    %c132_i32 = arith.constant 132 : i32
    %187 = tpu.dynamic_rotate %186 by %c132_i32 dim 0 : vector<136x128xf32>, i32 -> vector<136x128xf32>
    %188 = vector.extract_strided_slice %187 {offsets = [0, 0], sizes = [128, 128], strides = [1, 1]} : vector<136x128xf32> to vector<128x128xf32>
    %c120_i32 = arith.constant 120 : i32
    %189 = tpu.dynamic_rotate %188 by %c120_i32 dim 1 : vector<128x128xf32>, i32 -> vector<128x128xf32>
    %190 = arith.addf %185, %189 : vector<128x128xf32>
    %c8 = arith.constant 8 : index
    %c0_41 = arith.constant 0 : index
    %191 = vector.load %arg6[%c8, %c0_41] : memref<592x128xf32, #tpu.memory_space<vmem>>, vector<128x128xf32>
    %c112_i32 = arith.constant 112 : i32
    %192 = tpu.dynamic_rotate %191 by %c112_i32 dim 1 : vector<128x128xf32>, i32 -> vector<128x128xf32>
    %193 = arith.addf %190, %192 : vector<128x128xf32>
    %c96 = arith.constant 96 : index
    %c0_42 = arith.constant 0 : index
    %194 = vector.load %arg6[%c96, %c0_42] : memref<592x128xf32, #tpu.memory_space<vmem>>, vector<128x128xf32>
    %c104_i32 = arith.constant 104 : i32
    %195 = tpu.dynamic_rotate %194 by %c104_i32 dim 1 : vector<128x128xf32>, i32 -> vector<128x128xf32>
    %196 = arith.addf %193, %195 : vector<128x128xf32>
    %c96_43 = arith.constant 96 : index
    %c0_44 = arith.constant 0 : index
    %197 = vector.load %arg6[%c96_43, %c0_44] : memref<592x128xf32, #tpu.memory_space<vmem>>, vector<136x128xf32>
    %c132_i32_45 = arith.constant 132 : i32
    %198 = tpu.dynamic_rotate %197 by %c132_i32_45 dim 0 : vector<136x128xf32>, i32 -> vector<136x128xf32>
    %199 = vector.extract_strided_slice %198 {offsets = [0, 0], sizes = [128, 128], strides = [1, 1]} : vector<136x128xf32> to vector<128x128xf32>
    %c96_i32 = arith.constant 96 : i32
    %200 = tpu.dynamic_rotate %199 by %c96_i32 dim 1 : vector<128x128xf32>, i32 -> vector<128x128xf32>
    %201 = arith.addf %196, %200 : vector<128x128xf32>
    %c104 = arith.constant 104 : index
    %c0_46 = arith.constant 0 : index
    %202 = vector.load %arg6[%c104, %c0_46] : memref<592x128xf32, #tpu.memory_space<vmem>>, vector<128x128xf32>
    %c88_i32 = arith.constant 88 : i32
    %203 = tpu.dynamic_rotate %202 by %c88_i32 dim 1 : vector<128x128xf32>, i32 -> vector<128x128xf32>
    %204 = arith.addf %201, %203 : vector<128x128xf32>
    %c192 = arith.constant 192 : index
    %c0_47 = arith.constant 0 : index
    %205 = vector.load %arg6[%c192, %c0_47] : memref<592x128xf32, #tpu.memory_space<vmem>>, vector<128x128xf32>
    %c80_i32 = arith.constant 80 : i32
    %206 = tpu.dynamic_rotate %205 by %c80_i32 dim 1 : vector<128x128xf32>, i32 -> vector<128x128xf32>
    %207 = arith.addf %204, %206 : vector<128x128xf32>
    %c192_48 = arith.constant 192 : index
    %c0_49 = arith.constant 0 : index
    %208 = vector.load %arg6[%c192_48, %c0_49] : memref<592x128xf32, #tpu.memory_space<vmem>>, vector<136x128xf32>
    %c132_i32_50 = arith.constant 132 : i32
    %209 = tpu.dynamic_rotate %208 by %c132_i32_50 dim 0 : vector<136x128xf32>, i32 -> vector<136x128xf32>
    %210 = vector.extract_strided_slice %209 {offsets = [0, 0], sizes = [128, 128], strides = [1, 1]} : vector<136x128xf32> to vector<128x128xf32>
    %c72_i32 = arith.constant 72 : i32
    %211 = tpu.dynamic_rotate %210 by %c72_i32 dim 1 : vector<128x128xf32>, i32 -> vector<128x128xf32>
    %212 = arith.addf %207, %211 : vector<128x128xf32>
    %c200 = arith.constant 200 : index
    %c0_51 = arith.constant 0 : index
    %213 = vector.load %arg6[%c200, %c0_51] : memref<592x128xf32, #tpu.memory_space<vmem>>, vector<128x128xf32>
    %c64_i32 = arith.constant 64 : i32
    %214 = tpu.dynamic_rotate %213 by %c64_i32 dim 1 : vector<128x128xf32>, i32 -> vector<128x128xf32>
    %215 = arith.addf %212, %214 : vector<128x128xf32>
    %216 = vector.broadcast %2 : vector<1x128xf32> to vector<128x128xf32>
    %217 = arith.addf %215, %216 : vector<128x128xf32>
    %cst_52 = arith.constant 0.000000e+00 : f32
    %218 = vector.broadcast %cst_52 : f32 to vector<128x128xf32>
    %219 = arith.maximumf %217, %218 : vector<128x128xf32>
    %c0_53 = arith.constant 0 : index
    %c0_54 = arith.constant 0 : index
    %c0_55 = arith.constant 0 : index
    %220 = vector.load %arg5[%c0_53, %c0_54, %c0_55] : memref<1x384x128xf32, #tpu.memory_space<vmem>>, vector<1x128x128xf32>
    %221 = vector.shape_cast %220 : vector<1x128x128xf32> to vector<128x128xf32>
    %222 = vector.shape_cast %219 : vector<128x128xf32> to vector<1x128x128xf32>
    tpu.vector_store %arg5[%c0_53, %c0_54, %c0_55], %222 {strides = array<i32>} : memref<1x384x128xf32, #tpu.memory_space<vmem>>, vector<1x128x128xf32>,
    %c128_56 = arith.constant 128 : index
    %c0_57 = arith.constant 0 : index
    %223 = vector.load %arg6[%c128_56, %c0_57] : memref<592x128xf32, #tpu.memory_space<vmem>>, vector<128x128xf32>
    %c128_58 = arith.constant 128 : index
    %c0_59 = arith.constant 0 : index
    %224 = vector.load %arg6[%c128_58, %c0_59] : memref<592x128xf32, #tpu.memory_space<vmem>>, vector<136x128xf32>
    %c132_i32_60 = arith.constant 132 : i32
    %225 = tpu.dynamic_rotate %224 by %c132_i32_60 dim 0 : vector<136x128xf32>, i32 -> vector<136x128xf32>
    %226 = vector.extract_strided_slice %225 {offsets = [0, 0], sizes = [128, 128], strides = [1, 1]} : vector<136x128xf32> to vector<128x128xf32>
    %c120_i32_61 = arith.constant 120 : i32
    %227 = tpu.dynamic_rotate %226 by %c120_i32_61 dim 1 : vector<128x128xf32>, i32 -> vector<128x128xf32>
    %228 = arith.addf %223, %227 : vector<128x128xf32>
    %c136 = arith.constant 136 : index
    %c0_62 = arith.constant 0 : index
    %229 = vector.load %arg6[%c136, %c0_62] : memref<592x128xf32, #tpu.memory_space<vmem>>, vector<128x128xf32>
    %c112_i32_63 = arith.constant 112 : i32
    %230 = tpu.dynamic_rotate %229 by %c112_i32_63 dim 1 : vector<128x128xf32>, i32 -> vector<128x128xf32>
    %231 = arith.addf %228, %230 : vector<128x128xf32>
    %c224 = arith.constant 224 : index
    %c0_64 = arith.constant 0 : index
    %232 = vector.load %arg6[%c224, %c0_64] : memref<592x128xf32, #tpu.memory_space<vmem>>, vector<128x128xf32>
    %c104_i32_65 = arith.constant 104 : i32
    %233 = tpu.dynamic_rotate %232 by %c104_i32_65 dim 1 : vector<128x128xf32>, i32 -> vector<128x128xf32>
    %234 = arith.addf %231, %233 : vector<128x128xf32>
    %c224_66 = arith.constant 224 : index
    %c0_67 = arith.constant 0 : index
    %235 = vector.load %arg6[%c224_66, %c0_67] : memref<592x128xf32, #tpu.memory_space<vmem>>, vector<136x128xf32>
    %c132_i32_68 = arith.constant 132 : i32
    %236 = tpu.dynamic_rotate %235 by %c132_i32_68 dim 0 : vector<136x128xf32>, i32 -> vector<136x128xf32>
    %237 = vector.extract_strided_slice %236 {offsets = [0, 0], sizes = [128, 128], strides = [1, 1]} : vector<136x128xf32> to vector<128x128xf32>
    %c96_i32_69 = arith.constant 96 : i32
    %238 = tpu.dynamic_rotate %237 by %c96_i32_69 dim 1 : vector<128x128xf32>, i32 -> vector<128x128xf32>
    %239 = arith.addf %234, %238 : vector<128x128xf32>
    %c232 = arith.constant 232 : index
    %c0_70 = arith.constant 0 : index
    %240 = vector.load %arg6[%c232, %c0_70] : memref<592x128xf32, #tpu.memory_space<vmem>>, vector<128x128xf32>
    %c88_i32_71 = arith.constant 88 : i32
    %241 = tpu.dynamic_rotate %240 by %c88_i32_71 dim 1 : vector<128x128xf32>, i32 -> vector<128x128xf32>
    %242 = arith.addf %239, %241 : vector<128x128xf32>
    %c320 = arith.constant 320 : index
    %c0_72 = arith.constant 0 : index
    %243 = vector.load %arg6[%c320, %c0_72] : memref<592x128xf32, #tpu.memory_space<vmem>>, vector<128x128xf32>
    %c80_i32_73 = arith.constant 80 : i32
    %244 = tpu.dynamic_rotate %243 by %c80_i32_73 dim 1 : vector<128x128xf32>, i32 -> vector<128x128xf32>
    %245 = arith.addf %242, %244 : vector<128x128xf32>
    %c320_74 = arith.constant 320 : index
    %c0_75 = arith.constant 0 : index
    %246 = vector.load %arg6[%c320_74, %c0_75] : memref<592x128xf32, #tpu.memory_space<vmem>>, vector<136x128xf32>
    %c132_i32_76 = arith.constant 132 : i32
    %247 = tpu.dynamic_rotate %246 by %c132_i32_76 dim 0 : vector<136x128xf32>, i32 -> vector<136x128xf32>
    %248 = vector.extract_strided_slice %247 {offsets = [0, 0], sizes = [128, 128], strides = [1, 1]} : vector<136x128xf32> to vector<128x128xf32>
    %c72_i32_77 = arith.constant 72 : i32
    %249 = tpu.dynamic_rotate %248 by %c72_i32_77 dim 1 : vector<128x128xf32>, i32 -> vector<128x128xf32>
    %250 = arith.addf %245, %249 : vector<128x128xf32>
    %c328 = arith.constant 328 : index
    %c0_78 = arith.constant 0 : index
    %251 = vector.load %arg6[%c328, %c0_78] : memref<592x128xf32, #tpu.memory_space<vmem>>, vector<128x128xf32>
    %c64_i32_79 = arith.constant 64 : i32
    %252 = tpu.dynamic_rotate %251 by %c64_i32_79 dim 1 : vector<128x128xf32>, i32 -> vector<128x128xf32>
    %253 = arith.addf %250, %252 : vector<128x128xf32>
    %254 = vector.broadcast %2 : vector<1x128xf32> to vector<128x128xf32>
    %255 = arith.addf %253, %254 : vector<128x128xf32>
    %cst_80 = arith.constant 0.000000e+00 : f32
    %256 = vector.broadcast %cst_80 : f32 to vector<128x128xf32>
    %257 = arith.maximumf %255, %256 : vector<128x128xf32>
    %c0_81 = arith.constant 0 : index
    %c128_82 = arith.constant 128 : index
    %c0_83 = arith.constant 0 : index
    %258 = vector.load %arg5[%c0_81, %c128_82, %c0_83] : memref<1x384x128xf32, #tpu.memory_space<vmem>>, vector<1x128x128xf32>
    %259 = vector.shape_cast %258 : vector<1x128x128xf32> to vector<128x128xf32>
    %260 = vector.shape_cast %257 : vector<128x128xf32> to vector<1x128x128xf32>
    tpu.vector_store %arg5[%c0_81, %c128_82, %c0_83], %260 {strides = array<i32>} : memref<1x384x128xf32, #tpu.memory_space<vmem>>, vector<1x128x128xf32>,
    %c256_84 = arith.constant 256 : index
    %c0_85 = arith.constant 0 : index
    %261 = vector.load %arg6[%c256_84, %c0_85] : memref<592x128xf32, #tpu.memory_space<vmem>>, vector<128x128xf32>
    %c256_86 = arith.constant 256 : index
    %c0_87 = arith.constant 0 : index
    %262 = vector.load %arg6[%c256_86, %c0_87] : memref<592x128xf32, #tpu.memory_space<vmem>>, vector<136x128xf32>
    %c132_i32_88 = arith.constant 132 : i32
    %263 = tpu.dynamic_rotate %262 by %c132_i32_88 dim 0 : vector<136x128xf32>, i32 -> vector<136x128xf32>
    %264 = vector.extract_strided_slice %263 {offsets = [0, 0], sizes = [128, 128], strides = [1, 1]} : vector<136x128xf32> to vector<128x128xf32>
    %c120_i32_89 = arith.constant 120 : i32
    %265 = tpu.dynamic_rotate %264 by %c120_i32_89 dim 1 : vector<128x128xf32>, i32 -> vector<128x128xf32>
    %266 = arith.addf %261, %265 : vector<128x128xf32>
    %c264 = arith.constant 264 : index
    %c0_90 = arith.constant 0 : index
    %267 = vector.load %arg6[%c264, %c0_90] : memref<592x128xf32, #tpu.memory_space<vmem>>, vector<128x128xf32>
    %c112_i32_91 = arith.constant 112 : i32
    %268 = tpu.dynamic_rotate %267 by %c112_i32_91 dim 1 : vector<128x128xf32>, i32 -> vector<128x128xf32>
    %269 = arith.addf %266, %268 : vector<128x128xf32>
    %c352 = arith.constant 352 : index
    %c0_92 = arith.constant 0 : index
    %270 = vector.load %arg6[%c352, %c0_92] : memref<592x128xf32, #tpu.memory_space<vmem>>, vector<128x128xf32>
    %c104_i32_93 = arith.constant 104 : i32
    %271 = tpu.dynamic_rotate %270 by %c104_i32_93 dim 1 : vector<128x128xf32>, i32 -> vector<128x128xf32>
    %272 = arith.addf %269, %271 : vector<128x128xf32>
    %c352_94 = arith.constant 352 : index
    %c0_95 = arith.constant 0 : index
    %273 = vector.load %arg6[%c352_94, %c0_95] : memref<592x128xf32, #tpu.memory_space<vmem>>, vector<136x128xf32>
    %c132_i32_96 = arith.constant 132 : i32
    %274 = tpu.dynamic_rotate %273 by %c132_i32_96 dim 0 : vector<136x128xf32>, i32 -> vector<136x128xf32>
    %275 = vector.extract_strided_slice %274 {offsets = [0, 0], sizes = [128, 128], strides = [1, 1]} : vector<136x128xf32> to vector<128x128xf32>
    %c96_i32_97 = arith.constant 96 : i32
    %276 = tpu.dynamic_rotate %275 by %c96_i32_97 dim 1 : vector<128x128xf32>, i32 -> vector<128x128xf32>
    %277 = arith.addf %272, %276 : vector<128x128xf32>
    %c360 = arith.constant 360 : index
    %c0_98 = arith.constant 0 : index
    %278 = vector.load %arg6[%c360, %c0_98] : memref<592x128xf32, #tpu.memory_space<vmem>>, vector<128x128xf32>
    %c88_i32_99 = arith.constant 88 : i32
    %279 = tpu.dynamic_rotate %278 by %c88_i32_99 dim 1 : vector<128x128xf32>, i32 -> vector<128x128xf32>
    %280 = arith.addf %277, %279 : vector<128x128xf32>
    %c448 = arith.constant 448 : index
    %c0_100 = arith.constant 0 : index
    %281 = vector.load %arg6[%c448, %c0_100] : memref<592x128xf32, #tpu.memory_space<vmem>>, vector<128x128xf32>
    %c80_i32_101 = arith.constant 80 : i32
    %282 = tpu.dynamic_rotate %281 by %c80_i32_101 dim 1 : vector<128x128xf32>, i32 -> vector<128x128xf32>
    %283 = arith.addf %280, %282 : vector<128x128xf32>
    %c448_102 = arith.constant 448 : index
    %c0_103 = arith.constant 0 : index
    %284 = vector.load %arg6[%c448_102, %c0_103] : memref<592x128xf32, #tpu.memory_space<vmem>>, vector<136x128xf32>
    %c132_i32_104 = arith.constant 132 : i32
    %285 = tpu.dynamic_rotate %284 by %c132_i32_104 dim 0 : vector<136x128xf32>, i32 -> vector<136x128xf32>
    %286 = vector.extract_strided_slice %285 {offsets = [0, 0], sizes = [128, 128], strides = [1, 1]} : vector<136x128xf32> to vector<128x128xf32>
    %c72_i32_105 = arith.constant 72 : i32
    %287 = tpu.dynamic_rotate %286 by %c72_i32_105 dim 1 : vector<128x128xf32>, i32 -> vector<128x128xf32>
    %288 = arith.addf %283, %287 : vector<128x128xf32>
    %c456 = arith.constant 456 : index
    %c0_106 = arith.constant 0 : index
    %289 = vector.load %arg6[%c456, %c0_106] : memref<592x128xf32, #tpu.memory_space<vmem>>, vector<128x128xf32>
    %c64_i32_107 = arith.constant 64 : i32
    %290 = tpu.dynamic_rotate %289 by %c64_i32_107 dim 1 : vector<128x128xf32>, i32 -> vector<128x128xf32>
    %291 = arith.addf %288, %290 : vector<128x128xf32>
    %292 = vector.broadcast %2 : vector<1x128xf32> to vector<128x128xf32>
    %293 = arith.addf %291, %292 : vector<128x128xf32>
    %cst_108 = arith.constant 0.000000e+00 : f32
    %294 = vector.broadcast %cst_108 : f32 to vector<128x128xf32>
    %295 = arith.maximumf %293, %294 : vector<128x128xf32>
    %c0_109 = arith.constant 0 : index
    %c256_110 = arith.constant 256 : index
    %c0_111 = arith.constant 0 : index
    %296 = vector.load %arg5[%c0_109, %c256_110, %c0_111] : memref<1x384x128xf32, #tpu.memory_space<vmem>>, vector<1x128x128xf32>
    %297 = vector.shape_cast %296 : vector<1x128x128xf32> to vector<128x128xf32>
    %298 = vector.shape_cast %295 : vector<128x128xf32> to vector<1x128x128xf32>
    tpu.vector_store %arg5[%c0_109, %c256_110, %c0_111], %298 {strides = array<i32>} : memref<1x384x128xf32, #tpu.memory_space<vmem>>, vector<1x128x128xf32>,
    return
  }
  func.func @transform_0(%arg0: i32) -> (i32, i32, i32) {
    %c0_i32 = arith.constant 0 : i32
    %c0_i32_0 = arith.constant 0 : i32
    %c0_i32_1 = arith.constant 0 : i32
    return %arg0, %c0_i32, %c0_i32_0 : i32, i32, i32
  }
  func.func @transform_1(%arg0: i32) -> (i32, i32) {
    %c0_i32 = arith.constant 0 : i32
    %c0_i32_0 = arith.constant 0 : i32
    %c0_i32_1 = arith.constant 0 : i32
    return %c0_i32, %c0_i32_0 : i32, i32
  }
  func.func @transform_2(%arg0: i32) -> (i32, i32) {
    %c0_i32 = arith.constant 0 : i32
    %c0_i32_0 = arith.constant 0 : i32
    %c0_i32_1 = arith.constant 0 : i32
    return %c0_i32, %c0_i32_0 : i32, i32
  }
  func.func @transform_3(%arg0: i32) -> (i32, i32) {
    %c0_i32 = arith.constant 0 : i32
    %c0_i32_0 = arith.constant 0 : i32
    %c0_i32_1 = arith.constant 0 : i32
    return %c0_i32, %c0_i32_0 : i32, i32
  }
  func.func @transform_4(%arg0: i32) -> (i32, i32, i32) {
    %c0_i32 = arith.constant 0 : i32
    %c0_i32_0 = arith.constant 0 : i32
    %c0_i32_1 = arith.constant 0 : i32
    return %arg0, %c0_i32, %c0_i32_0 : i32, i32, i32
  }
}

</mosaic_0001>

<llo_original>
// kernel: tpu_custom_call.1
$region0: #{tpu_custom_call.1}
  #allocation0 [shape = 'u32[]', space=smem, size = 0x4, offset = 0x4, fixed_abs, tag = 'smem constant byte address 0x4 - core index']
  #allocation1 [shape = 'u32[72,128]{1,0:T(1,128)}', space=vmem, size = 0x9000, scoped, tag = 'internal scratch']
  #allocation2 [shape = 'f32[592,128]{1,0:T(8,128)}', space=vmem, size = 0x4a000, scoped, tag = 'scratch operand']
  %s0 = inlined_call_operand.vmem [shape: f32[2,576,5], index: 0, kind: input, shape index: {}]
  %s1 = inlined_call_operand.vmem [shape: f32[5,128], index: 1, kind: input, shape index: {}]
  %s2 = inlined_call_operand.vmem [shape: bf16[128,128], index: 2, kind: input, shape index: {}]
  %s3 = inlined_call_operand.vmem [shape: f32[1,128], index: 3, kind: input, shape index: {}]
  %s4 = inlined_call_operand.hbm [shape: f32[2,384,128], index: 4, kind: output, shape index: {}]
  %s5 = sld [smem:[#allocation0]]
  $region49: #{tpu_custom_call.1} parent=0
    _
  %s7 = ssub.s32 1, %s5
  %s8 = scalar_select 0, %s7, %s5
  $region1: #{tpu_custom_call.1} parent=0
    #allocation3 [shape = 'u8[393216]{0}', space=vmem, size = 0x60000, scoped, tag = 'output window, operand 0']
    #allocation4 [shape = 's32[2]{0}', space=sflag, size = 0x8, scoped, tag = 'scoped memory for tpu_custom_call.1']
    %9 = vsyncpa [#allocation4], 0
    %s10 = scalar_lea.sflag [#allocation4], 1
    %11 = vsyncpa %s10, 0
    loop: start=0, step=1, limit=4
    $region2: #{tpu_custom_call.1} parent=1 // loop_pre_header
      _
    $region3: #{tpu_custom_call.1} parent=1 // loop_header
      %s13 = sphi 0, %s17
      %p14 = scmp.ge.s32.totalorder %s13, 4
      %s23 = sphi 0, %s25
      %s26 = sphi 0, %s23
      %s27 = sphi 0, %s26
      %s43 = sphi 0, %s27
      %s47 = sphi 0, %s47
      %s49 = sphi 0, %s47
      %s50 = sphi 0, %s49
      %s64 = sphi 0, %s50
      %s68 = sphi 0, %s68
      %s70 = sphi 0, %s68
      %s71 = sphi 0, %s70
      %s85 = sphi 0, %s71
      %s89 = sphi 0, %s89
      %s91 = sphi 0, %s89
      %s92 = sphi 0, %s91
      %s106 = sphi 0, %s92
      %s112 = sphi 0, %s114
      %s115 = sphi 0, %s112
      %s116 = sphi 0, %s115
      %s132 = sphi 0, %s116
    $region4: #{tpu_custom_call.1} parent=1 // loop_header_branch
      %16 = sbr.rel (%p14) target = $region8
    $region5: #{tpu_custom_call.1} parent=1 // loop_body
      %s18 = ssub.s32 %s13, 1
      %s19 = ssub.s32 %s13, 2
      %s20 = sadd.s32 %s13, 1
      %s21 = ssub.s32 %s13, %s20
      %p22 = scmp.eq.s32.totalorder %s21, 0
      %s24 = sadd.s32 %s23, 1
      %s25 = scalar_select %p22, %s23, %s24
      %p28 = pneg %p22
      %p29 = scmp.eq.s32.totalorder %s13, 1
      %p30 = por %p28, %p29
      %p31 = scmp.ne.s32.totalorder %s23, %s26
      %p32 = scmp.eq.s32.totalorder %s13, 0
      %p33 = por %p31, %p32
      %p34 = scmp.ne.s32.totalorder %s23, %s26
      %p35 = scmp.eq.s32.totalorder %s18, 1
      %p36 = por %p34, %p35
      %p37 = scmp.ne.s32.totalorder %s26, %s27
      %p38 = scmp.eq.s32.totalorder %s18, 0
      %p39 = por %p37, %p38
      %p40 = scmp.ne.s32.totalorder %s26, %s27
      %p41 = scmp.eq.s32.totalorder %s19, 1
      %p42 = por %p40, %p41
      %p44 = scmp.ne.s32.totalorder %s27, %s43
      %p45 = scmp.eq.s32.totalorder %s19, 0
      %p46 = por %p44, %p45
      %s48 = sadd.s32 %s47, 1
      %p51 = scmp.eq.s32.totalorder %s13, 1
      %p52 = scmp.ne.s32.totalorder %s47, %s49
      %p53 = scmp.eq.s32.totalorder %s13, 0
      %p54 = por %p52, %p53
      %p55 = scmp.ne.s32.totalorder %s47, %s49
      %p56 = scmp.eq.s32.totalorder %s18, 1
      %p57 = por %p55, %p56
      %p58 = scmp.ne.s32.totalorder %s49, %s50
      %p59 = scmp.eq.s32.totalorder %s18, 0
      %p60 = por %p58, %p59
      %p61 = scmp.ne.s32.totalorder %s49, %s50
      %p62 = scmp.eq.s32.totalorder %s19, 1
      %p63 = por %p61, %p62
      %p65 = scmp.ne.s32.totalorder %s50, %s64
      %p66 = scmp.eq.s32.totalorder %s19, 0
      %p67 = por %p65, %p66
      %s69 = sadd.s32 %s68, 1
      %p72 = scmp.eq.s32.totalorder %s13, 1
      %p73 = scmp.ne.s32.totalorder %s68, %s70
      %p74 = scmp.eq.s32.totalorder %s13, 0
      %p75 = por %p73, %p74
      %p76 = scmp.ne.s32.totalorder %s68, %s70
      %p77 = scmp.eq.s32.totalorder %s18, 1
      %p78 = por %p76, %p77
      %p79 = scmp.ne.s32.totalorder %s70, %s71
      %p80 = scmp.eq.s32.totalorder %s18, 0
      %p81 = por %p79, %p80
      %p82 = scmp.ne.s32.totalorder %s70, %s71
      %p83 = scmp.eq.s32.totalorder %s19, 1
      %p84 = por %p82, %p83
      %p86 = scmp.ne.s32.totalorder %s71, %s85
      %p87 = scmp.eq.s32.totalorder %s19, 0
      %p88 = por %p86, %p87
      %s90 = sadd.s32 %s89, 1
      %p93 = scmp.eq.s32.totalorder %s13, 1
      %p94 = scmp.ne.s32.totalorder %s89, %s91
      %p95 = scmp.eq.s32.totalorder %s13, 0
      %p96 = por %p94, %p95
      %p97 = scmp.ne.s32.totalorder %s89, %s91
      %p98 = scmp.eq.s32.totalorder %s18, 1
      %p99 = por %p97, %p98
      %p100 = scmp.ne.s32.totalorder %s91, %s92
      %p101 = scmp.eq.s32.totalorder %s18, 0
      %p102 = por %p100, %p101
      %p103 = scmp.ne.s32.totalorder %s91, %s92
      %p104 = scmp.eq.s32.totalorder %s19, 1
      %p105 = por %p103, %p104
      %p107 = scmp.ne.s32.totalorder %s92, %s106
      %p108 = scmp.eq.s32.totalorder %s19, 0
      %p109 = por %p107, %p108
      %s110 = ssub.s32 %s13, %s20
      %p111 = scmp.eq.s32.totalorder %s110, 0
      %s113 = sadd.s32 %s112, 1
      %s114 = scalar_select %p111, %s112, %s113
      %p117 = pneg %p111
      %p118 = scmp.eq.s32.totalorder %s13, 1
      %p119 = por %p117, %p118
      %p120 = scmp.ne.s32.totalorder %s112, %s115
      %p121 = scmp.eq.s32.totalorder %s13, 0
      %p122 = por %p120, %p121
      %p123 = scmp.ne.s32.totalorder %s112, %s115
      %p124 = scmp.eq.s32.totalorder %s18, 1
      %p125 = por %p123, %p124
      %p126 = scmp.ne.s32.totalorder %s115, %s116
      %p127 = scmp.eq.s32.totalorder %s18, 0
      %p128 = por %p126, %p127
      %p129 = scmp.ne.s32.totalorder %s115, %s116
      %p130 = scmp.eq.s32.totalorder %s19, 1
      %p131 = por %p129, %p130
      %p133 = scmp.ne.s32.totalorder %s116, %s132
      %p134 = scmp.eq.s32.totalorder %s19, 0
      %p135 = por %p133, %p134
      %p136 = scmp.le.s32.totalorder 1, %s13
      %p137 = scmp.lt.s32.totalorder %s13, 3
      %p138 = pnand %p136, %p137
      %p139 = pneg %p138
      // Predicated region
      $region9: #{tpu_custom_call.1} parent=5 // pred_check
        _
      $region10: #{tpu_custom_call.1} parent=5 // pred_check_branch
        %141 = sbr.rel (%p138) target = $region12
      $region11: #{tpu_custom_call.1} parent=5 // pred_region
        %s142 = ssub.s32 %s13, 1
        // Predicated region
        $region13: #{tpu_custom_call.1} parent=11 // pred_check
          %p143 = pneg %p60
        $region14: #{tpu_custom_call.1} parent=11 // pred_check_branch
          %145 = sbr.rel (%p143) target = $region16
        $region15: #{tpu_custom_call.1} parent=11 // pred_region
          _
        $region16: #{tpu_custom_call.1} parent=11 // pred_fallthru
          _
        // Predicated region
        $region17: #{tpu_custom_call.1} parent=11 // pred_check
          %p146 = pneg %p81
        $region18: #{tpu_custom_call.1} parent=11 // pred_check_branch
          %148 = sbr.rel (%p146) target = $region20
        $region19: #{tpu_custom_call.1} parent=11 // pred_region
          _
        $region20: #{tpu_custom_call.1} parent=11 // pred_fallthru
          _
        // Predicated region
        $region21: #{tpu_custom_call.1} parent=11 // pred_check
          %p149 = pneg %p102
        $region22: #{tpu_custom_call.1} parent=11 // pred_check_branch
          %151 = sbr.rel (%p149) target = $region24
        $region23: #{tpu_custom_call.1} parent=11 // pred_region
          _
        $region24: #{tpu_custom_call.1} parent=11 // pred_fallthru
          _
      $region12: #{tpu_custom_call.1} parent=5 // pred_fallthru
        _
      %p152 = scmp.lt.s32.totalorder %s13, 2
      // Predicated region
      $region25: #{tpu_custom_call.1} parent=5 // pred_check
        %p153 = pneg %p152
      $region26: #{tpu_custom_call.1} parent=5 // pred_check_branch
        %155 = sbr.rel (%p153) target = $region28
      $region27: #{tpu_custom_call.1} parent=5 // pred_region
        // Predicated region
        $region29: #{tpu_custom_call.1} parent=27 // pred_check
          %p156 = pneg %p33
        $region30: #{tpu_custom_call.1} parent=27 // pred_check_branch
          %158 = sbr.rel (%p156) target = $region32
        $region31: #{tpu_custom_call.1} parent=27 // pred_region
          %p159 = scmp.lt.s32.totalorder %s13, 1
          %s160 = scalar_select %p159, %s13, 1
          %s161 = smul.addr %s160, 72
          %s162 = smul.addr %s161, 8
          %s163 = scalar_lea.vmem %s0, %s162
        $region32: #{tpu_custom_call.1} parent=27 // pred_fallthru
          _
      $region28: #{tpu_custom_call.1} parent=5 // pred_fallthru
        _
      %p164 = scmp.le.s32.totalorder 1, %s13
      %p165 = scmp.lt.s32.totalorder %s13, 3
      %p166 = pnand %p164, %p165
      %p167 = pneg %p166
      // Predicated region
      $region33: #{tpu_custom_call.1} parent=5 // pred_check
        _
      $region34: #{tpu_custom_call.1} parent=5 // pred_check_branch
        %169 = sbr.rel (%p166) target = $region36
      $region35: #{tpu_custom_call.1} parent=5 // pred_region
        %s170 = ssub.s32 %s13, 1
        %p171 = scmp.lt.s32.totalorder %s18, 1
        %s172 = scalar_select %p171, %s18, 1
        %s173 = smul.addr %s172, 72
        %s174 = smul.addr %s173, 8
        %s175 = scalar_lea.vmem %s0, %s174
        %p176 = pneg %p39
        %p177 = pneg %p36
        %p178 = pneg %p60
        %p179 = pneg %p57
        %p180 = pneg %p81
        %p181 = pneg %p78
        %p182 = pneg %p102
        %p183 = pneg %p99
        %p184 = pneg %p128
        %p185 = pneg %p125
        %s186 = sand.u32 %s115, 1
        %s187 = scalar_lea.sflag [#allocation4], %s186
        %s188 = sand.u32 %s115, 1
        %s189 = smul.addr %s188, 384
        %s190 = scalar_lea.vmem [#allocation3], %s189
        %p191 = scmp.lt.s32.totalorder %s18, 1
        %s192 = scalar_select %p191, %s18, 1
        %s193 = smul.addr %s192, 72
        %s194 = smul.addr %s193, 8
        %s195 = scalar_lea.vmem %s0, %s194
        %v196 = vld [vmem:[%s1] sm:$0x1f]
        %v197 = vld [vmem:[%s2] sm:$0xf]
        %v198 = vld [vmem:[%s2 + $0x4] sm:$0xf]
        %v199 = vld [vmem:[%s2 + $0x8] sm:$0xf]
        %v200 = vld [vmem:[%s2 + $0xc] sm:$0xf]
        %v201 = vld [vmem:[%s2 + $0x10] sm:$0xf]
        %v202 = vld [vmem:[%s2 + $0x14] sm:$0xf]
        %v203 = vld [vmem:[%s2 + $0x18] sm:$0xf]
        %v204 = vld [vmem:[%s2 + $0x1c] sm:$0xf]
        %v205 = vld [vmem:[%s2 + $0x20] sm:$0xf]
        %v206 = vld [vmem:[%s2 + $0x24] sm:$0xf]
        %v207 = vld [vmem:[%s2 + $0x28] sm:$0xf]
        %v208 = vld [vmem:[%s2 + $0x2c] sm:$0xf]
        %v209 = vld [vmem:[%s2 + $0x30] sm:$0xf]
        %v210 = vld [vmem:[%s2 + $0x34] sm:$0xf]
        %v211 = vld [vmem:[%s2 + $0x38] sm:$0xf]
        %v212 = vld [vmem:[%s2 + $0x3c] sm:$0xf]
        %v213 = vld [vmem:[%s3] sm:$0x1]
        %v214 = vld [vmem:[%s195] sm:$0xff]
        %v215 = vld [vmem:[%s195 + $0x8] sm:$0xff]
        %v216 = vld [vmem:[%s195 + $0x10] sm:$0xff]
        %v217 = vld [vmem:[%s195 + $0x18] sm:$0xff]
        %v218 = vld [vmem:[%s195 + $0x20] sm:$0xff]
        %v219 = vld [vmem:[%s195 + $0x28] sm:$0xff]
        %v220 = vld [vmem:[%s195 + $0x30] sm:$0xff]
        %v221 = vld [vmem:[%s195 + $0x38] sm:$0xff]
        %v222 = vld [vmem:[%s195 + $0x40] sm:$0xff]
        %v223 = vld [vmem:[%s195 + $0x48] sm:$0xff]
        %v224 = vld [vmem:[%s195 + $0x50] sm:$0xff]
        %v225 = vld [vmem:[%s195 + $0x58] sm:$0xff]
        %v226 = vld [vmem:[%s195 + $0x60] sm:$0xff]
        %v227 = vld [vmem:[%s195 + $0x68] sm:$0xff]
        %v228 = vld [vmem:[%s195 + $0x70] sm:$0xff]
        %v229 = vld [vmem:[%s195 + $0x78] sm:$0xff]
        %231 = vset.pattern.permute.xlu0 0
        %232 = vperm.xlu0 %231, %v214
        %v233 = vpop.permute.xlu0 %232
        %236 = vset.pattern.permute.xlu0 0
        %237 = vperm.xlu0 %236, %v215
        %v238 = vpop.permute.xlu0 %237
        %241 = vset.pattern.permute.xlu0 0
        %242 = vperm.xlu0 %241, %v216
        %v243 = vpop.permute.xlu0 %242
        %246 = vset.pattern.permute.xlu0 0
        %247 = vperm.xlu0 %246, %v217
        %v248 = vpop.permute.xlu0 %247
        %251 = vset.pattern.permute.xlu0 0
        %252 = vperm.xlu0 %251, %v218
        %v253 = vpop.permute.xlu0 %252
        %256 = vset.pattern.permute.xlu0 0
        %257 = vperm.xlu0 %256, %v219
        %v258 = vpop.permute.xlu0 %257
        %261 = vset.pattern.permute.xlu0 0
        %262 = vperm.xlu0 %261, %v220
        %v263 = vpop.permute.xlu0 %262
        %266 = vset.pattern.permute.xlu0 0
        %267 = vperm.xlu0 %266, %v221
        %v268 = vpop.permute.xlu0 %267
        %271 = vset.pattern.permute.xlu0 0
        %272 = vperm.xlu0 %271, %v222
        %v273 = vpop.permute.xlu0 %272
        %276 = vset.pattern.permute.xlu0 0
        %277 = vperm.xlu0 %276, %v223
        %v278 = vpop.permute.xlu0 %277
        %281 = vset.pattern.permute.xlu0 0
        %282 = vperm.xlu0 %281, %v224
        %v283 = vpop.permute.xlu0 %282
        %286 = vset.pattern.permute.xlu0 0
        %287 = vperm.xlu0 %286, %v225
        %v288 = vpop.permute.xlu0 %287
        %291 = vset.pattern.permute.xlu0 0
        %292 = vperm.xlu0 %291, %v226
        %v293 = vpop.permute.xlu0 %292
        %296 = vset.pattern.permute.xlu0 0
        %297 = vperm.xlu0 %296, %v227
        %v298 = vpop.permute.xlu0 %297
        %301 = vset.pattern.permute.xlu0 0
        %302 = vperm.xlu0 %301, %v228
        %v303 = vpop.permute.xlu0 %302
        %306 = vset.pattern.permute.xlu0 0
        %307 = vperm.xlu0 %306, %v229
        %v308 = vpop.permute.xlu0 %307
        %v310 = vperm.slane %v196, 0
        %v311 = vmul.f32 %v233, %v310
        %v312 = vmul.f32 %v238, %v310
        %v313 = vmul.f32 %v243, %v310
        %v314 = vmul.f32 %v248, %v310
        %v315 = vmul.f32 %v253, %v310
        %v316 = vmul.f32 %v258, %v310
        %v317 = vmul.f32 %v263, %v310
        %v318 = vmul.f32 %v268, %v310
        %v319 = vmul.f32 %v273, %v310
        %v320 = vmul.f32 %v278, %v310
        %v321 = vmul.f32 %v283, %v310
        %v322 = vmul.f32 %v288, %v310
        %v323 = vmul.f32 %v293, %v310
        %v324 = vmul.f32 %v298, %v310
        %v325 = vmul.f32 %v303, %v310
        %v326 = vmul.f32 %v308, %v310
        %327 = vset.pattern.permute.xlu0 1
        %328 = vperm.xlu0 %327, %v214
        %v329 = vpop.permute.xlu0 %328
        %331 = vset.pattern.permute.xlu0 1
        %332 = vperm.xlu0 %331, %v215
        %v333 = vpop.permute.xlu0 %332
        %335 = vset.pattern.permute.xlu0 1
        %336 = vperm.xlu0 %335, %v216
        %v337 = vpop.permute.xlu0 %336
        %339 = vset.pattern.permute.xlu0 1
        %340 = vperm.xlu0 %339, %v217
        %v341 = vpop.permute.xlu0 %340
        %343 = vset.pattern.permute.xlu0 1
        %344 = vperm.xlu0 %343, %v218
        %v345 = vpop.permute.xlu0 %344
        %347 = vset.pattern.permute.xlu0 1
        %348 = vperm.xlu0 %347, %v219
        %v349 = vpop.permute.xlu0 %348
        %351 = vset.pattern.permute.xlu0 1
        %352 = vperm.xlu0 %351, %v220
        %v353 = vpop.permute.xlu0 %352
        %355 = vset.pattern.permute.xlu0 1
        %356 = vperm.xlu0 %355, %v221
        %v357 = vpop.permute.xlu0 %356
        %359 = vset.pattern.permute.xlu0 1
        %360 = vperm.xlu0 %359, %v222
        %v361 = vpop.permute.xlu0 %360
        %363 = vset.pattern.permute.xlu0 1
        %364 = vperm.xlu0 %363, %v223
        %v365 = vpop.permute.xlu0 %364
        %367 = vset.pattern.permute.xlu0 1
        %368 = vperm.xlu0 %367, %v224
        %v369 = vpop.permute.xlu0 %368
        %371 = vset.pattern.permute.xlu0 1
        %372 = vperm.xlu0 %371, %v225
        %v373 = vpop.permute.xlu0 %372
        %375 = vset.pattern.permute.xlu0 1
        %376 = vperm.xlu0 %375, %v226
        %v377 = vpop.permute.xlu0 %376
        %379 = vset.pattern.permute.xlu0 1
        %380 = vperm.xlu0 %379, %v227
        %v381 = vpop.permute.xlu0 %380
        %383 = vset.pattern.permute.xlu0 1
        %384 = vperm.xlu0 %383, %v228
        %v385 = vpop.permute.xlu0 %384
        %387 = vset.pattern.permute.xlu0 1
        %388 = vperm.xlu0 %387, %v229
        %v389 = vpop.permute.xlu0 %388
        %v391 = vperm.slane %v196, 1
        %v392 = vmul.f32 %v329, %v391
        %v393 = vmul.f32 %v333, %v391
        %v394 = vmul.f32 %v337, %v391
        %v395 = vmul.f32 %v341, %v391
        %v396 = vmul.f32 %v345, %v391
        %v397 = vmul.f32 %v349, %v391
        %v398 = vmul.f32 %v353, %v391
        %v399 = vmul.f32 %v357, %v391
        %v400 = vmul.f32 %v361, %v391
        %v401 = vmul.f32 %v365, %v391
        %v402 = vmul.f32 %v369, %v391
        %v403 = vmul.f32 %v373, %v391
        %v404 = vmul.f32 %v377, %v391
        %v405 = vmul.f32 %v381, %v391
        %v406 = vmul.f32 %v385, %v391
        %v407 = vmul.f32 %v389, %v391
        %v408 = vadd.f32 %v311, %v392
        %v409 = vadd.f32 %v312, %v393
        %v410 = vadd.f32 %v313, %v394
        %v411 = vadd.f32 %v314, %v395
        %v412 = vadd.f32 %v315, %v396
        %v413 = vadd.f32 %v316, %v397
        %v414 = vadd.f32 %v317, %v398
        %v415 = vadd.f32 %v318, %v399
        %v416 = vadd.f32 %v319, %v400
        %v417 = vadd.f32 %v320, %v401
        %v418 = vadd.f32 %v321, %v402
        %v419 = vadd.f32 %v322, %v403
        %v420 = vadd.f32 %v323, %v404
        %v421 = vadd.f32 %v324, %v405
        %v422 = vadd.f32 %v325, %v406
        %v423 = vadd.f32 %v326, %v407
        %424 = vset.pattern.permute.xlu0 2
        %425 = vperm.xlu0 %424, %v214
        %v426 = vpop.permute.xlu0 %425
        %428 = vset.pattern.permute.xlu0 2
        %429 = vperm.xlu0 %428, %v215
        %v430 = vpop.permute.xlu0 %429
        %432 = vset.pattern.permute.xlu0 2
        %433 = vperm.xlu0 %432, %v216
        %v434 = vpop.permute.xlu0 %433
        %436 = vset.pattern.permute.xlu0 2
        %437 = vperm.xlu0 %436, %v217
        %v438 = vpop.permute.xlu0 %437
        %440 = vset.pattern.permute.xlu0 2
        %441 = vperm.xlu0 %440, %v218
        %v442 = vpop.permute.xlu0 %441
        %444 = vset.pattern.permute.xlu0 2
        %445 = vperm.xlu0 %444, %v219
        %v446 = vpop.permute.xlu0 %445
        %448 = vset.pattern.permute.xlu0 2
        %449 = vperm.xlu0 %448, %v220
        %v450 = vpop.permute.xlu0 %449
        %452 = vset.pattern.permute.xlu0 2
        %453 = vperm.xlu0 %452, %v221
        %v454 = vpop.permute.xlu0 %453
        %456 = vset.pattern.permute.xlu0 2
        %457 = vperm.xlu0 %456, %v222
        %v458 = vpop.permute.xlu0 %457
        %460 = vset.pattern.permute.xlu0 2
        %461 = vperm.xlu0 %460, %v223
        %v462 = vpop.permute.xlu0 %461
        %464 = vset.pattern.permute.xlu0 2
        %465 = vperm.xlu0 %464, %v224
        %v466 = vpop.permute.xlu0 %465
        %468 = vset.pattern.permute.xlu0 2
        %469 = vperm.xlu0 %468, %v225
        %v470 = vpop.permute.xlu0 %469
        %472 = vset.pattern.permute.xlu0 2
        %473 = vperm.xlu0 %472, %v226
        %v474 = vpop.permute.xlu0 %473
        %476 = vset.pattern.permute.xlu0 2
        %477 = vperm.xlu0 %476, %v227
        %v478 = vpop.permute.xlu0 %477
        %480 = vset.pattern.permute.xlu0 2
        %481 = vperm.xlu0 %480, %v228
        %v482 = vpop.permute.xlu0 %481
        %484 = vset.pattern.permute.xlu0 2
        %485 = vperm.xlu0 %484, %v229
        %v486 = vpop.permute.xlu0 %485
        %v488 = vperm.slane %v196, 2
        %v489 = vmul.f32 %v426, %v488
        %v490 = vmul.f32 %v430, %v488
        %v491 = vmul.f32 %v434, %v488
        %v492 = vmul.f32 %v438, %v488
        %v493 = vmul.f32 %v442, %v488
        %v494 = vmul.f32 %v446, %v488
        %v495 = vmul.f32 %v450, %v488
        %v496 = vmul.f32 %v454, %v488
        %v497 = vmul.f32 %v458, %v488
        %v498 = vmul.f32 %v462, %v488
        %v499 = vmul.f32 %v466, %v488
        %v500 = vmul.f32 %v470, %v488
        %v501 = vmul.f32 %v474, %v488
        %v502 = vmul.f32 %v478, %v488
        %v503 = vmul.f32 %v482, %v488
        %v504 = vmul.f32 %v486, %v488
        %v505 = vadd.f32 %v408, %v489
        %v506 = vadd.f32 %v409, %v490
        %v507 = vadd.f32 %v410, %v491
        %v508 = vadd.f32 %v411, %v492
        %v509 = vadd.f32 %v412, %v493
        %v510 = vadd.f32 %v413, %v494
        %v511 = vadd.f32 %v414, %v495
        %v512 = vadd.f32 %v415, %v496
        %v513 = vadd.f32 %v416, %v497
        %v514 = vadd.f32 %v417, %v498
        %v515 = vadd.f32 %v418, %v499
        %v516 = vadd.f32 %v419, %v500
        %v517 = vadd.f32 %v420, %v501
        %v518 = vadd.f32 %v421, %v502
        %v519 = vadd.f32 %v422, %v503
        %v520 = vadd.f32 %v423, %v504
        %521 = vset.pattern.permute.xlu0 3
        %522 = vperm.xlu0 %521, %v214
        %v523 = vpop.permute.xlu0 %522
        %525 = vset.pattern.permute.xlu0 3
        %526 = vperm.xlu0 %525, %v215
        %v527 = vpop.permute.xlu0 %526
        %529 = vset.pattern.permute.xlu0 3
        %530 = vperm.xlu0 %529, %v216
        %v531 = vpop.permute.xlu0 %530
        %533 = vset.pattern.permute.xlu0 3
        %534 = vperm.xlu0 %533, %v217
        %v535 = vpop.permute.xlu0 %534
        %537 = vset.pattern.permute.xlu0 3
        %538 = vperm.xlu0 %537, %v218
        %v539 = vpop.permute.xlu0 %538
        %541 = vset.pattern.permute.xlu0 3
        %542 = vperm.xlu0 %541, %v219
        %v543 = vpop.permute.xlu0 %542
        %545 = vset.pattern.permute.xlu0 3
        %546 = vperm.xlu0 %545, %v220
        %v547 = vpop.permute.xlu0 %546
        %549 = vset.pattern.permute.xlu0 3
        %550 = vperm.xlu0 %549, %v221
        %v551 = vpop.permute.xlu0 %550
        %553 = vset.pattern.permute.xlu0 3
        %554 = vperm.xlu0 %553, %v222
        %v555 = vpop.permute.xlu0 %554
        %557 = vset.pattern.permute.xlu0 3
        %558 = vperm.xlu0 %557, %v223
        %v559 = vpop.permute.xlu0 %558
        %561 = vset.pattern.permute.xlu0 3
        %562 = vperm.xlu0 %561, %v224
        %v563 = vpop.permute.xlu0 %562
        %565 = vset.pattern.permute.xlu0 3
        %566 = vperm.xlu0 %565, %v225
        %v567 = vpop.permute.xlu0 %566
        %569 = vset.pattern.permute.xlu0 3
        %570 = vperm.xlu0 %569, %v226
        %v571 = vpop.permute.xlu0 %570
        %573 = vset.pattern.permute.xlu0 3
        %574 = vperm.xlu0 %573, %v227
        %v575 = vpop.permute.xlu0 %574
        %577 = vset.pattern.permute.xlu0 3
        %578 = vperm.xlu0 %577, %v228
        %v579 = vpop.permute.xlu0 %578
        %581 = vset.pattern.permute.xlu0 3
        %582 = vperm.xlu0 %581, %v229
        %v583 = vpop.permute.xlu0 %582
        %v585 = vperm.slane %v196, 3
        %v586 = vmul.f32 %v523, %v585
        %v587 = vmul.f32 %v527, %v585
        %v588 = vmul.f32 %v531, %v585
        %v589 = vmul.f32 %v535, %v585
        %v590 = vmul.f32 %v539, %v585
        %v591 = vmul.f32 %v543, %v585
        %v592 = vmul.f32 %v547, %v585
        %v593 = vmul.f32 %v551, %v585
        %v594 = vmul.f32 %v555, %v585
        %v595 = vmul.f32 %v559, %v585
        %v596 = vmul.f32 %v563, %v585
        %v597 = vmul.f32 %v567, %v585
        %v598 = vmul.f32 %v571, %v585
        %v599 = vmul.f32 %v575, %v585
        %v600 = vmul.f32 %v579, %v585
        %v601 = vmul.f32 %v583, %v585
        %v602 = vadd.f32 %v505, %v586
        %v603 = vadd.f32 %v506, %v587
        %v604 = vadd.f32 %v507, %v588
        %v605 = vadd.f32 %v508, %v589
        %v606 = vadd.f32 %v509, %v590
        %v607 = vadd.f32 %v510, %v591
        %v608 = vadd.f32 %v511, %v592
        %v609 = vadd.f32 %v512, %v593
        %v610 = vadd.f32 %v513, %v594
        %v611 = vadd.f32 %v514, %v595
        %v612 = vadd.f32 %v515, %v596
        %v613 = vadd.f32 %v516, %v597
        %v614 = vadd.f32 %v517, %v598
        %v615 = vadd.f32 %v518, %v599
        %v616 = vadd.f32 %v519, %v600
        %v617 = vadd.f32 %v520, %v601
        %618 = vset.pattern.permute.xlu0 4
        %619 = vperm.xlu0 %618, %v214
        %v620 = vpop.permute.xlu0 %619
        %622 = vset.pattern.permute.xlu0 4
        %623 = vperm.xlu0 %622, %v215
        %v624 = vpop.permute.xlu0 %623
        %626 = vset.pattern.permute.xlu0 4
        %627 = vperm.xlu0 %626, %v216
        %v628 = vpop.permute.xlu0 %627
        %630 = vset.pattern.permute.xlu0 4
        %631 = vperm.xlu0 %630, %v217
        %v632 = vpop.permute.xlu0 %631
        %634 = vset.pattern.permute.xlu0 4
        %635 = vperm.xlu0 %634, %v218
        %v636 = vpop.permute.xlu0 %635
        %638 = vset.pattern.permute.xlu0 4
        %639 = vperm.xlu0 %638, %v219
        %v640 = vpop.permute.xlu0 %639
        %642 = vset.pattern.permute.xlu0 4
        %643 = vperm.xlu0 %642, %v220
        %v644 = vpop.permute.xlu0 %643
        %646 = vset.pattern.permute.xlu0 4
        %647 = vperm.xlu0 %646, %v221
        %v648 = vpop.permute.xlu0 %647
        %650 = vset.pattern.permute.xlu0 4
        %651 = vperm.xlu0 %650, %v222
        %v652 = vpop.permute.xlu0 %651
        %654 = vset.pattern.permute.xlu0 4
        %655 = vperm.xlu0 %654, %v223
        %v656 = vpop.permute.xlu0 %655
        %658 = vset.pattern.permute.xlu0 4
        %659 = vperm.xlu0 %658, %v224
        %v660 = vpop.permute.xlu0 %659
        %662 = vset.pattern.permute.xlu0 4
        %663 = vperm.xlu0 %662, %v225
        %v664 = vpop.permute.xlu0 %663
        %666 = vset.pattern.permute.xlu0 4
        %667 = vperm.xlu0 %666, %v226
        %v668 = vpop.permute.xlu0 %667
        %670 = vset.pattern.permute.xlu0 4
        %671 = vperm.xlu0 %670, %v227
        %v672 = vpop.permute.xlu0 %671
        %674 = vset.pattern.permute.xlu0 4
        %675 = vperm.xlu0 %674, %v228
        %v676 = vpop.permute.xlu0 %675
        %678 = vset.pattern.permute.xlu0 4
        %679 = vperm.xlu0 %678, %v229
        %v680 = vpop.permute.xlu0 %679
        %v682 = vperm.slane %v196, 4
        %v683 = vmul.f32 %v620, %v682
        %v684 = vmul.f32 %v624, %v682
        %v685 = vmul.f32 %v628, %v682
        %v686 = vmul.f32 %v632, %v682
        %v687 = vmul.f32 %v636, %v682
        %v688 = vmul.f32 %v640, %v682
        %v689 = vmul.f32 %v644, %v682
        %v690 = vmul.f32 %v648, %v682
        %v691 = vmul.f32 %v652, %v682
        %v692 = vmul.f32 %v656, %v682
        %v693 = vmul.f32 %v660, %v682
        %v694 = vmul.f32 %v664, %v682
        %v695 = vmul.f32 %v668, %v682
        %v696 = vmul.f32 %v672, %v682
        %v697 = vmul.f32 %v676, %v682
        %v698 = vmul.f32 %v680, %v682
        %v699 = vadd.f32 %v602, %v683
        %v700 = vadd.f32 %v603, %v684
        %v701 = vadd.f32 %v604, %v685
        %v702 = vadd.f32 %v605, %v686
        %v703 = vadd.f32 %v606, %v687
        %v704 = vadd.f32 %v607, %v688
        %v705 = vadd.f32 %v608, %v689
        %v706 = vadd.f32 %v609, %v690
        %v707 = vadd.f32 %v610, %v691
        %v708 = vadd.f32 %v611, %v692
        %v709 = vadd.f32 %v612, %v693
        %v710 = vadd.f32 %v613, %v694
        %v711 = vadd.f32 %v614, %v695
        %v712 = vadd.f32 %v615, %v696
        %v713 = vadd.f32 %v616, %v697
        %v714 = vadd.f32 %v617, %v698
        %v715 = vmax.f32 %v699, 0.0
        %v716 = vmax.f32 %v700, 0.0
        %v717 = vmax.f32 %v701, 0.0
        %v718 = vmax.f32 %v702, 0.0
        %v719 = vmax.f32 %v703, 0.0
        %v720 = vmax.f32 %v704, 0.0
        %v721 = vmax.f32 %v705, 0.0
        %v722 = vmax.f32 %v706, 0.0
        %v723 = vmax.f32 %v707, 0.0
        %v724 = vmax.f32 %v708, 0.0
        %v725 = vmax.f32 %v709, 0.0
        %v726 = vmax.f32 %v710, 0.0
        %v727 = vmax.f32 %v711, 0.0
        %v728 = vmax.f32 %v712, 0.0
        %v729 = vmax.f32 %v713, 0.0
        %v730 = vmax.f32 %v714, 0.0
        %v731 = vpack.c.bf16 %v716, %v715
        %v732 = vpack.c.bf16 %v718, %v717
        %v733 = vpack.c.bf16 %v720, %v719
        %v734 = vpack.c.bf16 %v722, %v721
        %v735 = vpack.c.bf16 %v724, %v723
        %v736 = vpack.c.bf16 %v726, %v725
        %v737 = vpack.c.bf16 %v728, %v727
        %v738 = vpack.c.bf16 %v730, %v729
        %v755 = vunpack.c.l.b16 %v197
        %v756 = vunpack.c.l.b16 %v198
        %v757 = vunpack.c.l.b16 %v199
        %v758 = vunpack.c.l.b16 %v200
        %v759 = vunpack.c.l.b16 %v201
        %v760 = vunpack.c.l.b16 %v202
        %v761 = vunpack.c.l.b16 %v203
        %v762 = vunpack.c.l.b16 %v204
        %v763 = vunpack.c.l.b16 %v205
        %v764 = vunpack.c.l.b16 %v206
        %v765 = vunpack.c.l.b16 %v207
        %v766 = vunpack.c.l.b16 %v208
        %v767 = vunpack.c.l.b16 %v209
        %v768 = vunpack.c.l.b16 %v210
        %v769 = vunpack.c.l.b16 %v211
        %v770 = vunpack.c.l.b16 %v212
        %v771 = vpack.c.b16 %v756, %v755
        %v772 = vpack.c.b16 %v758, %v757
        %v773 = vpack.c.b16 %v760, %v759
        %v774 = vpack.c.b16 %v762, %v761
        %v775 = vpack.c.b16 %v764, %v763
        %v776 = vpack.c.b16 %v766, %v765
        %v777 = vpack.c.b16 %v768, %v767
        %v778 = vpack.c.b16 %v770, %v769
        %787 = vmatpush.bf16.msra.mxu0 %v778
        %788 = vmatpush.bf16.msra.mxu0 %v777
        %789 = vmatpush.bf16.msra.mxu0 %v776
        %790 = vmatpush.bf16.msra.mxu0 %v775
        %791 = vmatpush.bf16.msra.mxu0 %v774
        %792 = vmatpush.bf16.msra.mxu0 %v773
        %793 = vmatpush.bf16.msra.mxu0 %v772
        %794 = vmatpush.bf16.msra.mxu0 %v771
        %795 = vmatmul.bf16.gmra.mxu0 %v731
        %v796 = vpop.f32.mrf.mxu0
        %v797 = vadd.f32 0.0, %v796
        %v798 = vpop.f32.mrf.mxu0
        %v799 = vadd.f32 0.0, %v798
        %800 = vmatmul.bf16.gmra.mxu0 %v732
        %v801 = vpop.f32.mrf.mxu0
        %v802 = vadd.f32 0.0, %v801
        %v803 = vpop.f32.mrf.mxu0
        %v804 = vadd.f32 0.0, %v803
        %805 = vmatmul.bf16.gmra.mxu0 %v733
        %v806 = vpop.f32.mrf.mxu0
        %v807 = vadd.f32 0.0, %v806
        %v808 = vpop.f32.mrf.mxu0
        %v809 = vadd.f32 0.0, %v808
        %810 = vmatmul.bf16.gmra.mxu0 %v734
        %v811 = vpop.f32.mrf.mxu0
        %v812 = vadd.f32 0.0, %v811
        %v813 = vpop.f32.mrf.mxu0
        %v814 = vadd.f32 0.0, %v813
        %815 = vmatmul.bf16.gmra.mxu0 %v735
        %v816 = vpop.f32.mrf.mxu0
        %v817 = vadd.f32 0.0, %v816
        %v818 = vpop.f32.mrf.mxu0
        %v819 = vadd.f32 0.0, %v818
        %820 = vmatmul.bf16.gmra.mxu0 %v736
        %v821 = vpop.f32.mrf.mxu0
        %v822 = vadd.f32 0.0, %v821
        %v823 = vpop.f32.mrf.mxu0
        %v824 = vadd.f32 0.0, %v823
        %825 = vmatmul.bf16.gmra.mxu0 %v737
        %v826 = vpop.f32.mrf.mxu0
        %v827 = vadd.f32 0.0, %v826
        %v828 = vpop.f32.mrf.mxu0
        %v829 = vadd.f32 0.0, %v828
        %830 = vmatmul.bf16.gmra.mxu0 %v738
        %v831 = vpop.f32.mrf.mxu0
        %v832 = vadd.f32 0.0, %v831
        %v833 = vpop.f32.mrf.mxu0
        %v834 = vadd.f32 0.0, %v833
        %835 = vdwg.mxu0
        %836 = vst [vmem:[#allocation2] sm:$0xff] %v797
        %837 = vst [vmem:[#allocation2 + $0x8] sm:$0xff] %v799
        %838 = vst [vmem:[#allocation2 + $0x10] sm:$0xff] %v802
        %839 = vst [vmem:[#allocation2 + $0x18] sm:$0xff] %v804
        %840 = vst [vmem:[#allocation2 + $0x20] sm:$0xff] %v807
        %841 = vst [vmem:[#allocation2 + $0x28] sm:$0xff] %v809
        %842 = vst [vmem:[#allocation2 + $0x30] sm:$0xff] %v812
        %843 = vst [vmem:[#allocation2 + $0x38] sm:$0xff] %v814
        %844 = vst [vmem:[#allocation2 + $0x40] sm:$0xff] %v817
        %845 = vst [vmem:[#allocation2 + $0x48] sm:$0xff] %v819
        %846 = vst [vmem:[#allocation2 + $0x50] sm:$0xff] %v822
        %847 = vst [vmem:[#allocation2 + $0x58] sm:$0xff] %v824
        %848 = vst [vmem:[#allocation2 + $0x60] sm:$0xff] %v827
        %849 = vst [vmem:[#allocation2 + $0x68] sm:$0xff] %v829
        %850 = vst [vmem:[#allocation2 + $0x70] sm:$0xff] %v832
        %851 = vst [vmem:[#allocation2 + $0x78] sm:$0xff] %v834
        %v852 = vld [vmem:[%s195 + $0x80] sm:$0xff]
        %v853 = vld [vmem:[%s195 + $0x88] sm:$0xff]
        %v854 = vld [vmem:[%s195 + $0x90] sm:$0xff]
        %v855 = vld [vmem:[%s195 + $0x98] sm:$0xff]
        %v856 = vld [vmem:[%s195 + $0xa0] sm:$0xff]
        %v857 = vld [vmem:[%s195 + $0xa8] sm:$0xff]
        %v858 = vld [vmem:[%s195 + $0xb0] sm:$0xff]
        %v859 = vld [vmem:[%s195 + $0xb8] sm:$0xff]
        %v860 = vld [vmem:[%s195 + $0xc0] sm:$0xff]
        %v861 = vld [vmem:[%s195 + $0xc8] sm:$0xff]
        %v862 = vld [vmem:[%s195 + $0xd0] sm:$0xff]
        %v863 = vld [vmem:[%s195 + $0xd8] sm:$0xff]
        %v864 = vld [vmem:[%s195 + $0xe0] sm:$0xff]
        %v865 = vld [vmem:[%s195 + $0xe8] sm:$0xff]
        %v866 = vld [vmem:[%s195 + $0xf0] sm:$0xff]
        %v867 = vld [vmem:[%s195 + $0xf8] sm:$0xff]
        %869 = vset.pattern.permute.xlu0 0
        %870 = vperm.xlu0 %869, %v852
        %v871 = vpop.permute.xlu0 %870
        %874 = vset.pattern.permute.xlu0 0
        %875 = vperm.xlu0 %874, %v853
        %v876 = vpop.permute.xlu0 %875
        %879 = vset.pattern.permute.xlu0 0
        %880 = vperm.xlu0 %879, %v854
        %v881 = vpop.permute.xlu0 %880
        %884 = vset.pattern.permute.xlu0 0
        %885 = vperm.xlu0 %884, %v855
        %v886 = vpop.permute.xlu0 %885
        %889 = vset.pattern.permute.xlu0 0
        %890 = vperm.xlu0 %889, %v856
        %v891 = vpop.permute.xlu0 %890
        %894 = vset.pattern.permute.xlu0 0
        %895 = vperm.xlu0 %894, %v857
        %v896 = vpop.permute.xlu0 %895
        %899 = vset.pattern.permute.xlu0 0
        %900 = vperm.xlu0 %899, %v858
        %v901 = vpop.permute.xlu0 %900
        %904 = vset.pattern.permute.xlu0 0
        %905 = vperm.xlu0 %904, %v859
        %v906 = vpop.permute.xlu0 %905
        %909 = vset.pattern.permute.xlu0 0
        %910 = vperm.xlu0 %909, %v860
        %v911 = vpop.permute.xlu0 %910
        %914 = vset.pattern.permute.xlu0 0
        %915 = vperm.xlu0 %914, %v861
        %v916 = vpop.permute.xlu0 %915
        %919 = vset.pattern.permute.xlu0 0
        %920 = vperm.xlu0 %919, %v862
        %v921 = vpop.permute.xlu0 %920
        %924 = vset.pattern.permute.xlu0 0
        %925 = vperm.xlu0 %924, %v863
        %v926 = vpop.permute.xlu0 %925
        %929 = vset.pattern.permute.xlu0 0
        %930 = vperm.xlu0 %929, %v864
        %v931 = vpop.permute.xlu0 %930
        %934 = vset.pattern.permute.xlu0 0
        %935 = vperm.xlu0 %934, %v865
        %v936 = vpop.permute.xlu0 %935
        %939 = vset.pattern.permute.xlu0 0
        %940 = vperm.xlu0 %939, %v866
        %v941 = vpop.permute.xlu0 %940
        %944 = vset.pattern.permute.xlu0 0
        %945 = vperm.xlu0 %944, %v867
        %v946 = vpop.permute.xlu0 %945
        %v948 = vmul.f32 %v871, %v310
        %v949 = vmul.f32 %v876, %v310
        %v950 = vmul.f32 %v881, %v310
        %v951 = vmul.f32 %v886, %v310
        %v952 = vmul.f32 %v891, %v310
        %v953 = vmul.f32 %v896, %v310
        %v954 = vmul.f32 %v901, %v310
        %v955 = vmul.f32 %v906, %v310
        %v956 = vmul.f32 %v911, %v310
        %v957 = vmul.f32 %v916, %v310
        %v958 = vmul.f32 %v921, %v310
        %v959 = vmul.f32 %v926, %v310
        %v960 = vmul.f32 %v931, %v310
        %v961 = vmul.f32 %v936, %v310
        %v962 = vmul.f32 %v941, %v310
        %v963 = vmul.f32 %v946, %v310
        %964 = vset.pattern.permute.xlu0 1
        %965 = vperm.xlu0 %964, %v852
        %v966 = vpop.permute.xlu0 %965
        %968 = vset.pattern.permute.xlu0 1
        %969 = vperm.xlu0 %968, %v853
        %v970 = vpop.permute.xlu0 %969
        %972 = vset.pattern.permute.xlu0 1
        %973 = vperm.xlu0 %972, %v854
        %v974 = vpop.permute.xlu0 %973
        %976 = vset.pattern.permute.xlu0 1
        %977 = vperm.xlu0 %976, %v855
        %v978 = vpop.permute.xlu0 %977
        %980 = vset.pattern.permute.xlu0 1
        %981 = vperm.xlu0 %980, %v856
        %v982 = vpop.permute.xlu0 %981
        %984 = vset.pattern.permute.xlu0 1
        %985 = vperm.xlu0 %984, %v857
        %v986 = vpop.permute.xlu0 %985
        %988 = vset.pattern.permute.xlu0 1
        %989 = vperm.xlu0 %988, %v858
        %v990 = vpop.permute.xlu0 %989
        %992 = vset.pattern.permute.xlu0 1
        %993 = vperm.xlu0 %992, %v859
        %v994 = vpop.permute.xlu0 %993
        %996 = vset.pattern.permute.xlu0 1
        %997 = vperm.xlu0 %996, %v860
        %v998 = vpop.permute.xlu0 %997
        %1000 = vset.pattern.permute.xlu0 1
        %1001 = vperm.xlu0 %1000, %v861
        %v1002 = vpop.permute.xlu0 %1001
        %1004 = vset.pattern.permute.xlu0 1
        %1005 = vperm.xlu0 %1004, %v862
        %v1006 = vpop.permute.xlu0 %1005
        %1008 = vset.pattern.permute.xlu0 1
        %1009 = vperm.xlu0 %1008, %v863
        %v1010 = vpop.permute.xlu0 %1009
        %1012 = vset.pattern.permute.xlu0 1
        %1013 = vperm.xlu0 %1012, %v864
        %v1014 = vpop.permute.xlu0 %1013
        %1016 = vset.pattern.permute.xlu0 1
        %1017 = vperm.xlu0 %1016, %v865
        %v1018 = vpop.permute.xlu0 %1017
        %1020 = vset.pattern.permute.xlu0 1
        %1021 = vperm.xlu0 %1020, %v866
        %v1022 = vpop.permute.xlu0 %1021
        %1024 = vset.pattern.permute.xlu0 1
        %1025 = vperm.xlu0 %1024, %v867
        %v1026 = vpop.permute.xlu0 %1025
        %v1028 = vmul.f32 %v966, %v391
        %v1029 = vmul.f32 %v970, %v391
        %v1030 = vmul.f32 %v974, %v391
        %v1031 = vmul.f32 %v978, %v391
        %v1032 = vmul.f32 %v982, %v391
        %v1033 = vmul.f32 %v986, %v391
        %v1034 = vmul.f32 %v990, %v391
        %v1035 = vmul.f32 %v994, %v391
        %v1036 = vmul.f32 %v998, %v391
        %v1037 = vmul.f32 %v1002, %v391
        %v1038 = vmul.f32 %v1006, %v391
        %v1039 = vmul.f32 %v1010, %v391
        %v1040 = vmul.f32 %v1014, %v391
        %v1041 = vmul.f32 %v1018, %v391
        %v1042 = vmul.f32 %v1022, %v391
        %v1043 = vmul.f32 %v1026, %v391
        %v1044 = vadd.f32 %v948, %v1028
        %v1045 = vadd.f32 %v949, %v1029
        %v1046 = vadd.f32 %v950, %v1030
        %v1047 = vadd.f32 %v951, %v1031
        %v1048 = vadd.f32 %v952, %v1032
        %v1049 = vadd.f32 %v953, %v1033
        %v1050 = vadd.f32 %v954, %v1034
        %v1051 = vadd.f32 %v955, %v1035
        %v1052 = vadd.f32 %v956, %v1036
        %v1053 = vadd.f32 %v957, %v1037
        %v1054 = vadd.f32 %v958, %v1038
        %v1055 = vadd.f32 %v959, %v1039
        %v1056 = vadd.f32 %v960, %v1040
        %v1057 = vadd.f32 %v961, %v1041
        %v1058 = vadd.f32 %v962, %v1042
        %v1059 = vadd.f32 %v963, %v1043
        %1060 = vset.pattern.permute.xlu0 2
        %1061 = vperm.xlu0 %1060, %v852
        %v1062 = vpop.permute.xlu0 %1061
        %1064 = vset.pattern.permute.xlu0 2
        %1065 = vperm.xlu0 %1064, %v853
        %v1066 = vpop.permute.xlu0 %1065
        %1068 = vset.pattern.permute.xlu0 2
        %1069 = vperm.xlu0 %1068, %v854
        %v1070 = vpop.permute.xlu0 %1069
        %1072 = vset.pattern.permute.xlu0 2
        %1073 = vperm.xlu0 %1072, %v855
        %v1074 = vpop.permute.xlu0 %1073
        %1076 = vset.pattern.permute.xlu0 2
        %1077 = vperm.xlu0 %1076, %v856
        %v1078 = vpop.permute.xlu0 %1077
        %1080 = vset.pattern.permute.xlu0 2
        %1081 = vperm.xlu0 %1080, %v857
        %v1082 = vpop.permute.xlu0 %1081
        %1084 = vset.pattern.permute.xlu0 2
        %1085 = vperm.xlu0 %1084, %v858
        %v1086 = vpop.permute.xlu0 %1085
        %1088 = vset.pattern.permute.xlu0 2
        %1089 = vperm.xlu0 %1088, %v859
        %v1090 = vpop.permute.xlu0 %1089
        %1092 = vset.pattern.permute.xlu0 2
        %1093 = vperm.xlu0 %1092, %v860
        %v1094 = vpop.permute.xlu0 %1093
        %1096 = vset.pattern.permute.xlu0 2
        %1097 = vperm.xlu0 %1096, %v861
        %v1098 = vpop.permute.xlu0 %1097
        %1100 = vset.pattern.permute.xlu0 2
        %1101 = vperm.xlu0 %1100, %v862
        %v1102 = vpop.permute.xlu0 %1101
        %1104 = vset.pattern.permute.xlu0 2
        %1105 = vperm.xlu0 %1104, %v863
        %v1106 = vpop.permute.xlu0 %1105
        %1108 = vset.pattern.permute.xlu0 2
        %1109 = vperm.xlu0 %1108, %v864
        %v1110 = vpop.permute.xlu0 %1109
        %1112 = vset.pattern.permute.xlu0 2
        %1113 = vperm.xlu0 %1112, %v865
        %v1114 = vpop.permute.xlu0 %1113
        %1116 = vset.pattern.permute.xlu0 2
        %1117 = vperm.xlu0 %1116, %v866
        %v1118 = vpop.permute.xlu0 %1117
        %1120 = vset.pattern.permute.xlu0 2
        %1121 = vperm.xlu0 %1120, %v867
        %v1122 = vpop.permute.xlu0 %1121
        %v1124 = vmul.f32 %v1062, %v488
        %v1125 = vmul.f32 %v1066, %v488
        %v1126 = vmul.f32 %v1070, %v488
        %v1127 = vmul.f32 %v1074, %v488
        %v1128 = vmul.f32 %v1078, %v488
        %v1129 = vmul.f32 %v1082, %v488
        %v1130 = vmul.f32 %v1086, %v488
        %v1131 = vmul.f32 %v1090, %v488
        %v1132 = vmul.f32 %v1094, %v488
        %v1133 = vmul.f32 %v1098, %v488
        %v1134 = vmul.f32 %v1102, %v488
        %v1135 = vmul.f32 %v1106, %v488
        %v1136 = vmul.f32 %v1110, %v488
        %v1137 = vmul.f32 %v1114, %v488
        %v1138 = vmul.f32 %v1118, %v488
        %v1139 = vmul.f32 %v1122, %v488
        %v1140 = vadd.f32 %v1044, %v1124
        %v1141 = vadd.f32 %v1045, %v1125
        %v1142 = vadd.f32 %v1046, %v1126
        %v1143 = vadd.f32 %v1047, %v1127
        %v1144 = vadd.f32 %v1048, %v1128
        %v1145 = vadd.f32 %v1049, %v1129
        %v1146 = vadd.f32 %v1050, %v1130
        %v1147 = vadd.f32 %v1051, %v1131
        %v1148 = vadd.f32 %v1052, %v1132
        %v1149 = vadd.f32 %v1053, %v1133
        %v1150 = vadd.f32 %v1054, %v1134
        %v1151 = vadd.f32 %v1055, %v1135
        %v1152 = vadd.f32 %v1056, %v1136
        %v1153 = vadd.f32 %v1057, %v1137
        %v1154 = vadd.f32 %v1058, %v1138
        %v1155 = vadd.f32 %v1059, %v1139
        %1156 = vset.pattern.permute.xlu0 3
        %1157 = vperm.xlu0 %1156, %v852
        %v1158 = vpop.permute.xlu0 %1157
        %1160 = vset.pattern.permute.xlu0 3
        %1161 = vperm.xlu0 %1160, %v853
        %v1162 = vpop.permute.xlu0 %1161
        %1164 = vset.pattern.permute.xlu0 3
        %1165 = vperm.xlu0 %1164, %v854
        %v1166 = vpop.permute.xlu0 %1165
        %1168 = vset.pattern.permute.xlu0 3
        %1169 = vperm.xlu0 %1168, %v855
        %v1170 = vpop.permute.xlu0 %1169
        %1172 = vset.pattern.permute.xlu0 3
        %1173 = vperm.xlu0 %1172, %v856
        %v1174 = vpop.permute.xlu0 %1173
        %1176 = vset.pattern.permute.xlu0 3
        %1177 = vperm.xlu0 %1176, %v857
        %v1178 = vpop.permute.xlu0 %1177
        %1180 = vset.pattern.permute.xlu0 3
        %1181 = vperm.xlu0 %1180, %v858
        %v1182 = vpop.permute.xlu0 %1181
        %1184 = vset.pattern.permute.xlu0 3
        %1185 = vperm.xlu0 %1184, %v859
        %v1186 = vpop.permute.xlu0 %1185
        %1188 = vset.pattern.permute.xlu0 3
        %1189 = vperm.xlu0 %1188, %v860
        %v1190 = vpop.permute.xlu0 %1189
        %1192 = vset.pattern.permute.xlu0 3
        %1193 = vperm.xlu0 %1192, %v861
        %v1194 = vpop.permute.xlu0 %1193
        %1196 = vset.pattern.permute.xlu0 3
        %1197 = vperm.xlu0 %1196, %v862
        %v1198 = vpop.permute.xlu0 %1197
        %1200 = vset.pattern.permute.xlu0 3
        %1201 = vperm.xlu0 %1200, %v863
        %v1202 = vpop.permute.xlu0 %1201
        %1204 = vset.pattern.permute.xlu0 3
        %1205 = vperm.xlu0 %1204, %v864
        %v1206 = vpop.permute.xlu0 %1205
        %1208 = vset.pattern.permute.xlu0 3
        %1209 = vperm.xlu0 %1208, %v865
        %v1210 = vpop.permute.xlu0 %1209
        %1212 = vset.pattern.permute.xlu0 3
        %1213 = vperm.xlu0 %1212, %v866
        %v1214 = vpop.permute.xlu0 %1213
        %1216 = vset.pattern.permute.xlu0 3
        %1217 = vperm.xlu0 %1216, %v867
        %v1218 = vpop.permute.xlu0 %1217
        %v1220 = vmul.f32 %v1158, %v585
        %v1221 = vmul.f32 %v1162, %v585
        %v1222 = vmul.f32 %v1166, %v585
        %v1223 = vmul.f32 %v1170, %v585
        %v1224 = vmul.f32 %v1174, %v585
        %v1225 = vmul.f32 %v1178, %v585
        %v1226 = vmul.f32 %v1182, %v585
        %v1227 = vmul.f32 %v1186, %v585
        %v1228 = vmul.f32 %v1190, %v585
        %v1229 = vmul.f32 %v1194, %v585
        %v1230 = vmul.f32 %v1198, %v585
        %v1231 = vmul.f32 %v1202, %v585
        %v1232 = vmul.f32 %v1206, %v585
        %v1233 = vmul.f32 %v1210, %v585
        %v1234 = vmul.f32 %v1214, %v585
        %v1235 = vmul.f32 %v1218, %v585
        %v1236 = vadd.f32 %v1140, %v1220
        %v1237 = vadd.f32 %v1141, %v1221
        %v1238 = vadd.f32 %v1142, %v1222
        %v1239 = vadd.f32 %v1143, %v1223
        %v1240 = vadd.f32 %v1144, %v1224
        %v1241 = vadd.f32 %v1145, %v1225
        %v1242 = vadd.f32 %v1146, %v1226
        %v1243 = vadd.f32 %v1147, %v1227
        %v1244 = vadd.f32 %v1148, %v1228
        %v1245 = vadd.f32 %v1149, %v1229
        %v1246 = vadd.f32 %v1150, %v1230
        %v1247 = vadd.f32 %v1151, %v1231
        %v1248 = vadd.f32 %v1152, %v1232
        %v1249 = vadd.f32 %v1153, %v1233
        %v1250 = vadd.f32 %v1154, %v1234
        %v1251 = vadd.f32 %v1155, %v1235
        %1252 = vset.pattern.permute.xlu0 4
        %1253 = vperm.xlu0 %1252, %v852
        %v1254 = vpop.permute.xlu0 %1253
        %1256 = vset.pattern.permute.xlu0 4
        %1257 = vperm.xlu0 %1256, %v853
        %v1258 = vpop.permute.xlu0 %1257
        %1260 = vset.pattern.permute.xlu0 4
        %1261 = vperm.xlu0 %1260, %v854
        %v1262 = vpop.permute.xlu0 %1261
        %1264 = vset.pattern.permute.xlu0 4
        %1265 = vperm.xlu0 %1264, %v855
        %v1266 = vpop.permute.xlu0 %1265
        %1268 = vset.pattern.permute.xlu0 4
        %1269 = vperm.xlu0 %1268, %v856
        %v1270 = vpop.permute.xlu0 %1269
        %1272 = vset.pattern.permute.xlu0 4
        %1273 = vperm.xlu0 %1272, %v857
        %v1274 = vpop.permute.xlu0 %1273
        %1276 = vset.pattern.permute.xlu0 4
        %1277 = vperm.xlu0 %1276, %v858
        %v1278 = vpop.permute.xlu0 %1277
        %1280 = vset.pattern.permute.xlu0 4
        %1281 = vperm.xlu0 %1280, %v859
        %v1282 = vpop.permute.xlu0 %1281
        %1284 = vset.pattern.permute.xlu0 4
        %1285 = vperm.xlu0 %1284, %v860
        %v1286 = vpop.permute.xlu0 %1285
        %1288 = vset.pattern.permute.xlu0 4
        %1289 = vperm.xlu0 %1288, %v861
        %v1290 = vpop.permute.xlu0 %1289
        %1292 = vset.pattern.permute.xlu0 4
        %1293 = vperm.xlu0 %1292, %v862
        %v1294 = vpop.permute.xlu0 %1293
        %1296 = vset.pattern.permute.xlu0 4
        %1297 = vperm.xlu0 %1296, %v863
        %v1298 = vpop.permute.xlu0 %1297
        %1300 = vset.pattern.permute.xlu0 4
        %1301 = vperm.xlu0 %1300, %v864
        %v1302 = vpop.permute.xlu0 %1301
        %1304 = vset.pattern.permute.xlu0 4
        %1305 = vperm.xlu0 %1304, %v865
        %v1306 = vpop.permute.xlu0 %1305
        %1308 = vset.pattern.permute.xlu0 4
        %1309 = vperm.xlu0 %1308, %v866
        %v1310 = vpop.permute.xlu0 %1309
        %1312 = vset.pattern.permute.xlu0 4
        %1313 = vperm.xlu0 %1312, %v867
        %v1314 = vpop.permute.xlu0 %1313
        %v1316 = vmul.f32 %v1254, %v682
        %v1317 = vmul.f32 %v1258, %v682
        %v1318 = vmul.f32 %v1262, %v682
        %v1319 = vmul.f32 %v1266, %v682
        %v1320 = vmul.f32 %v1270, %v682
        %v1321 = vmul.f32 %v1274, %v682
        %v1322 = vmul.f32 %v1278, %v682
        %v1323 = vmul.f32 %v1282, %v682
        %v1324 = vmul.f32 %v1286, %v682
        %v1325 = vmul.f32 %v1290, %v682
        %v1326 = vmul.f32 %v1294, %v682
        %v1327 = vmul.f32 %v1298, %v682
        %v1328 = vmul.f32 %v1302, %v682
        %v1329 = vmul.f32 %v1306, %v682
        %v1330 = vmul.f32 %v1310, %v682
        %v1331 = vmul.f32 %v1314, %v682
        %v1332 = vadd.f32 %v1236, %v1316
        %v1333 = vadd.f32 %v1237, %v1317
        %v1334 = vadd.f32 %v1238, %v1318
        %v1335 = vadd.f32 %v1239, %v1319
        %v1336 = vadd.f32 %v1240, %v1320
        %v1337 = vadd.f32 %v1241, %v1321
        %v1338 = vadd.f32 %v1242, %v1322
        %v1339 = vadd.f32 %v1243, %v1323
        %v1340 = vadd.f32 %v1244, %v1324
        %v1341 = vadd.f32 %v1245, %v1325
        %v1342 = vadd.f32 %v1246, %v1326
        %v1343 = vadd.f32 %v1247, %v1327
        %v1344 = vadd.f32 %v1248, %v1328
        %v1345 = vadd.f32 %v1249, %v1329
        %v1346 = vadd.f32 %v1250, %v1330
        %v1347 = vadd.f32 %v1251, %v1331
        %v1348 = vmax.f32 %v1332, 0.0
        %v1349 = vmax.f32 %v1333, 0.0
        %v1350 = vmax.f32 %v1334, 0.0
        %v1351 = vmax.f32 %v1335, 0.0
        %v1352 = vmax.f32 %v1336, 0.0
        %v1353 = vmax.f32 %v1337, 0.0
        %v1354 = vmax.f32 %v1338, 0.0
        %v1355 = vmax.f32 %v1339, 0.0
        %v1356 = vmax.f32 %v1340, 0.0
        %v1357 = vmax.f32 %v1341, 0.0
        %v1358 = vmax.f32 %v1342, 0.0
        %v1359 = vmax.f32 %v1343, 0.0
        %v1360 = vmax.f32 %v1344, 0.0
        %v1361 = vmax.f32 %v1345, 0.0
        %v1362 = vmax.f32 %v1346, 0.0
        %v1363 = vmax.f32 %v1347, 0.0
        %v1364 = vpack.c.bf16 %v1349, %v1348
        %v1365 = vpack.c.bf16 %v1351, %v1350
        %v1366 = vpack.c.bf16 %v1353, %v1352
        %v1367 = vpack.c.bf16 %v1355, %v1354
        %v1368 = vpack.c.bf16 %v1357, %v1356
        %v1369 = vpack.c.bf16 %v1359, %v1358
        %v1370 = vpack.c.bf16 %v1361, %v1360
        %v1371 = vpack.c.bf16 %v1363, %v1362
        %1372 = vmatpush.bf16.msra.mxu0 %v778
        %1373 = vmatpush.bf16.msra.mxu0 %v777
        %1374 = vmatpush.bf16.msra.mxu0 %v776
        %1375 = vmatpush.bf16.msra.mxu0 %v775
        %1376 = vmatpush.bf16.msra.mxu0 %v774
        %1377 = vmatpush.bf16.msra.mxu0 %v773
        %1378 = vmatpush.bf16.msra.mxu0 %v772
        %1379 = vmatpush.bf16.msra.mxu0 %v771
        %1380 = vmatmul.bf16.gmra.mxu0 %v1364
        %v1381 = vpop.f32.mrf.mxu0
        %v1382 = vadd.f32 0.0, %v1381
        %v1383 = vpop.f32.mrf.mxu0
        %v1384 = vadd.f32 0.0, %v1383
        %1385 = vmatmul.bf16.gmra.mxu0 %v1365
        %v1386 = vpop.f32.mrf.mxu0
        %v1387 = vadd.f32 0.0, %v1386
        %v1388 = vpop.f32.mrf.mxu0
        %v1389 = vadd.f32 0.0, %v1388
        %1390 = vmatmul.bf16.gmra.mxu0 %v1366
        %v1391 = vpop.f32.mrf.mxu0
        %v1392 = vadd.f32 0.0, %v1391
        %v1393 = vpop.f32.mrf.mxu0
        %v1394 = vadd.f32 0.0, %v1393
        %1395 = vmatmul.bf16.gmra.mxu0 %v1367
        %v1396 = vpop.f32.mrf.mxu0
        %v1397 = vadd.f32 0.0, %v1396
        %v1398 = vpop.f32.mrf.mxu0
        %v1399 = vadd.f32 0.0, %v1398
        %1400 = vmatmul.bf16.gmra.mxu0 %v1368
        %v1401 = vpop.f32.mrf.mxu0
        %v1402 = vadd.f32 0.0, %v1401
        %v1403 = vpop.f32.mrf.mxu0
        %v1404 = vadd.f32 0.0, %v1403
        %1405 = vmatmul.bf16.gmra.mxu0 %v1369
        %v1406 = vpop.f32.mrf.mxu0
        %v1407 = vadd.f32 0.0, %v1406
        %v1408 = vpop.f32.mrf.mxu0
        %v1409 = vadd.f32 0.0, %v1408
        %1410 = vmatmul.bf16.gmra.mxu0 %v1370
        %v1411 = vpop.f32.mrf.mxu0
        %v1412 = vadd.f32 0.0, %v1411
        %v1413 = vpop.f32.mrf.mxu0
        %v1414 = vadd.f32 0.0, %v1413
        %1415 = vmatmul.bf16.gmra.mxu0 %v1371
        %v1416 = vpop.f32.mrf.mxu0
        %v1417 = vadd.f32 0.0, %v1416
        %v1418 = vpop.f32.mrf.mxu0
        %v1419 = vadd.f32 0.0, %v1418
        %1420 = vdwg.mxu0
        %1421 = vst [vmem:[#allocation2 + $0x80] sm:$0xff] %v1382
        %1422 = vst [vmem:[#allocation2 + $0x88] sm:$0xff] %v1384
        %1423 = vst [vmem:[#allocation2 + $0x90] sm:$0xff] %v1387
        %1424 = vst [vmem:[#allocation2 + $0x98] sm:$0xff] %v1389
        %1425 = vst [vmem:[#allocation2 + $0xa0] sm:$0xff] %v1392
        %1426 = vst [vmem:[#allocation2 + $0xa8] sm:$0xff] %v1394
        %1427 = vst [vmem:[#allocation2 + $0xb0] sm:$0xff] %v1397
        %1428 = vst [vmem:[#allocation2 + $0xb8] sm:$0xff] %v1399
        %1429 = vst [vmem:[#allocation2 + $0xc0] sm:$0xff] %v1402
        %1430 = vst [vmem:[#allocation2 + $0xc8] sm:$0xff] %v1404
        %1431 = vst [vmem:[#allocation2 + $0xd0] sm:$0xff] %v1407
        %1432 = vst [vmem:[#allocation2 + $0xd8] sm:$0xff] %v1409
        %1433 = vst [vmem:[#allocation2 + $0xe0] sm:$0xff] %v1412
        %1434 = vst [vmem:[#allocation2 + $0xe8] sm:$0xff] %v1414
        %1435 = vst [vmem:[#allocation2 + $0xf0] sm:$0xff] %v1417
        %1436 = vst [vmem:[#allocation2 + $0xf8] sm:$0xff] %v1419
        %v1437 = vld [vmem:[%s195 + $0x100] sm:$0xff]
        %v1438 = vld [vmem:[%s195 + $0x108] sm:$0xff]
        %v1439 = vld [vmem:[%s195 + $0x110] sm:$0xff]
        %v1440 = vld [vmem:[%s195 + $0x118] sm:$0xff]
        %v1441 = vld [vmem:[%s195 + $0x120] sm:$0xff]
        %v1442 = vld [vmem:[%s195 + $0x128] sm:$0xff]
        %v1443 = vld [vmem:[%s195 + $0x130] sm:$0xff]
        %v1444 = vld [vmem:[%s195 + $0x138] sm:$0xff]
        %v1445 = vld [vmem:[%s195 + $0x140] sm:$0xff]
        %v1446 = vld [vmem:[%s195 + $0x148] sm:$0xff]
        %v1447 = vld [vmem:[%s195 + $0x150] sm:$0xff]
        %v1448 = vld [vmem:[%s195 + $0x158] sm:$0xff]
        %v1449 = vld [vmem:[%s195 + $0x160] sm:$0xff]
        %v1450 = vld [vmem:[%s195 + $0x168] sm:$0xff]
        %v1451 = vld [vmem:[%s195 + $0x170] sm:$0xff]
        %v1452 = vld [vmem:[%s195 + $0x178] sm:$0xff]
        %1454 = vset.pattern.permute.xlu0 0
        %1455 = vperm.xlu0 %1454, %v1437
        %v1456 = vpop.permute.xlu0 %1455
        %1459 = vset.pattern.permute.xlu0 0
        %1460 = vperm.xlu0 %1459, %v1438
        %v1461 = vpop.permute.xlu0 %1460
        %1464 = vset.pattern.permute.xlu0 0
        %1465 = vperm.xlu0 %1464, %v1439
        %v1466 = vpop.permute.xlu0 %1465
        %1469 = vset.pattern.permute.xlu0 0
        %1470 = vperm.xlu0 %1469, %v1440
        %v1471 = vpop.permute.xlu0 %1470
        %1474 = vset.pattern.permute.xlu0 0
        %1475 = vperm.xlu0 %1474, %v1441
        %v1476 = vpop.permute.xlu0 %1475
        %1479 = vset.pattern.permute.xlu0 0
        %1480 = vperm.xlu0 %1479, %v1442
        %v1481 = vpop.permute.xlu0 %1480
        %1484 = vset.pattern.permute.xlu0 0
        %1485 = vperm.xlu0 %1484, %v1443
        %v1486 = vpop.permute.xlu0 %1485
        %1489 = vset.pattern.permute.xlu0 0
        %1490 = vperm.xlu0 %1489, %v1444
        %v1491 = vpop.permute.xlu0 %1490
        %1494 = vset.pattern.permute.xlu0 0
        %1495 = vperm.xlu0 %1494, %v1445
        %v1496 = vpop.permute.xlu0 %1495
        %1499 = vset.pattern.permute.xlu0 0
        %1500 = vperm.xlu0 %1499, %v1446
        %v1501 = vpop.permute.xlu0 %1500
        %1504 = vset.pattern.permute.xlu0 0
        %1505 = vperm.xlu0 %1504, %v1447
        %v1506 = vpop.permute.xlu0 %1505
        %1509 = vset.pattern.permute.xlu0 0
        %1510 = vperm.xlu0 %1509, %v1448
        %v1511 = vpop.permute.xlu0 %1510
        %1514 = vset.pattern.permute.xlu0 0
        %1515 = vperm.xlu0 %1514, %v1449
        %v1516 = vpop.permute.xlu0 %1515
        %1519 = vset.pattern.permute.xlu0 0
        %1520 = vperm.xlu0 %1519, %v1450
        %v1521 = vpop.permute.xlu0 %1520
        %1524 = vset.pattern.permute.xlu0 0
        %1525 = vperm.xlu0 %1524, %v1451
        %v1526 = vpop.permute.xlu0 %1525
        %1529 = vset.pattern.permute.xlu0 0
        %1530 = vperm.xlu0 %1529, %v1452
        %v1531 = vpop.permute.xlu0 %1530
        %v1533 = vmul.f32 %v1456, %v310
        %v1534 = vmul.f32 %v1461, %v310
        %v1535 = vmul.f32 %v1466, %v310
        %v1536 = vmul.f32 %v1471, %v310
        %v1537 = vmul.f32 %v1476, %v310
        %v1538 = vmul.f32 %v1481, %v310
        %v1539 = vmul.f32 %v1486, %v310
        %v1540 = vmul.f32 %v1491, %v310
        %v1541 = vmul.f32 %v1496, %v310
        %v1542 = vmul.f32 %v1501, %v310
        %v1543 = vmul.f32 %v1506, %v310
        %v1544 = vmul.f32 %v1511, %v310
        %v1545 = vmul.f32 %v1516, %v310
        %v1546 = vmul.f32 %v1521, %v310
        %v1547 = vmul.f32 %v1526, %v310
        %v1548 = vmul.f32 %v1531, %v310
        %1549 = vset.pattern.permute.xlu0 1
        %1550 = vperm.xlu0 %1549, %v1437
        %v1551 = vpop.permute.xlu0 %1550
        %1553 = vset.pattern.permute.xlu0 1
        %1554 = vperm.xlu0 %1553, %v1438
        %v1555 = vpop.permute.xlu0 %1554
        %1557 = vset.pattern.permute.xlu0 1
        %1558 = vperm.xlu0 %1557, %v1439
        %v1559 = vpop.permute.xlu0 %1558
        %1561 = vset.pattern.permute.xlu0 1
        %1562 = vperm.xlu0 %1561, %v1440
        %v1563 = vpop.permute.xlu0 %1562
        %1565 = vset.pattern.permute.xlu0 1
        %1566 = vperm.xlu0 %1565, %v1441
        %v1567 = vpop.permute.xlu0 %1566
        %1569 = vset.pattern.permute.xlu0 1
        %1570 = vperm.xlu0 %1569, %v1442
        %v1571 = vpop.permute.xlu0 %1570
        %1573 = vset.pattern.permute.xlu0 1
        %1574 = vperm.xlu0 %1573, %v1443
        %v1575 = vpop.permute.xlu0 %1574
        %1577 = vset.pattern.permute.xlu0 1
        %1578 = vperm.xlu0 %1577, %v1444
        %v1579 = vpop.permute.xlu0 %1578
        %1581 = vset.pattern.permute.xlu0 1
        %1582 = vperm.xlu0 %1581, %v1445
        %v1583 = vpop.permute.xlu0 %1582
        %1585 = vset.pattern.permute.xlu0 1
        %1586 = vperm.xlu0 %1585, %v1446
        %v1587 = vpop.permute.xlu0 %1586
        %1589 = vset.pattern.permute.xlu0 1
        %1590 = vperm.xlu0 %1589, %v1447
        %v1591 = vpop.permute.xlu0 %1590
        %1593 = vset.pattern.permute.xlu0 1
        %1594 = vperm.xlu0 %1593, %v1448
        %v1595 = vpop.permute.xlu0 %1594
        %1597 = vset.pattern.permute.xlu0 1
        %1598 = vperm.xlu0 %1597, %v1449
        %v1599 = vpop.permute.xlu0 %1598
        %1601 = vset.pattern.permute.xlu0 1
        %1602 = vperm.xlu0 %1601, %v1450
        %v1603 = vpop.permute.xlu0 %1602
        %1605 = vset.pattern.permute.xlu0 1
        %1606 = vperm.xlu0 %1605, %v1451
        %v1607 = vpop.permute.xlu0 %1606
        %1609 = vset.pattern.permute.xlu0 1
        %1610 = vperm.xlu0 %1609, %v1452
        %v1611 = vpop.permute.xlu0 %1610
        %v1613 = vmul.f32 %v1551, %v391
        %v1614 = vmul.f32 %v1555, %v391
        %v1615 = vmul.f32 %v1559, %v391
        %v1616 = vmul.f32 %v1563, %v391
        %v1617 = vmul.f32 %v1567, %v391
        %v1618 = vmul.f32 %v1571, %v391
        %v1619 = vmul.f32 %v1575, %v391
        %v1620 = vmul.f32 %v1579, %v391
        %v1621 = vmul.f32 %v1583, %v391
        %v1622 = vmul.f32 %v1587, %v391
        %v1623 = vmul.f32 %v1591, %v391
        %v1624 = vmul.f32 %v1595, %v391
        %v1625 = vmul.f32 %v1599, %v391
        %v1626 = vmul.f32 %v1603, %v391
        %v1627 = vmul.f32 %v1607, %v391
        %v1628 = vmul.f32 %v1611, %v391
        %v1629 = vadd.f32 %v1533, %v1613
        %v1630 = vadd.f32 %v1534, %v1614
        %v1631 = vadd.f32 %v1535, %v1615
        %v1632 = vadd.f32 %v1536, %v1616
        %v1633 = vadd.f32 %v1537, %v1617
        %v1634 = vadd.f32 %v1538, %v1618
        %v1635 = vadd.f32 %v1539, %v1619
        %v1636 = vadd.f32 %v1540, %v1620
        %v1637 = vadd.f32 %v1541, %v1621
        %v1638 = vadd.f32 %v1542, %v1622
        %v1639 = vadd.f32 %v1543, %v1623
        %v1640 = vadd.f32 %v1544, %v1624
        %v1641 = vadd.f32 %v1545, %v1625
        %v1642 = vadd.f32 %v1546, %v1626
        %v1643 = vadd.f32 %v1547, %v1627
        %v1644 = vadd.f32 %v1548, %v1628
        %1645 = vset.pattern.permute.xlu0 2
        %1646 = vperm.xlu0 %1645, %v1437
        %v1647 = vpop.permute.xlu0 %1646
        %1649 = vset.pattern.permute.xlu0 2
        %1650 = vperm.xlu0 %1649, %v1438
        %v1651 = vpop.permute.xlu0 %1650
        %1653 = vset.pattern.permute.xlu0 2
        %1654 = vperm.xlu0 %1653, %v1439
        %v1655 = vpop.permute.xlu0 %1654
        %1657 = vset.pattern.permute.xlu0 2
        %1658 = vperm.xlu0 %1657, %v1440
        %v1659 = vpop.permute.xlu0 %1658
        %1661 = vset.pattern.permute.xlu0 2
        %1662 = vperm.xlu0 %1661, %v1441
        %v1663 = vpop.permute.xlu0 %1662
        %1665 = vset.pattern.permute.xlu0 2
        %1666 = vperm.xlu0 %1665, %v1442
        %v1667 = vpop.permute.xlu0 %1666
        %1669 = vset.pattern.permute.xlu0 2
        %1670 = vperm.xlu0 %1669, %v1443
        %v1671 = vpop.permute.xlu0 %1670
        %1673 = vset.pattern.permute.xlu0 2
        %1674 = vperm.xlu0 %1673, %v1444
        %v1675 = vpop.permute.xlu0 %1674
        %1677 = vset.pattern.permute.xlu0 2
        %1678 = vperm.xlu0 %1677, %v1445
        %v1679 = vpop.permute.xlu0 %1678
        %1681 = vset.pattern.permute.xlu0 2
        %1682 = vperm.xlu0 %1681, %v1446
        %v1683 = vpop.permute.xlu0 %1682
        %1685 = vset.pattern.permute.xlu0 2
        %1686 = vperm.xlu0 %1685, %v1447
        %v1687 = vpop.permute.xlu0 %1686
        %1689 = vset.pattern.permute.xlu0 2
        %1690 = vperm.xlu0 %1689, %v1448
        %v1691 = vpop.permute.xlu0 %1690
        %1693 = vset.pattern.permute.xlu0 2
        %1694 = vperm.xlu0 %1693, %v1449
        %v1695 = vpop.permute.xlu0 %1694
        %1697 = vset.pattern.permute.xlu0 2
        %1698 = vperm.xlu0 %1697, %v1450
        %v1699 = vpop.permute.xlu0 %1698
        %1701 = vset.pattern.permute.xlu0 2
        %1702 = vperm.xlu0 %1701, %v1451
        %v1703 = vpop.permute.xlu0 %1702
        %1705 = vset.pattern.permute.xlu0 2
        %1706 = vperm.xlu0 %1705, %v1452
        %v1707 = vpop.permute.xlu0 %1706
        %v1709 = vmul.f32 %v1647, %v488
        %v1710 = vmul.f32 %v1651, %v488
        %v1711 = vmul.f32 %v1655, %v488
        %v1712 = vmul.f32 %v1659, %v488
        %v1713 = vmul.f32 %v1663, %v488
        %v1714 = vmul.f32 %v1667, %v488
        %v1715 = vmul.f32 %v1671, %v488
        %v1716 = vmul.f32 %v1675, %v488
        %v1717 = vmul.f32 %v1679, %v488
        %v1718 = vmul.f32 %v1683, %v488
        %v1719 = vmul.f32 %v1687, %v488
        %v1720 = vmul.f32 %v1691, %v488
        %v1721 = vmul.f32 %v1695, %v488
        %v1722 = vmul.f32 %v1699, %v488
        %v1723 = vmul.f32 %v1703, %v488
        %v1724 = vmul.f32 %v1707, %v488
        %v1725 = vadd.f32 %v1629, %v1709
        %v1726 = vadd.f32 %v1630, %v1710
        %v1727 = vadd.f32 %v1631, %v1711
        %v1728 = vadd.f32 %v1632, %v1712
        %v1729 = vadd.f32 %v1633, %v1713
        %v1730 = vadd.f32 %v1634, %v1714
        %v1731 = vadd.f32 %v1635, %v1715
        %v1732 = vadd.f32 %v1636, %v1716
        %v1733 = vadd.f32 %v1637, %v1717
        %v1734 = vadd.f32 %v1638, %v1718
        %v1735 = vadd.f32 %v1639, %v1719
        %v1736 = vadd.f32 %v1640, %v1720
        %v1737 = vadd.f32 %v1641, %v1721
        %v1738 = vadd.f32 %v1642, %v1722
        %v1739 = vadd.f32 %v1643, %v1723
        %v1740 = vadd.f32 %v1644, %v1724
        %1741 = vset.pattern.permute.xlu0 3
        %1742 = vperm.xlu0 %1741, %v1437
        %v1743 = vpop.permute.xlu0 %1742
        %1745 = vset.pattern.permute.xlu0 3
        %1746 = vperm.xlu0 %1745, %v1438
        %v1747 = vpop.permute.xlu0 %1746
        %1749 = vset.pattern.permute.xlu0 3
        %1750 = vperm.xlu0 %1749, %v1439
        %v1751 = vpop.permute.xlu0 %1750
        %1753 = vset.pattern.permute.xlu0 3
        %1754 = vperm.xlu0 %1753, %v1440
        %v1755 = vpop.permute.xlu0 %1754
        %1757 = vset.pattern.permute.xlu0 3
        %1758 = vperm.xlu0 %1757, %v1441
        %v1759 = vpop.permute.xlu0 %1758
        %1761 = vset.pattern.permute.xlu0 3
        %1762 = vperm.xlu0 %1761, %v1442
        %v1763 = vpop.permute.xlu0 %1762
        %1765 = vset.pattern.permute.xlu0 3
        %1766 = vperm.xlu0 %1765, %v1443
        %v1767 = vpop.permute.xlu0 %1766
        %1769 = vset.pattern.permute.xlu0 3
        %1770 = vperm.xlu0 %1769, %v1444
        %v1771 = vpop.permute.xlu0 %1770
        %1773 = vset.pattern.permute.xlu0 3
        %1774 = vperm.xlu0 %1773, %v1445
        %v1775 = vpop.permute.xlu0 %1774
        %1777 = vset.pattern.permute.xlu0 3
        %1778 = vperm.xlu0 %1777, %v1446
        %v1779 = vpop.permute.xlu0 %1778
        %1781 = vset.pattern.permute.xlu0 3
        %1782 = vperm.xlu0 %1781, %v1447
        %v1783 = vpop.permute.xlu0 %1782
        %1785 = vset.pattern.permute.xlu0 3
        %1786 = vperm.xlu0 %1785, %v1448
        %v1787 = vpop.permute.xlu0 %1786
        %1789 = vset.pattern.permute.xlu0 3
        %1790 = vperm.xlu0 %1789, %v1449
        %v1791 = vpop.permute.xlu0 %1790
        %1793 = vset.pattern.permute.xlu0 3
        %1794 = vperm.xlu0 %1793, %v1450
        %v1795 = vpop.permute.xlu0 %1794
        %1797 = vset.pattern.permute.xlu0 3
        %1798 = vperm.xlu0 %1797, %v1451
        %v1799 = vpop.permute.xlu0 %1798
        %1801 = vset.pattern.permute.xlu0 3
        %1802 = vperm.xlu0 %1801, %v1452
        %v1803 = vpop.permute.xlu0 %1802
        %v1805 = vmul.f32 %v1743, %v585
        %v1806 = vmul.f32 %v1747, %v585
        %v1807 = vmul.f32 %v1751, %v585
        %v1808 = vmul.f32 %v1755, %v585
        %v1809 = vmul.f32 %v1759, %v585
        %v1810 = vmul.f32 %v1763, %v585
        %v1811 = vmul.f32 %v1767, %v585
        %v1812 = vmul.f32 %v1771, %v585
        %v1813 = vmul.f32 %v1775, %v585
        %v1814 = vmul.f32 %v1779, %v585
        %v1815 = vmul.f32 %v1783, %v585
        %v1816 = vmul.f32 %v1787, %v585
        %v1817 = vmul.f32 %v1791, %v585
        %v1818 = vmul.f32 %v1795, %v585
        %v1819 = vmul.f32 %v1799, %v585
        %v1820 = vmul.f32 %v1803, %v585
        %v1821 = vadd.f32 %v1725, %v1805
        %v1822 = vadd.f32 %v1726, %v1806
        %v1823 = vadd.f32 %v1727, %v1807
        %v1824 = vadd.f32 %v1728, %v1808
        %v1825 = vadd.f32 %v1729, %v1809
        %v1826 = vadd.f32 %v1730, %v1810
        %v1827 = vadd.f32 %v1731, %v1811
        %v1828 = vadd.f32 %v1732, %v1812
        %v1829 = vadd.f32 %v1733, %v1813
        %v1830 = vadd.f32 %v1734, %v1814
        %v1831 = vadd.f32 %v1735, %v1815
        %v1832 = vadd.f32 %v1736, %v1816
        %v1833 = vadd.f32 %v1737, %v1817
        %v1834 = vadd.f32 %v1738, %v1818
        %v1835 = vadd.f32 %v1739, %v1819
        %v1836 = vadd.f32 %v1740, %v1820
        %1837 = vset.pattern.permute.xlu0 4
        %1838 = vperm.xlu0 %1837, %v1437
        %v1839 = vpop.permute.xlu0 %1838
        %1841 = vset.pattern.permute.xlu0 4
        %1842 = vperm.xlu0 %1841, %v1438
        %v1843 = vpop.permute.xlu0 %1842
        %1845 = vset.pattern.permute.xlu0 4
        %1846 = vperm.xlu0 %1845, %v1439
        %v1847 = vpop.permute.xlu0 %1846
        %1849 = vset.pattern.permute.xlu0 4
        %1850 = vperm.xlu0 %1849, %v1440
        %v1851 = vpop.permute.xlu0 %1850
        %1853 = vset.pattern.permute.xlu0 4
        %1854 = vperm.xlu0 %1853, %v1441
        %v1855 = vpop.permute.xlu0 %1854
        %1857 = vset.pattern.permute.xlu0 4
        %1858 = vperm.xlu0 %1857, %v1442
        %v1859 = vpop.permute.xlu0 %1858
        %1861 = vset.pattern.permute.xlu0 4
        %1862 = vperm.xlu0 %1861, %v1443
        %v1863 = vpop.permute.xlu0 %1862
        %1865 = vset.pattern.permute.xlu0 4
        %1866 = vperm.xlu0 %1865, %v1444
        %v1867 = vpop.permute.xlu0 %1866
        %1869 = vset.pattern.permute.xlu0 4
        %1870 = vperm.xlu0 %1869, %v1445
        %v1871 = vpop.permute.xlu0 %1870
        %1873 = vset.pattern.permute.xlu0 4
        %1874 = vperm.xlu0 %1873, %v1446
        %v1875 = vpop.permute.xlu0 %1874
        %1877 = vset.pattern.permute.xlu0 4
        %1878 = vperm.xlu0 %1877, %v1447
        %v1879 = vpop.permute.xlu0 %1878
        %1881 = vset.pattern.permute.xlu0 4
        %1882 = vperm.xlu0 %1881, %v1448
        %v1883 = vpop.permute.xlu0 %1882
        %1885 = vset.pattern.permute.xlu0 4
        %1886 = vperm.xlu0 %1885, %v1449
        %v1887 = vpop.permute.xlu0 %1886
        %1889 = vset.pattern.permute.xlu0 4
        %1890 = vperm.xlu0 %1889, %v1450
        %v1891 = vpop.permute.xlu0 %1890
        %1893 = vset.pattern.permute.xlu0 4
        %1894 = vperm.xlu0 %1893, %v1451
        %v1895 = vpop.permute.xlu0 %1894
        %1897 = vset.pattern.permute.xlu0 4
        %1898 = vperm.xlu0 %1897, %v1452
        %v1899 = vpop.permute.xlu0 %1898
        %v1901 = vmul.f32 %v1839, %v682
        %v1902 = vmul.f32 %v1843, %v682
        %v1903 = vmul.f32 %v1847, %v682
        %v1904 = vmul.f32 %v1851, %v682
        %v1905 = vmul.f32 %v1855, %v682
        %v1906 = vmul.f32 %v1859, %v682
        %v1907 = vmul.f32 %v1863, %v682
        %v1908 = vmul.f32 %v1867, %v682
        %v1909 = vmul.f32 %v1871, %v682
        %v1910 = vmul.f32 %v1875, %v682
        %v1911 = vmul.f32 %v1879, %v682
        %v1912 = vmul.f32 %v1883, %v682
        %v1913 = vmul.f32 %v1887, %v682
        %v1914 = vmul.f32 %v1891, %v682
        %v1915 = vmul.f32 %v1895, %v682
        %v1916 = vmul.f32 %v1899, %v682
        %v1917 = vadd.f32 %v1821, %v1901
        %v1918 = vadd.f32 %v1822, %v1902
        %v1919 = vadd.f32 %v1823, %v1903
        %v1920 = vadd.f32 %v1824, %v1904
        %v1921 = vadd.f32 %v1825, %v1905
        %v1922 = vadd.f32 %v1826, %v1906
        %v1923 = vadd.f32 %v1827, %v1907
        %v1924 = vadd.f32 %v1828, %v1908
        %v1925 = vadd.f32 %v1829, %v1909
        %v1926 = vadd.f32 %v1830, %v1910
        %v1927 = vadd.f32 %v1831, %v1911
        %v1928 = vadd.f32 %v1832, %v1912
        %v1929 = vadd.f32 %v1833, %v1913
        %v1930 = vadd.f32 %v1834, %v1914
        %v1931 = vadd.f32 %v1835, %v1915
        %v1932 = vadd.f32 %v1836, %v1916
        %v1933 = vmax.f32 %v1917, 0.0
        %v1934 = vmax.f32 %v1918, 0.0
        %v1935 = vmax.f32 %v1919, 0.0
        %v1936 = vmax.f32 %v1920, 0.0
        %v1937 = vmax.f32 %v1921, 0.0
        %v1938 = vmax.f32 %v1922, 0.0
        %v1939 = vmax.f32 %v1923, 0.0
        %v1940 = vmax.f32 %v1924, 0.0
        %v1941 = vmax.f32 %v1925, 0.0
        %v1942 = vmax.f32 %v1926, 0.0
        %v1943 = vmax.f32 %v1927, 0.0
        %v1944 = vmax.f32 %v1928, 0.0
        %v1945 = vmax.f32 %v1929, 0.0
        %v1946 = vmax.f32 %v1930, 0.0
        %v1947 = vmax.f32 %v1931, 0.0
        %v1948 = vmax.f32 %v1932, 0.0
        %v1949 = vpack.c.bf16 %v1934, %v1933
        %v1950 = vpack.c.bf16 %v1936, %v1935
        %v1951 = vpack.c.bf16 %v1938, %v1937
        %v1952 = vpack.c.bf16 %v1940, %v1939
        %v1953 = vpack.c.bf16 %v1942, %v1941
        %v1954 = vpack.c.bf16 %v1944, %v1943
        %v1955 = vpack.c.bf16 %v1946, %v1945
        %v1956 = vpack.c.bf16 %v1948, %v1947
        %1957 = vmatpush.bf16.msra.mxu0 %v778
        %1958 = vmatpush.bf16.msra.mxu0 %v777
        %1959 = vmatpush.bf16.msra.mxu0 %v776
        %1960 = vmatpush.bf16.msra.mxu0 %v775
        %1961 = vmatpush.bf16.msra.mxu0 %v774
        %1962 = vmatpush.bf16.msra.mxu0 %v773
        %1963 = vmatpush.bf16.msra.mxu0 %v772
        %1964 = vmatpush.bf16.msra.mxu0 %v771
        %1965 = vmatmul.bf16.gmra.mxu0 %v1949
        %v1966 = vpop.f32.mrf.mxu0
        %v1967 = vadd.f32 0.0, %v1966
        %v1968 = vpop.f32.mrf.mxu0
        %v1969 = vadd.f32 0.0, %v1968
        %1970 = vmatmul.bf16.gmra.mxu0 %v1950
        %v1971 = vpop.f32.mrf.mxu0
        %v1972 = vadd.f32 0.0, %v1971
        %v1973 = vpop.f32.mrf.mxu0
        %v1974 = vadd.f32 0.0, %v1973
        %1975 = vmatmul.bf16.gmra.mxu0 %v1951
        %v1976 = vpop.f32.mrf.mxu0
        %v1977 = vadd.f32 0.0, %v1976
        %v1978 = vpop.f32.mrf.mxu0
        %v1979 = vadd.f32 0.0, %v1978
        %1980 = vmatmul.bf16.gmra.mxu0 %v1952
        %v1981 = vpop.f32.mrf.mxu0
        %v1982 = vadd.f32 0.0, %v1981
        %v1983 = vpop.f32.mrf.mxu0
        %v1984 = vadd.f32 0.0, %v1983
        %1985 = vmatmul.bf16.gmra.mxu0 %v1953
        %v1986 = vpop.f32.mrf.mxu0
        %v1987 = vadd.f32 0.0, %v1986
        %v1988 = vpop.f32.mrf.mxu0
        %v1989 = vadd.f32 0.0, %v1988
        %1990 = vmatmul.bf16.gmra.mxu0 %v1954
        %v1991 = vpop.f32.mrf.mxu0
        %v1992 = vadd.f32 0.0, %v1991
        %v1993 = vpop.f32.mrf.mxu0
        %v1994 = vadd.f32 0.0, %v1993
        %1995 = vmatmul.bf16.gmra.mxu0 %v1955
        %v1996 = vpop.f32.mrf.mxu0
        %v1997 = vadd.f32 0.0, %v1996
        %v1998 = vpop.f32.mrf.mxu0
        %v1999 = vadd.f32 0.0, %v1998
        %2000 = vmatmul.bf16.gmra.mxu0 %v1956
        %v2001 = vpop.f32.mrf.mxu0
        %v2002 = vadd.f32 0.0, %v2001
        %v2003 = vpop.f32.mrf.mxu0
        %v2004 = vadd.f32 0.0, %v2003
        %2005 = vdwg.mxu0
        %2006 = vst [vmem:[#allocation2 + $0x100] sm:$0xff] %v1967
        %2007 = vst [vmem:[#allocation2 + $0x108] sm:$0xff] %v1969
        %2008 = vst [vmem:[#allocation2 + $0x110] sm:$0xff] %v1972
        %2009 = vst [vmem:[#allocation2 + $0x118] sm:$0xff] %v1974
        %2010 = vst [vmem:[#allocation2 + $0x120] sm:$0xff] %v1977
        %2011 = vst [vmem:[#allocation2 + $0x128] sm:$0xff] %v1979
        %2012 = vst [vmem:[#allocation2 + $0x130] sm:$0xff] %v1982
        %2013 = vst [vmem:[#allocation2 + $0x138] sm:$0xff] %v1984
        %2014 = vst [vmem:[#allocation2 + $0x140] sm:$0xff] %v1987
        %2015 = vst [vmem:[#allocation2 + $0x148] sm:$0xff] %v1989
        %2016 = vst [vmem:[#allocation2 + $0x150] sm:$0xff] %v1992
        %2017 = vst [vmem:[#allocation2 + $0x158] sm:$0xff] %v1994
        %2018 = vst [vmem:[#allocation2 + $0x160] sm:$0xff] %v1997
        %2019 = vst [vmem:[#allocation2 + $0x168] sm:$0xff] %v1999
        %2020 = vst [vmem:[#allocation2 + $0x170] sm:$0xff] %v2002
        %2021 = vst [vmem:[#allocation2 + $0x178] sm:$0xff] %v2004
        %v2022 = vld [vmem:[%s195 + $0x180] sm:$0xff]
        %v2023 = vld [vmem:[%s195 + $0x188] sm:$0xff]
        %v2024 = vld [vmem:[%s195 + $0x190] sm:$0xff]
        %v2025 = vld [vmem:[%s195 + $0x198] sm:$0xff]
        %v2026 = vld [vmem:[%s195 + $0x1a0] sm:$0xff]
        %v2027 = vld [vmem:[%s195 + $0x1a8] sm:$0xff]
        %v2028 = vld [vmem:[%s195 + $0x1b0] sm:$0xff]
        %v2029 = vld [vmem:[%s195 + $0x1b8] sm:$0xff]
        %v2030 = vld [vmem:[%s195 + $0x1c0] sm:$0xff]
        %v2031 = vld [vmem:[%s195 + $0x1c8] sm:$0xff]
        %v2032 = vld [vmem:[%s195 + $0x1d0] sm:$0xff]
        %v2033 = vld [vmem:[%s195 + $0x1d8] sm:$0xff]
        %v2034 = vld [vmem:[%s195 + $0x1e0] sm:$0xff]
        %v2035 = vld [vmem:[%s195 + $0x1e8] sm:$0xff]
        %v2036 = vld [vmem:[%s195 + $0x1f0] sm:$0xff]
        %v2037 = vld [vmem:[%s195 + $0x1f8] sm:$0xff]
        %2039 = vset.pattern.permute.xlu0 0
        %2040 = vperm.xlu0 %2039, %v2022
        %v2041 = vpop.permute.xlu0 %2040
        %2044 = vset.pattern.permute.xlu0 0
        %2045 = vperm.xlu0 %2044, %v2023
        %v2046 = vpop.permute.xlu0 %2045
        %2049 = vset.pattern.permute.xlu0 0
        %2050 = vperm.xlu0 %2049, %v2024
        %v2051 = vpop.permute.xlu0 %2050
        %2054 = vset.pattern.permute.xlu0 0
        %2055 = vperm.xlu0 %2054, %v2025
        %v2056 = vpop.permute.xlu0 %2055
        %2059 = vset.pattern.permute.xlu0 0
        %2060 = vperm.xlu0 %2059, %v2026
        %v2061 = vpop.permute.xlu0 %2060
        %2064 = vset.pattern.permute.xlu0 0
        %2065 = vperm.xlu0 %2064, %v2027
        %v2066 = vpop.permute.xlu0 %2065
        %2069 = vset.pattern.permute.xlu0 0
        %2070 = vperm.xlu0 %2069, %v2028
        %v2071 = vpop.permute.xlu0 %2070
        %2074 = vset.pattern.permute.xlu0 0
        %2075 = vperm.xlu0 %2074, %v2029
        %v2076 = vpop.permute.xlu0 %2075
        %2079 = vset.pattern.permute.xlu0 0
        %2080 = vperm.xlu0 %2079, %v2030
        %v2081 = vpop.permute.xlu0 %2080
        %2084 = vset.pattern.permute.xlu0 0
        %2085 = vperm.xlu0 %2084, %v2031
        %v2086 = vpop.permute.xlu0 %2085
        %2089 = vset.pattern.permute.xlu0 0
        %2090 = vperm.xlu0 %2089, %v2032
        %v2091 = vpop.permute.xlu0 %2090
        %2094 = vset.pattern.permute.xlu0 0
        %2095 = vperm.xlu0 %2094, %v2033
        %v2096 = vpop.permute.xlu0 %2095
        %2099 = vset.pattern.permute.xlu0 0
        %2100 = vperm.xlu0 %2099, %v2034
        %v2101 = vpop.permute.xlu0 %2100
        %2104 = vset.pattern.permute.xlu0 0
        %2105 = vperm.xlu0 %2104, %v2035
        %v2106 = vpop.permute.xlu0 %2105
        %2109 = vset.pattern.permute.xlu0 0
        %2110 = vperm.xlu0 %2109, %v2036
        %v2111 = vpop.permute.xlu0 %2110
        %2114 = vset.pattern.permute.xlu0 0
        %2115 = vperm.xlu0 %2114, %v2037
        %v2116 = vpop.permute.xlu0 %2115
        %v2118 = vmul.f32 %v2041, %v310
        %v2119 = vmul.f32 %v2046, %v310
        %v2120 = vmul.f32 %v2051, %v310
        %v2121 = vmul.f32 %v2056, %v310
        %v2122 = vmul.f32 %v2061, %v310
        %v2123 = vmul.f32 %v2066, %v310
        %v2124 = vmul.f32 %v2071, %v310
        %v2125 = vmul.f32 %v2076, %v310
        %v2126 = vmul.f32 %v2081, %v310
        %v2127 = vmul.f32 %v2086, %v310
        %v2128 = vmul.f32 %v2091, %v310
        %v2129 = vmul.f32 %v2096, %v310
        %v2130 = vmul.f32 %v2101, %v310
        %v2131 = vmul.f32 %v2106, %v310
        %v2132 = vmul.f32 %v2111, %v310
        %v2133 = vmul.f32 %v2116, %v310
        %2134 = vset.pattern.permute.xlu0 1
        %2135 = vperm.xlu0 %2134, %v2022
        %v2136 = vpop.permute.xlu0 %2135
        %2138 = vset.pattern.permute.xlu0 1
        %2139 = vperm.xlu0 %2138, %v2023
        %v2140 = vpop.permute.xlu0 %2139
        %2142 = vset.pattern.permute.xlu0 1
        %2143 = vperm.xlu0 %2142, %v2024
        %v2144 = vpop.permute.xlu0 %2143
        %2146 = vset.pattern.permute.xlu0 1
        %2147 = vperm.xlu0 %2146, %v2025
        %v2148 = vpop.permute.xlu0 %2147
        %2150 = vset.pattern.permute.xlu0 1
        %2151 = vperm.xlu0 %2150, %v2026
        %v2152 = vpop.permute.xlu0 %2151
        %2154 = vset.pattern.permute.xlu0 1
        %2155 = vperm.xlu0 %2154, %v2027
        %v2156 = vpop.permute.xlu0 %2155
        %2158 = vset.pattern.permute.xlu0 1
        %2159 = vperm.xlu0 %2158, %v2028
        %v2160 = vpop.permute.xlu0 %2159
        %2162 = vset.pattern.permute.xlu0 1
        %2163 = vperm.xlu0 %2162, %v2029
        %v2164 = vpop.permute.xlu0 %2163
        %2166 = vset.pattern.permute.xlu0 1
        %2167 = vperm.xlu0 %2166, %v2030
        %v2168 = vpop.permute.xlu0 %2167
        %2170 = vset.pattern.permute.xlu0 1
        %2171 = vperm.xlu0 %2170, %v2031
        %v2172 = vpop.permute.xlu0 %2171
        %2174 = vset.pattern.permute.xlu0 1
        %2175 = vperm.xlu0 %2174, %v2032
        %v2176 = vpop.permute.xlu0 %2175
        %2178 = vset.pattern.permute.xlu0 1
        %2179 = vperm.xlu0 %2178, %v2033
        %v2180 = vpop.permute.xlu0 %2179
        %2182 = vset.pattern.permute.xlu0 1
        %2183 = vperm.xlu0 %2182, %v2034
        %v2184 = vpop.permute.xlu0 %2183
        %2186 = vset.pattern.permute.xlu0 1
        %2187 = vperm.xlu0 %2186, %v2035
        %v2188 = vpop.permute.xlu0 %2187
        %2190 = vset.pattern.permute.xlu0 1
        %2191 = vperm.xlu0 %2190, %v2036
        %v2192 = vpop.permute.xlu0 %2191
        %2194 = vset.pattern.permute.xlu0 1
        %2195 = vperm.xlu0 %2194, %v2037
        %v2196 = vpop.permute.xlu0 %2195
        %v2198 = vmul.f32 %v2136, %v391
        %v2199 = vmul.f32 %v2140, %v391
        %v2200 = vmul.f32 %v2144, %v391
        %v2201 = vmul.f32 %v2148, %v391
        %v2202 = vmul.f32 %v2152, %v391
        %v2203 = vmul.f32 %v2156, %v391
        %v2204 = vmul.f32 %v2160, %v391
        %v2205 = vmul.f32 %v2164, %v391
        %v2206 = vmul.f32 %v2168, %v391
        %v2207 = vmul.f32 %v2172, %v391
        %v2208 = vmul.f32 %v2176, %v391
        %v2209 = vmul.f32 %v2180, %v391
        %v2210 = vmul.f32 %v2184, %v391
        %v2211 = vmul.f32 %v2188, %v391
        %v2212 = vmul.f32 %v2192, %v391
        %v2213 = vmul.f32 %v2196, %v391
        %v2214 = vadd.f32 %v2118, %v2198
        %v2215 = vadd.f32 %v2119, %v2199
        %v2216 = vadd.f32 %v2120, %v2200
        %v2217 = vadd.f32 %v2121, %v2201
        %v2218 = vadd.f32 %v2122, %v2202
        %v2219 = vadd.f32 %v2123, %v2203
        %v2220 = vadd.f32 %v2124, %v2204
        %v2221 = vadd.f32 %v2125, %v2205
        %v2222 = vadd.f32 %v2126, %v2206
        %v2223 = vadd.f32 %v2127, %v2207
        %v2224 = vadd.f32 %v2128, %v2208
        %v2225 = vadd.f32 %v2129, %v2209
        %v2226 = vadd.f32 %v2130, %v2210
        %v2227 = vadd.f32 %v2131, %v2211
        %v2228 = vadd.f32 %v2132, %v2212
        %v2229 = vadd.f32 %v2133, %v2213
        %2230 = vset.pattern.permute.xlu0 2
        %2231 = vperm.xlu0 %2230, %v2022
        %v2232 = vpop.permute.xlu0 %2231
        %2234 = vset.pattern.permute.xlu0 2
        %2235 = vperm.xlu0 %2234, %v2023
        %v2236 = vpop.permute.xlu0 %2235
        %2238 = vset.pattern.permute.xlu0 2
        %2239 = vperm.xlu0 %2238, %v2024
        %v2240 = vpop.permute.xlu0 %2239
        %2242 = vset.pattern.permute.xlu0 2
        %2243 = vperm.xlu0 %2242, %v2025
        %v2244 = vpop.permute.xlu0 %2243
        %2246 = vset.pattern.permute.xlu0 2
        %2247 = vperm.xlu0 %2246, %v2026
        %v2248 = vpop.permute.xlu0 %2247
        %2250 = vset.pattern.permute.xlu0 2
        %2251 = vperm.xlu0 %2250, %v2027
        %v2252 = vpop.permute.xlu0 %2251
        %2254 = vset.pattern.permute.xlu0 2
        %2255 = vperm.xlu0 %2254, %v2028
        %v2256 = vpop.permute.xlu0 %2255
        %2258 = vset.pattern.permute.xlu0 2
        %2259 = vperm.xlu0 %2258, %v2029
        %v2260 = vpop.permute.xlu0 %2259
        %2262 = vset.pattern.permute.xlu0 2
        %2263 = vperm.xlu0 %2262, %v2030
        %v2264 = vpop.permute.xlu0 %2263
        %2266 = vset.pattern.permute.xlu0 2
        %2267 = vperm.xlu0 %2266, %v2031
        %v2268 = vpop.permute.xlu0 %2267
        %2270 = vset.pattern.permute.xlu0 2
        %2271 = vperm.xlu0 %2270, %v2032
        %v2272 = vpop.permute.xlu0 %2271
        %2274 = vset.pattern.permute.xlu0 2
        %2275 = vperm.xlu0 %2274, %v2033
        %v2276 = vpop.permute.xlu0 %2275
        %2278 = vset.pattern.permute.xlu0 2
        %2279 = vperm.xlu0 %2278, %v2034
        %v2280 = vpop.permute.xlu0 %2279
        %2282 = vset.pattern.permute.xlu0 2
        %2283 = vperm.xlu0 %2282, %v2035
        %v2284 = vpop.permute.xlu0 %2283
        %2286 = vset.pattern.permute.xlu0 2
        %2287 = vperm.xlu0 %2286, %v2036
        %v2288 = vpop.permute.xlu0 %2287
        %2290 = vset.pattern.permute.xlu0 2
        %2291 = vperm.xlu0 %2290, %v2037
        %v2292 = vpop.permute.xlu0 %2291
        %v2294 = vmul.f32 %v2232, %v488
        %v2295 = vmul.f32 %v2236, %v488
        %v2296 = vmul.f32 %v2240, %v488
        %v2297 = vmul.f32 %v2244, %v488
        %v2298 = vmul.f32 %v2248, %v488
        %v2299 = vmul.f32 %v2252, %v488
        %v2300 = vmul.f32 %v2256, %v488
        %v2301 = vmul.f32 %v2260, %v488
        %v2302 = vmul.f32 %v2264, %v488
        %v2303 = vmul.f32 %v2268, %v488
        %v2304 = vmul.f32 %v2272, %v488
        %v2305 = vmul.f32 %v2276, %v488
        %v2306 = vmul.f32 %v2280, %v488
        %v2307 = vmul.f32 %v2284, %v488
        %v2308 = vmul.f32 %v2288, %v488
        %v2309 = vmul.f32 %v2292, %v488
        %v2310 = vadd.f32 %v2214, %v2294
        %v2311 = vadd.f32 %v2215, %v2295
        %v2312 = vadd.f32 %v2216, %v2296
        %v2313 = vadd.f32 %v2217, %v2297
        %v2314 = vadd.f32 %v2218, %v2298
        %v2315 = vadd.f32 %v2219, %v2299
        %v2316 = vadd.f32 %v2220, %v2300
        %v2317 = vadd.f32 %v2221, %v2301
        %v2318 = vadd.f32 %v2222, %v2302
        %v2319 = vadd.f32 %v2223, %v2303
        %v2320 = vadd.f32 %v2224, %v2304
        %v2321 = vadd.f32 %v2225, %v2305
        %v2322 = vadd.f32 %v2226, %v2306
        %v2323 = vadd.f32 %v2227, %v2307
        %v2324 = vadd.f32 %v2228, %v2308
        %v2325 = vadd.f32 %v2229, %v2309
        %2326 = vset.pattern.permute.xlu0 3
        %2327 = vperm.xlu0 %2326, %v2022
        %v2328 = vpop.permute.xlu0 %2327
        %2330 = vset.pattern.permute.xlu0 3
        %2331 = vperm.xlu0 %2330, %v2023
        %v2332 = vpop.permute.xlu0 %2331
        %2334 = vset.pattern.permute.xlu0 3
        %2335 = vperm.xlu0 %2334, %v2024
        %v2336 = vpop.permute.xlu0 %2335
        %2338 = vset.pattern.permute.xlu0 3
        %2339 = vperm.xlu0 %2338, %v2025
        %v2340 = vpop.permute.xlu0 %2339
        %2342 = vset.pattern.permute.xlu0 3
        %2343 = vperm.xlu0 %2342, %v2026
        %v2344 = vpop.permute.xlu0 %2343
        %2346 = vset.pattern.permute.xlu0 3
        %2347 = vperm.xlu0 %2346, %v2027
        %v2348 = vpop.permute.xlu0 %2347
        %2350 = vset.pattern.permute.xlu0 3
        %2351 = vperm.xlu0 %2350, %v2028
        %v2352 = vpop.permute.xlu0 %2351
        %2354 = vset.pattern.permute.xlu0 3
        %2355 = vperm.xlu0 %2354, %v2029
        %v2356 = vpop.permute.xlu0 %2355
        %2358 = vset.pattern.permute.xlu0 3
        %2359 = vperm.xlu0 %2358, %v2030
        %v2360 = vpop.permute.xlu0 %2359
        %2362 = vset.pattern.permute.xlu0 3
        %2363 = vperm.xlu0 %2362, %v2031
        %v2364 = vpop.permute.xlu0 %2363
        %2366 = vset.pattern.permute.xlu0 3
        %2367 = vperm.xlu0 %2366, %v2032
        %v2368 = vpop.permute.xlu0 %2367
        %2370 = vset.pattern.permute.xlu0 3
        %2371 = vperm.xlu0 %2370, %v2033
        %v2372 = vpop.permute.xlu0 %2371
        %2374 = vset.pattern.permute.xlu0 3
        %2375 = vperm.xlu0 %2374, %v2034
        %v2376 = vpop.permute.xlu0 %2375
        %2378 = vset.pattern.permute.xlu0 3
        %2379 = vperm.xlu0 %2378, %v2035
        %v2380 = vpop.permute.xlu0 %2379
        %2382 = vset.pattern.permute.xlu0 3
        %2383 = vperm.xlu0 %2382, %v2036
        %v2384 = vpop.permute.xlu0 %2383
        %2386 = vset.pattern.permute.xlu0 3
        %2387 = vperm.xlu0 %2386, %v2037
        %v2388 = vpop.permute.xlu0 %2387
        %v2390 = vmul.f32 %v2328, %v585
        %v2391 = vmul.f32 %v2332, %v585
        %v2392 = vmul.f32 %v2336, %v585
        %v2393 = vmul.f32 %v2340, %v585
        %v2394 = vmul.f32 %v2344, %v585
        %v2395 = vmul.f32 %v2348, %v585
        %v2396 = vmul.f32 %v2352, %v585
        %v2397 = vmul.f32 %v2356, %v585
        %v2398 = vmul.f32 %v2360, %v585
        %v2399 = vmul.f32 %v2364, %v585
        %v2400 = vmul.f32 %v2368, %v585
        %v2401 = vmul.f32 %v2372, %v585
        %v2402 = vmul.f32 %v2376, %v585
        %v2403 = vmul.f32 %v2380, %v585
        %v2404 = vmul.f32 %v2384, %v585
        %v2405 = vmul.f32 %v2388, %v585
        %v2406 = vadd.f32 %v2310, %v2390
        %v2407 = vadd.f32 %v2311, %v2391
        %v2408 = vadd.f32 %v2312, %v2392
        %v2409 = vadd.f32 %v2313, %v2393
        %v2410 = vadd.f32 %v2314, %v2394
        %v2411 = vadd.f32 %v2315, %v2395
        %v2412 = vadd.f32 %v2316, %v2396
        %v2413 = vadd.f32 %v2317, %v2397
        %v2414 = vadd.f32 %v2318, %v2398
        %v2415 = vadd.f32 %v2319, %v2399
        %v2416 = vadd.f32 %v2320, %v2400
        %v2417 = vadd.f32 %v2321, %v2401
        %v2418 = vadd.f32 %v2322, %v2402
        %v2419 = vadd.f32 %v2323, %v2403
        %v2420 = vadd.f32 %v2324, %v2404
        %v2421 = vadd.f32 %v2325, %v2405
        %2422 = vset.pattern.permute.xlu0 4
        %2423 = vperm.xlu0 %2422, %v2022
        %v2424 = vpop.permute.xlu0 %2423
        %2426 = vset.pattern.permute.xlu0 4
        %2427 = vperm.xlu0 %2426, %v2023
        %v2428 = vpop.permute.xlu0 %2427
        %2430 = vset.pattern.permute.xlu0 4
        %2431 = vperm.xlu0 %2430, %v2024
        %v2432 = vpop.permute.xlu0 %2431
        %2434 = vset.pattern.permute.xlu0 4
        %2435 = vperm.xlu0 %2434, %v2025
        %v2436 = vpop.permute.xlu0 %2435
        %2438 = vset.pattern.permute.xlu0 4
        %2439 = vperm.xlu0 %2438, %v2026
        %v2440 = vpop.permute.xlu0 %2439
        %2442 = vset.pattern.permute.xlu0 4
        %2443 = vperm.xlu0 %2442, %v2027
        %v2444 = vpop.permute.xlu0 %2443
        %2446 = vset.pattern.permute.xlu0 4
        %2447 = vperm.xlu0 %2446, %v2028
        %v2448 = vpop.permute.xlu0 %2447
        %2450 = vset.pattern.permute.xlu0 4
        %2451 = vperm.xlu0 %2450, %v2029
        %v2452 = vpop.permute.xlu0 %2451
        %2454 = vset.pattern.permute.xlu0 4
        %2455 = vperm.xlu0 %2454, %v2030
        %v2456 = vpop.permute.xlu0 %2455
        %2458 = vset.pattern.permute.xlu0 4
        %2459 = vperm.xlu0 %2458, %v2031
        %v2460 = vpop.permute.xlu0 %2459
        %2462 = vset.pattern.permute.xlu0 4
        %2463 = vperm.xlu0 %2462, %v2032
        %v2464 = vpop.permute.xlu0 %2463
        %2466 = vset.pattern.permute.xlu0 4
        %2467 = vperm.xlu0 %2466, %v2033
        %v2468 = vpop.permute.xlu0 %2467
        %2470 = vset.pattern.permute.xlu0 4
        %2471 = vperm.xlu0 %2470, %v2034
        %v2472 = vpop.permute.xlu0 %2471
        %2474 = vset.pattern.permute.xlu0 4
        %2475 = vperm.xlu0 %2474, %v2035
        %v2476 = vpop.permute.xlu0 %2475
        %2478 = vset.pattern.permute.xlu0 4
        %2479 = vperm.xlu0 %2478, %v2036
        %v2480 = vpop.permute.xlu0 %2479
        %2482 = vset.pattern.permute.xlu0 4
        %2483 = vperm.xlu0 %2482, %v2037
        %v2484 = vpop.permute.xlu0 %2483
        %v2486 = vmul.f32 %v2424, %v682
        %v2487 = vmul.f32 %v2428, %v682
        %v2488 = vmul.f32 %v2432, %v682
        %v2489 = vmul.f32 %v2436, %v682
        %v2490 = vmul.f32 %v2440, %v682
        %v2491 = vmul.f32 %v2444, %v682
        %v2492 = vmul.f32 %v2448, %v682
        %v2493 = vmul.f32 %v2452, %v682
        %v2494 = vmul.f32 %v2456, %v682
        %v2495 = vmul.f32 %v2460, %v682
        %v2496 = vmul.f32 %v2464, %v682
        %v2497 = vmul.f32 %v2468, %v682
        %v2498 = vmul.f32 %v2472, %v682
        %v2499 = vmul.f32 %v2476, %v682
        %v2500 = vmul.f32 %v2480, %v682
        %v2501 = vmul.f32 %v2484, %v682
        %v2502 = vadd.f32 %v2406, %v2486
        %v2503 = vadd.f32 %v2407, %v2487
        %v2504 = vadd.f32 %v2408, %v2488
        %v2505 = vadd.f32 %v2409, %v2489
        %v2506 = vadd.f32 %v2410, %v2490
        %v2507 = vadd.f32 %v2411, %v2491
        %v2508 = vadd.f32 %v2412, %v2492
        %v2509 = vadd.f32 %v2413, %v2493
        %v2510 = vadd.f32 %v2414, %v2494
        %v2511 = vadd.f32 %v2415, %v2495
        %v2512 = vadd.f32 %v2416, %v2496
        %v2513 = vadd.f32 %v2417, %v2497
        %v2514 = vadd.f32 %v2418, %v2498
        %v2515 = vadd.f32 %v2419, %v2499
        %v2516 = vadd.f32 %v2420, %v2500
        %v2517 = vadd.f32 %v2421, %v2501
        %v2518 = vmax.f32 %v2502, 0.0
        %v2519 = vmax.f32 %v2503, 0.0
        %v2520 = vmax.f32 %v2504, 0.0
        %v2521 = vmax.f32 %v2505, 0.0
        %v2522 = vmax.f32 %v2506, 0.0
        %v2523 = vmax.f32 %v2507, 0.0
        %v2524 = vmax.f32 %v2508, 0.0
        %v2525 = vmax.f32 %v2509, 0.0
        %v2526 = vmax.f32 %v2510, 0.0
        %v2527 = vmax.f32 %v2511, 0.0
        %v2528 = vmax.f32 %v2512, 0.0
        %v2529 = vmax.f32 %v2513, 0.0
        %v2530 = vmax.f32 %v2514, 0.0
        %v2531 = vmax.f32 %v2515, 0.0
        %v2532 = vmax.f32 %v2516, 0.0
        %v2533 = vmax.f32 %v2517, 0.0
        %v2534 = vpack.c.bf16 %v2519, %v2518
        %v2535 = vpack.c.bf16 %v2521, %v2520
        %v2536 = vpack.c.bf16 %v2523, %v2522
        %v2537 = vpack.c.bf16 %v2525, %v2524
        %v2538 = vpack.c.bf16 %v2527, %v2526
        %v2539 = vpack.c.bf16 %v2529, %v2528
        %v2540 = vpack.c.bf16 %v2531, %v2530
        %v2541 = vpack.c.bf16 %v2533, %v2532
        %2542 = vmatpush.bf16.msra.mxu0 %v778
        %2543 = vmatpush.bf16.msra.mxu0 %v777
        %2544 = vmatpush.bf16.msra.mxu0 %v776
        %2545 = vmatpush.bf16.msra.mxu0 %v775
        %2546 = vmatpush.bf16.msra.mxu0 %v774
        %2547 = vmatpush.bf16.msra.mxu0 %v773
        %2548 = vmatpush.bf16.msra.mxu0 %v772
        %2549 = vmatpush.bf16.msra.mxu0 %v771
        %2550 = vmatmul.bf16.gmra.mxu0 %v2534
        %v2551 = vpop.f32.mrf.mxu0
        %v2552 = vadd.f32 0.0, %v2551
        %v2553 = vpop.f32.mrf.mxu0
        %v2554 = vadd.f32 0.0, %v2553
        %2555 = vmatmul.bf16.gmra.mxu0 %v2535
        %v2556 = vpop.f32.mrf.mxu0
        %v2557 = vadd.f32 0.0, %v2556
        %v2558 = vpop.f32.mrf.mxu0
        %v2559 = vadd.f32 0.0, %v2558
        %2560 = vmatmul.bf16.gmra.mxu0 %v2536
        %v2561 = vpop.f32.mrf.mxu0
        %v2562 = vadd.f32 0.0, %v2561
        %v2563 = vpop.f32.mrf.mxu0
        %v2564 = vadd.f32 0.0, %v2563
        %2565 = vmatmul.bf16.gmra.mxu0 %v2537
        %v2566 = vpop.f32.mrf.mxu0
        %v2567 = vadd.f32 0.0, %v2566
        %v2568 = vpop.f32.mrf.mxu0
        %v2569 = vadd.f32 0.0, %v2568
        %2570 = vmatmul.bf16.gmra.mxu0 %v2538
        %v2571 = vpop.f32.mrf.mxu0
        %v2572 = vadd.f32 0.0, %v2571
        %v2573 = vpop.f32.mrf.mxu0
        %v2574 = vadd.f32 0.0, %v2573
        %2575 = vmatmul.bf16.gmra.mxu0 %v2539
        %v2576 = vpop.f32.mrf.mxu0
        %v2577 = vadd.f32 0.0, %v2576
        %v2578 = vpop.f32.mrf.mxu0
        %v2579 = vadd.f32 0.0, %v2578
        %2580 = vmatmul.bf16.gmra.mxu0 %v2540
        %v2581 = vpop.f32.mrf.mxu0
        %v2582 = vadd.f32 0.0, %v2581
        %v2583 = vpop.f32.mrf.mxu0
        %v2584 = vadd.f32 0.0, %v2583
        %2585 = vmatmul.bf16.gmra.mxu0 %v2541
        %v2586 = vpop.f32.mrf.mxu0
        %v2587 = vadd.f32 0.0, %v2586
        %v2588 = vpop.f32.mrf.mxu0
        %v2589 = vadd.f32 0.0, %v2588
        %2590 = vdwg.mxu0
        %2591 = vst [vmem:[#allocation2 + $0x180] sm:$0xff] %v2552
        %2592 = vst [vmem:[#allocation2 + $0x188] sm:$0xff] %v2554
        %2593 = vst [vmem:[#allocation2 + $0x190] sm:$0xff] %v2557
        %2594 = vst [vmem:[#allocation2 + $0x198] sm:$0xff] %v2559
        %2595 = vst [vmem:[#allocation2 + $0x1a0] sm:$0xff] %v2562
        %2596 = vst [vmem:[#allocation2 + $0x1a8] sm:$0xff] %v2564
        %2597 = vst [vmem:[#allocation2 + $0x1b0] sm:$0xff] %v2567
        %2598 = vst [vmem:[#allocation2 + $0x1b8] sm:$0xff] %v2569
        %2599 = vst [vmem:[#allocation2 + $0x1c0] sm:$0xff] %v2572
        %2600 = vst [vmem:[#allocation2 + $0x1c8] sm:$0xff] %v2574
        %2601 = vst [vmem:[#allocation2 + $0x1d0] sm:$0xff] %v2577
        %2602 = vst [vmem:[#allocation2 + $0x1d8] sm:$0xff] %v2579
        %2603 = vst [vmem:[#allocation2 + $0x1e0] sm:$0xff] %v2582
        %2604 = vst [vmem:[#allocation2 + $0x1e8] sm:$0xff] %v2584
        %2605 = vst [vmem:[#allocation2 + $0x1f0] sm:$0xff] %v2587
        %2606 = vst [vmem:[#allocation2 + $0x1f8] sm:$0xff] %v2589
        %v2607 = vld [vmem:[%s195 + $0x200] sm:$0xff]
        %v2608 = vld [vmem:[%s195 + $0x208] sm:$0xff]
        %v2609 = vld [vmem:[%s195 + $0x210] sm:$0xff]
        %v2610 = vld [vmem:[%s195 + $0x218] sm:$0xff]
        %v2611 = vld [vmem:[%s195 + $0x220] sm:$0xff]
        %v2612 = vld [vmem:[%s195 + $0x228] sm:$0xff]
        %v2613 = vld [vmem:[%s195 + $0x230] sm:$0xff]
        %v2614 = vld [vmem:[%s195 + $0x238] sm:$0xff]
        %2616 = vset.pattern.permute.xlu0 0
        %2617 = vperm.xlu0 %2616, %v2607
        %v2618 = vpop.permute.xlu0 %2617
        %2621 = vset.pattern.permute.xlu0 0
        %2622 = vperm.xlu0 %2621, %v2608
        %v2623 = vpop.permute.xlu0 %2622
        %2626 = vset.pattern.permute.xlu0 0
        %2627 = vperm.xlu0 %2626, %v2609
        %v2628 = vpop.permute.xlu0 %2627
        %2631 = vset.pattern.permute.xlu0 0
        %2632 = vperm.xlu0 %2631, %v2610
        %v2633 = vpop.permute.xlu0 %2632
        %2636 = vset.pattern.permute.xlu0 0
        %2637 = vperm.xlu0 %2636, %v2611
        %v2638 = vpop.permute.xlu0 %2637
        %2641 = vset.pattern.permute.xlu0 0
        %2642 = vperm.xlu0 %2641, %v2612
        %v2643 = vpop.permute.xlu0 %2642
        %2646 = vset.pattern.permute.xlu0 0
        %2647 = vperm.xlu0 %2646, %v2613
        %v2648 = vpop.permute.xlu0 %2647
        %2651 = vset.pattern.permute.xlu0 0
        %2652 = vperm.xlu0 %2651, %v2614
        %v2653 = vpop.permute.xlu0 %2652
        %v2655 = vmul.f32 %v2618, %v310
        %v2656 = vmul.f32 %v2623, %v310
        %v2657 = vmul.f32 %v2628, %v310
        %v2658 = vmul.f32 %v2633, %v310
        %v2659 = vmul.f32 %v2638, %v310
        %v2660 = vmul.f32 %v2643, %v310
        %v2661 = vmul.f32 %v2648, %v310
        %v2662 = vmul.f32 %v2653, %v310
        %2663 = vset.pattern.permute.xlu0 1
        %2664 = vperm.xlu0 %2663, %v2607
        %v2665 = vpop.permute.xlu0 %2664
        %2667 = vset.pattern.permute.xlu0 1
        %2668 = vperm.xlu0 %2667, %v2608
        %v2669 = vpop.permute.xlu0 %2668
        %2671 = vset.pattern.permute.xlu0 1
        %2672 = vperm.xlu0 %2671, %v2609
        %v2673 = vpop.permute.xlu0 %2672
        %2675 = vset.pattern.permute.xlu0 1
        %2676 = vperm.xlu0 %2675, %v2610
        %v2677 = vpop.permute.xlu0 %2676
        %2679 = vset.pattern.permute.xlu0 1
        %2680 = vperm.xlu0 %2679, %v2611
        %v2681 = vpop.permute.xlu0 %2680
        %2683 = vset.pattern.permute.xlu0 1
        %2684 = vperm.xlu0 %2683, %v2612
        %v2685 = vpop.permute.xlu0 %2684
        %2687 = vset.pattern.permute.xlu0 1
        %2688 = vperm.xlu0 %2687, %v2613
        %v2689 = vpop.permute.xlu0 %2688
        %2691 = vset.pattern.permute.xlu0 1
        %2692 = vperm.xlu0 %2691, %v2614
        %v2693 = vpop.permute.xlu0 %2692
        %v2695 = vmul.f32 %v2665, %v391
        %v2696 = vmul.f32 %v2669, %v391
        %v2697 = vmul.f32 %v2673, %v391
        %v2698 = vmul.f32 %v2677, %v391
        %v2699 = vmul.f32 %v2681, %v391
        %v2700 = vmul.f32 %v2685, %v391
        %v2701 = vmul.f32 %v2689, %v391
        %v2702 = vmul.f32 %v2693, %v391
        %v2703 = vadd.f32 %v2655, %v2695
        %v2704 = vadd.f32 %v2656, %v2696
        %v2705 = vadd.f32 %v2657, %v2697
        %v2706 = vadd.f32 %v2658, %v2698
        %v2707 = vadd.f32 %v2659, %v2699
        %v2708 = vadd.f32 %v2660, %v2700
        %v2709 = vadd.f32 %v2661, %v2701
        %v2710 = vadd.f32 %v2662, %v2702
        %2711 = vset.pattern.permute.xlu0 2
        %2712 = vperm.xlu0 %2711, %v2607
        %v2713 = vpop.permute.xlu0 %2712
        %2715 = vset.pattern.permute.xlu0 2
        %2716 = vperm.xlu0 %2715, %v2608
        %v2717 = vpop.permute.xlu0 %2716
        %2719 = vset.pattern.permute.xlu0 2
        %2720 = vperm.xlu0 %2719, %v2609
        %v2721 = vpop.permute.xlu0 %2720
        %2723 = vset.pattern.permute.xlu0 2
        %2724 = vperm.xlu0 %2723, %v2610
        %v2725 = vpop.permute.xlu0 %2724
        %2727 = vset.pattern.permute.xlu0 2
        %2728 = vperm.xlu0 %2727, %v2611
        %v2729 = vpop.permute.xlu0 %2728
        %2731 = vset.pattern.permute.xlu0 2
        %2732 = vperm.xlu0 %2731, %v2612
        %v2733 = vpop.permute.xlu0 %2732
        %2735 = vset.pattern.permute.xlu0 2
        %2736 = vperm.xlu0 %2735, %v2613
        %v2737 = vpop.permute.xlu0 %2736
        %2739 = vset.pattern.permute.xlu0 2
        %2740 = vperm.xlu0 %2739, %v2614
        %v2741 = vpop.permute.xlu0 %2740
        %v2743 = vmul.f32 %v2713, %v488
        %v2744 = vmul.f32 %v2717, %v488
        %v2745 = vmul.f32 %v2721, %v488
        %v2746 = vmul.f32 %v2725, %v488
        %v2747 = vmul.f32 %v2729, %v488
        %v2748 = vmul.f32 %v2733, %v488
        %v2749 = vmul.f32 %v2737, %v488
        %v2750 = vmul.f32 %v2741, %v488
        %v2751 = vadd.f32 %v2703, %v2743
        %v2752 = vadd.f32 %v2704, %v2744
        %v2753 = vadd.f32 %v2705, %v2745
        %v2754 = vadd.f32 %v2706, %v2746
        %v2755 = vadd.f32 %v2707, %v2747
        %v2756 = vadd.f32 %v2708, %v2748
        %v2757 = vadd.f32 %v2709, %v2749
        %v2758 = vadd.f32 %v2710, %v2750
        %2759 = vset.pattern.permute.xlu0 3
        %2760 = vperm.xlu0 %2759, %v2607
        %v2761 = vpop.permute.xlu0 %2760
        %2763 = vset.pattern.permute.xlu0 3
        %2764 = vperm.xlu0 %2763, %v2608
        %v2765 = vpop.permute.xlu0 %2764
        %2767 = vset.pattern.permute.xlu0 3
        %2768 = vperm.xlu0 %2767, %v2609
        %v2769 = vpop.permute.xlu0 %2768
        %2771 = vset.pattern.permute.xlu0 3
        %2772 = vperm.xlu0 %2771, %v2610
        %v2773 = vpop.permute.xlu0 %2772
        %2775 = vset.pattern.permute.xlu0 3
        %2776 = vperm.xlu0 %2775, %v2611
        %v2777 = vpop.permute.xlu0 %2776
        %2779 = vset.pattern.permute.xlu0 3
        %2780 = vperm.xlu0 %2779, %v2612
        %v2781 = vpop.permute.xlu0 %2780
        %2783 = vset.pattern.permute.xlu0 3
        %2784 = vperm.xlu0 %2783, %v2613
        %v2785 = vpop.permute.xlu0 %2784
        %2787 = vset.pattern.permute.xlu0 3
        %2788 = vperm.xlu0 %2787, %v2614
        %v2789 = vpop.permute.xlu0 %2788
        %v2791 = vmul.f32 %v2761, %v585
        %v2792 = vmul.f32 %v2765, %v585
        %v2793 = vmul.f32 %v2769, %v585
        %v2794 = vmul.f32 %v2773, %v585
        %v2795 = vmul.f32 %v2777, %v585
        %v2796 = vmul.f32 %v2781, %v585
        %v2797 = vmul.f32 %v2785, %v585
        %v2798 = vmul.f32 %v2789, %v585
        %v2799 = vadd.f32 %v2751, %v2791
        %v2800 = vadd.f32 %v2752, %v2792
        %v2801 = vadd.f32 %v2753, %v2793
        %v2802 = vadd.f32 %v2754, %v2794
        %v2803 = vadd.f32 %v2755, %v2795
        %v2804 = vadd.f32 %v2756, %v2796
        %v2805 = vadd.f32 %v2757, %v2797
        %v2806 = vadd.f32 %v2758, %v2798
        %2807 = vset.pattern.permute.xlu0 4
        %2808 = vperm.xlu0 %2807, %v2607
        %v2809 = vpop.permute.xlu0 %2808
        %2811 = vset.pattern.permute.xlu0 4
        %2812 = vperm.xlu0 %2811, %v2608
        %v2813 = vpop.permute.xlu0 %2812
        %2815 = vset.pattern.permute.xlu0 4
        %2816 = vperm.xlu0 %2815, %v2609
        %v2817 = vpop.permute.xlu0 %2816
        %2819 = vset.pattern.permute.xlu0 4
        %2820 = vperm.xlu0 %2819, %v2610
        %v2821 = vpop.permute.xlu0 %2820
        %2823 = vset.pattern.permute.xlu0 4
        %2824 = vperm.xlu0 %2823, %v2611
        %v2825 = vpop.permute.xlu0 %2824
        %2827 = vset.pattern.permute.xlu0 4
        %2828 = vperm.xlu0 %2827, %v2612
        %v2829 = vpop.permute.xlu0 %2828
        %2831 = vset.pattern.permute.xlu0 4
        %2832 = vperm.xlu0 %2831, %v2613
        %v2833 = vpop.permute.xlu0 %2832
        %2835 = vset.pattern.permute.xlu0 4
        %2836 = vperm.xlu0 %2835, %v2614
        %v2837 = vpop.permute.xlu0 %2836
        %v2839 = vmul.f32 %v2809, %v682
        %v2840 = vmul.f32 %v2813, %v682
        %v2841 = vmul.f32 %v2817, %v682
        %v2842 = vmul.f32 %v2821, %v682
        %v2843 = vmul.f32 %v2825, %v682
        %v2844 = vmul.f32 %v2829, %v682
        %v2845 = vmul.f32 %v2833, %v682
        %v2846 = vmul.f32 %v2837, %v682
        %v2847 = vadd.f32 %v2799, %v2839
        %v2848 = vadd.f32 %v2800, %v2840
        %v2849 = vadd.f32 %v2801, %v2841
        %v2850 = vadd.f32 %v2802, %v2842
        %v2851 = vadd.f32 %v2803, %v2843
        %v2852 = vadd.f32 %v2804, %v2844
        %v2853 = vadd.f32 %v2805, %v2845
        %v2854 = vadd.f32 %v2806, %v2846
        %v2855 = vmax.f32 %v2847, 0.0
        %v2856 = vmax.f32 %v2848, 0.0
        %v2857 = vmax.f32 %v2849, 0.0
        %v2858 = vmax.f32 %v2850, 0.0
        %v2859 = vmax.f32 %v2851, 0.0
        %v2860 = vmax.f32 %v2852, 0.0
        %v2861 = vmax.f32 %v2853, 0.0
        %v2862 = vmax.f32 %v2854, 0.0
        %v2863 = vpack.c.bf16 %v2856, %v2855
        %v2864 = vpack.c.bf16 %v2858, %v2857
        %v2865 = vpack.c.bf16 %v2860, %v2859
        %v2866 = vpack.c.bf16 %v2862, %v2861
        %2867 = vmatpush.bf16.msra.mxu0 %v778
        %2868 = vmatpush.bf16.msra.mxu0 %v777
        %2869 = vmatpush.bf16.msra.mxu0 %v776
        %2870 = vmatpush.bf16.msra.mxu0 %v775
        %2871 = vmatpush.bf16.msra.mxu0 %v774
        %2872 = vmatpush.bf16.msra.mxu0 %v773
        %2873 = vmatpush.bf16.msra.mxu0 %v772
        %2874 = vmatpush.bf16.msra.mxu0 %v771
        %2875 = vmatmul.bf16.gmra.mxu0 %v2863
        %v2876 = vpop.f32.mrf.mxu0
        %v2877 = vadd.f32 0.0, %v2876
        %v2878 = vpop.f32.mrf.mxu0
        %v2879 = vadd.f32 0.0, %v2878
        %2880 = vmatmul.bf16.gmra.mxu0 %v2864
        %v2881 = vpop.f32.mrf.mxu0
        %v2882 = vadd.f32 0.0, %v2881
        %v2883 = vpop.f32.mrf.mxu0
        %v2884 = vadd.f32 0.0, %v2883
        %2885 = vmatmul.bf16.gmra.mxu0 %v2865
        %v2886 = vpop.f32.mrf.mxu0
        %v2887 = vadd.f32 0.0, %v2886
        %v2888 = vpop.f32.mrf.mxu0
        %v2889 = vadd.f32 0.0, %v2888
        %2890 = vmatmul.bf16.gmra.mxu0 %v2866
        %v2891 = vpop.f32.mrf.mxu0
        %v2892 = vadd.f32 0.0, %v2891
        %v2893 = vpop.f32.mrf.mxu0
        %v2894 = vadd.f32 0.0, %v2893
        %2895 = vdwg.mxu0
        %2896 = vst [vmem:[#allocation2 + $0x200] sm:$0xff] %v2877
        %2897 = vst [vmem:[#allocation2 + $0x208] sm:$0xff] %v2879
        %2898 = vst [vmem:[#allocation2 + $0x210] sm:$0xff] %v2882
        %2899 = vst [vmem:[#allocation2 + $0x218] sm:$0xff] %v2884
        %2900 = vst [vmem:[#allocation2 + $0x220] sm:$0xff] %v2887
        %2901 = vst [vmem:[#allocation2 + $0x228] sm:$0xff] %v2889
        %2902 = vst [vmem:[#allocation2 + $0x230] sm:$0xff] %v2892
        %2903 = vst [vmem:[#allocation2 + $0x238] sm:$0xff] %v2894
        %2904 = vst [vmem:[#allocation2 + $0x240] sm:$0xff] 0.0
        %2905 = vst [vmem:[#allocation2 + $0x248] sm:$0xff] 0.0
        %v2906 = vld [vmem:[#allocation2] sm:$0xff]
        %v2907 = vld [vmem:[#allocation2 + $0x8] sm:$0xff]
        %v2908 = vld [vmem:[#allocation2 + $0x10] sm:$0xff]
        %v2909 = vld [vmem:[#allocation2 + $0x18] sm:$0xff]
        %v2910 = vld [vmem:[#allocation2 + $0x20] sm:$0xff]
        %v2911 = vld [vmem:[#allocation2 + $0x28] sm:$0xff]
        %v2912 = vld [vmem:[#allocation2 + $0x30] sm:$0xff]
        %v2913 = vld [vmem:[#allocation2 + $0x38] sm:$0xff]
        %v2914 = vld [vmem:[#allocation2 + $0x40] sm:$0xff]
        %v2915 = vld [vmem:[#allocation2 + $0x48] sm:$0xff]
        %v2916 = vld [vmem:[#allocation2 + $0x50] sm:$0xff]
        %v2917 = vld [vmem:[#allocation2 + $0x58] sm:$0xff]
        %v2918 = vld [vmem:[#allocation2 + $0x60] sm:$0xff]
        %v2919 = vld [vmem:[#allocation2 + $0x68] sm:$0xff]
        %v2920 = vld [vmem:[#allocation2 + $0x70] sm:$0xff]
        %v2921 = vld [vmem:[#allocation2 + $0x78] sm:$0xff]
        %v2922 = vld [vmem:[#allocation2 + $0x80] sm:$0xff]
        %v2923 = vrot.slane %v2906, 4
        %v2924 = vrot.slane %v2907, 4
        %v2925 = vrot.slane %v2908, 4
        %v2926 = vrot.slane %v2909, 4
        %v2927 = vrot.slane %v2910, 4
        %v2928 = vrot.slane %v2911, 4
        %v2929 = vrot.slane %v2912, 4
        %v2930 = vrot.slane %v2913, 4
        %v2931 = vrot.slane %v2914, 4
        %v2932 = vrot.slane %v2915, 4
        %v2933 = vrot.slane %v2916, 4
        %v2934 = vrot.slane %v2917, 4
        %v2935 = vrot.slane %v2918, 4
        %v2936 = vrot.slane %v2919, 4
        %v2937 = vrot.slane %v2920, 4
        %v2938 = vrot.slane %v2921, 4
        %v2939 = vrot.slane %v2922, 4
        %v2940 = vlaneseq
        %v2941 = vshrl.u32 %v2940, 7
        %vm2942 = vcmp.lt.s32.totalorder %v2941, 4
        %v2943 = vsel %vm2942, %v2938, %v2939
        %v2944 = vsel %vm2942, %v2937, %v2938
        %v2945 = vsel %vm2942, %v2936, %v2937
        %v2946 = vsel %vm2942, %v2935, %v2936
        %v2947 = vsel %vm2942, %v2934, %v2935
        %v2948 = vsel %vm2942, %v2933, %v2934
        %v2949 = vsel %vm2942, %v2932, %v2933
        %v2950 = vsel %vm2942, %v2931, %v2932
        %v2951 = vsel %vm2942, %v2930, %v2931
        %v2952 = vsel %vm2942, %v2929, %v2930
        %v2953 = vsel %vm2942, %v2928, %v2929
        %v2954 = vsel %vm2942, %v2927, %v2928
        %v2955 = vsel %vm2942, %v2926, %v2927
        %v2956 = vsel %vm2942, %v2925, %v2926
        %v2957 = vsel %vm2942, %v2924, %v2925
        %v2958 = vsel %vm2942, %v2923, %v2924
        %2959 = vrot.lane.b32.xlu0 %v2958, 120
        %v2960 = vpop.permute.xlu0 %2959
        %2961 = vrot.lane.b32.xlu0 %v2957, 120
        %v2962 = vpop.permute.xlu0 %2961
        %2963 = vrot.lane.b32.xlu0 %v2956, 120
        %v2964 = vpop.permute.xlu0 %2963
        %2965 = vrot.lane.b32.xlu0 %v2955, 120
        %v2966 = vpop.permute.xlu0 %2965
        %2967 = vrot.lane.b32.xlu0 %v2954, 120
        %v2968 = vpop.permute.xlu0 %2967
        %2969 = vrot.lane.b32.xlu0 %v2953, 120
        %v2970 = vpop.permute.xlu0 %2969
        %2971 = vrot.lane.b32.xlu0 %v2952, 120
        %v2972 = vpop.permute.xlu0 %2971
        %2973 = vrot.lane.b32.xlu0 %v2951, 120
        %v2974 = vpop.permute.xlu0 %2973
        %2975 = vrot.lane.b32.xlu0 %v2950, 120
        %v2976 = vpop.permute.xlu0 %2975
        %2977 = vrot.lane.b32.xlu0 %v2949, 120
        %v2978 = vpop.permute.xlu0 %2977
        %2979 = vrot.lane.b32.xlu0 %v2948, 120
        %v2980 = vpop.permute.xlu0 %2979
        %2981 = vrot.lane.b32.xlu0 %v2947, 120
        %v2982 = vpop.permute.xlu0 %2981
        %2983 = vrot.lane.b32.xlu0 %v2946, 120
        %v2984 = vpop.permute.xlu0 %2983
        %2985 = vrot.lane.b32.xlu0 %v2945, 120
        %v2986 = vpop.permute.xlu0 %2985
        %2987 = vrot.lane.b32.xlu0 %v2944, 120
        %v2988 = vpop.permute.xlu0 %2987
        %2989 = vrot.lane.b32.xlu0 %v2943, 120
        %v2990 = vpop.permute.xlu0 %2989
        %v2991 = vadd.f32 %v2906, %v2960
        %v2992 = vadd.f32 %v2907, %v2962
        %v2993 = vadd.f32 %v2908, %v2964
        %v2994 = vadd.f32 %v2909, %v2966
        %v2995 = vadd.f32 %v2910, %v2968
        %v2996 = vadd.f32 %v2911, %v2970
        %v2997 = vadd.f32 %v2912, %v2972
        %v2998 = vadd.f32 %v2913, %v2974
        %v2999 = vadd.f32 %v2914, %v2976
        %v3000 = vadd.f32 %v2915, %v2978
        %v3001 = vadd.f32 %v2916, %v2980
        %v3002 = vadd.f32 %v2917, %v2982
        %v3003 = vadd.f32 %v2918, %v2984
        %v3004 = vadd.f32 %v2919, %v2986
        %v3005 = vadd.f32 %v2920, %v2988
        %v3006 = vadd.f32 %v2921, %v2990
        %3007 = vrot.lane.b32.xlu0 %v2907, 112
        %v3008 = vpop.permute.xlu0 %3007
        %3009 = vrot.lane.b32.xlu0 %v2908, 112
        %v3010 = vpop.permute.xlu0 %3009
        %3011 = vrot.lane.b32.xlu0 %v2909, 112
        %v3012 = vpop.permute.xlu0 %3011
        %3013 = vrot.lane.b32.xlu0 %v2910, 112
        %v3014 = vpop.permute.xlu0 %3013
        %3015 = vrot.lane.b32.xlu0 %v2911, 112
        %v3016 = vpop.permute.xlu0 %3015
        %3017 = vrot.lane.b32.xlu0 %v2912, 112
        %v3018 = vpop.permute.xlu0 %3017
        %3019 = vrot.lane.b32.xlu0 %v2913, 112
        %v3020 = vpop.permute.xlu0 %3019
        %3021 = vrot.lane.b32.xlu0 %v2914, 112
        %v3022 = vpop.permute.xlu0 %3021
        %3023 = vrot.lane.b32.xlu0 %v2915, 112
        %v3024 = vpop.permute.xlu0 %3023
        %3025 = vrot.lane.b32.xlu0 %v2916, 112
        %v3026 = vpop.permute.xlu0 %3025
        %3027 = vrot.lane.b32.xlu0 %v2917, 112
        %v3028 = vpop.permute.xlu0 %3027
        %3029 = vrot.lane.b32.xlu0 %v2918, 112
        %v3030 = vpop.permute.xlu0 %3029
        %3031 = vrot.lane.b32.xlu0 %v2919, 112
        %v3032 = vpop.permute.xlu0 %3031
        %3033 = vrot.lane.b32.xlu0 %v2920, 112
        %v3034 = vpop.permute.xlu0 %3033
        %3035 = vrot.lane.b32.xlu0 %v2921, 112
        %v3036 = vpop.permute.xlu0 %3035
        %3037 = vrot.lane.b32.xlu0 %v2922, 112
        %v3038 = vpop.permute.xlu0 %3037
        %v3039 = vadd.f32 %v2991, %v3008
        %v3040 = vadd.f32 %v2992, %v3010
        %v3041 = vadd.f32 %v2993, %v3012
        %v3042 = vadd.f32 %v2994, %v3014
        %v3043 = vadd.f32 %v2995, %v3016
        %v3044 = vadd.f32 %v2996, %v3018
        %v3045 = vadd.f32 %v2997, %v3020
        %v3046 = vadd.f32 %v2998, %v3022
        %v3047 = vadd.f32 %v2999, %v3024
        %v3048 = vadd.f32 %v3000, %v3026
        %v3049 = vadd.f32 %v3001, %v3028
        %v3050 = vadd.f32 %v3002, %v3030
        %v3051 = vadd.f32 %v3003, %v3032
        %v3052 = vadd.f32 %v3004, %v3034
        %v3053 = vadd.f32 %v3005, %v3036
        %v3054 = vadd.f32 %v3006, %v3038
        %v3055 = vld [vmem:[#allocation2 + $0x60] sm:$0xff]
        %v3056 = vld [vmem:[#allocation2 + $0x68] sm:$0xff]
        %v3057 = vld [vmem:[#allocation2 + $0x70] sm:$0xff]
        %v3058 = vld [vmem:[#allocation2 + $0x78] sm:$0xff]
        %v3059 = vld [vmem:[#allocation2 + $0x80] sm:$0xff]
        %v3060 = vld [vmem:[#allocation2 + $0x88] sm:$0xff]
        %v3061 = vld [vmem:[#allocation2 + $0x90] sm:$0xff]
        %v3062 = vld [vmem:[#allocation2 + $0x98] sm:$0xff]
        %v3063 = vld [vmem:[#allocation2 + $0xa0] sm:$0xff]
        %v3064 = vld [vmem:[#allocation2 + $0xa8] sm:$0xff]
        %v3065 = vld [vmem:[#allocation2 + $0xb0] sm:$0xff]
        %v3066 = vld [vmem:[#allocation2 + $0xb8] sm:$0xff]
        %v3067 = vld [vmem:[#allocation2 + $0xc0] sm:$0xff]
        %v3068 = vld [vmem:[#allocation2 + $0xc8] sm:$0xff]
        %v3069 = vld [vmem:[#allocation2 + $0xd0] sm:$0xff]
        %v3070 = vld [vmem:[#allocation2 + $0xd8] sm:$0xff]
        %3071 = vrot.lane.b32.xlu0 %v3055, 104
        %v3072 = vpop.permute.xlu0 %3071
        %3073 = vrot.lane.b32.xlu0 %v3056, 104
        %v3074 = vpop.permute.xlu0 %3073
        %3075 = vrot.lane.b32.xlu0 %v3057, 104
        %v3076 = vpop.permute.xlu0 %3075
        %3077 = vrot.lane.b32.xlu0 %v3058, 104
        %v3078 = vpop.permute.xlu0 %3077
        %3079 = vrot.lane.b32.xlu0 %v3059, 104
        %v3080 = vpop.permute.xlu0 %3079
        %3081 = vrot.lane.b32.xlu0 %v3060, 104
        %v3082 = vpop.permute.xlu0 %3081
        %3083 = vrot.lane.b32.xlu0 %v3061, 104
        %v3084 = vpop.permute.xlu0 %3083
        %3085 = vrot.lane.b32.xlu0 %v3062, 104
        %v3086 = vpop.permute.xlu0 %3085
        %3087 = vrot.lane.b32.xlu0 %v3063, 104
        %v3088 = vpop.permute.xlu0 %3087
        %3089 = vrot.lane.b32.xlu0 %v3064, 104
        %v3090 = vpop.permute.xlu0 %3089
        %3091 = vrot.lane.b32.xlu0 %v3065, 104
        %v3092 = vpop.permute.xlu0 %3091
        %3093 = vrot.lane.b32.xlu0 %v3066, 104
        %v3094 = vpop.permute.xlu0 %3093
        %3095 = vrot.lane.b32.xlu0 %v3067, 104
        %v3096 = vpop.permute.xlu0 %3095
        %3097 = vrot.lane.b32.xlu0 %v3068, 104
        %v3098 = vpop.permute.xlu0 %3097
        %3099 = vrot.lane.b32.xlu0 %v3069, 104
        %v3100 = vpop.permute.xlu0 %3099
        %3101 = vrot.lane.b32.xlu0 %v3070, 104
        %v3102 = vpop.permute.xlu0 %3101
        %v3103 = vadd.f32 %v3039, %v3072
        %v3104 = vadd.f32 %v3040, %v3074
        %v3105 = vadd.f32 %v3041, %v3076
        %v3106 = vadd.f32 %v3042, %v3078
        %v3107 = vadd.f32 %v3043, %v3080
        %v3108 = vadd.f32 %v3044, %v3082
        %v3109 = vadd.f32 %v3045, %v3084
        %v3110 = vadd.f32 %v3046, %v3086
        %v3111 = vadd.f32 %v3047, %v3088
        %v3112 = vadd.f32 %v3048, %v3090
        %v3113 = vadd.f32 %v3049, %v3092
        %v3114 = vadd.f32 %v3050, %v3094
        %v3115 = vadd.f32 %v3051, %v3096
        %v3116 = vadd.f32 %v3052, %v3098
        %v3117 = vadd.f32 %v3053, %v3100
        %v3118 = vadd.f32 %v3054, %v3102
        %v3119 = vld [vmem:[#allocation2 + $0xe0] sm:$0xff]
        %v3120 = vrot.slane %v3055, 4
        %v3121 = vrot.slane %v3056, 4
        %v3122 = vrot.slane %v3057, 4
        %v3123 = vrot.slane %v3058, 4
        %v3124 = vrot.slane %v3059, 4
        %v3125 = vrot.slane %v3060, 4
        %v3126 = vrot.slane %v3061, 4
        %v3127 = vrot.slane %v3062, 4
        %v3128 = vrot.slane %v3063, 4
        %v3129 = vrot.slane %v3064, 4
        %v3130 = vrot.slane %v3065, 4
        %v3131 = vrot.slane %v3066, 4
        %v3132 = vrot.slane %v3067, 4
        %v3133 = vrot.slane %v3068, 4
        %v3134 = vrot.slane %v3069, 4
        %v3135 = vrot.slane %v3070, 4
        %v3136 = vrot.slane %v3119, 4
        %v3137 = vsel %vm2942, %v3135, %v3136
        %v3138 = vsel %vm2942, %v3134, %v3135
        %v3139 = vsel %vm2942, %v3133, %v3134
        %v3140 = vsel %vm2942, %v3132, %v3133
        %v3141 = vsel %vm2942, %v3131, %v3132
        %v3142 = vsel %vm2942, %v3130, %v3131
        %v3143 = vsel %vm2942, %v3129, %v3130
        %v3144 = vsel %vm2942, %v3128, %v3129
        %v3145 = vsel %vm2942, %v3127, %v3128
        %v3146 = vsel %vm2942, %v3126, %v3127
        %v3147 = vsel %vm2942, %v3125, %v3126
        %v3148 = vsel %vm2942, %v3124, %v3125
        %v3149 = vsel %vm2942, %v3123, %v3124
        %v3150 = vsel %vm2942, %v3122, %v3123
        %v3151 = vsel %vm2942, %v3121, %v3122
        %v3152 = vsel %vm2942, %v3120, %v3121
        %3153 = vrot.lane.b32.xlu0 %v3152, 96
        %v3154 = vpop.permute.xlu0 %3153
        %3155 = vrot.lane.b32.xlu0 %v3151, 96
        %v3156 = vpop.permute.xlu0 %3155
        %3157 = vrot.lane.b32.xlu0 %v3150, 96
        %v3158 = vpop.permute.xlu0 %3157
        %3159 = vrot.lane.b32.xlu0 %v3149, 96
        %v3160 = vpop.permute.xlu0 %3159
        %3161 = vrot.lane.b32.xlu0 %v3148, 96
        %v3162 = vpop.permute.xlu0 %3161
        %3163 = vrot.lane.b32.xlu0 %v3147, 96
        %v3164 = vpop.permute.xlu0 %3163
        %3165 = vrot.lane.b32.xlu0 %v3146, 96
        %v3166 = vpop.permute.xlu0 %3165
        %3167 = vrot.lane.b32.xlu0 %v3145, 96
        %v3168 = vpop.permute.xlu0 %3167
        %3169 = vrot.lane.b32.xlu0 %v3144, 96
        %v3170 = vpop.permute.xlu0 %3169
        %3171 = vrot.lane.b32.xlu0 %v3143, 96
        %v3172 = vpop.permute.xlu0 %3171
        %3173 = vrot.lane.b32.xlu0 %v3142, 96
        %v3174 = vpop.permute.xlu0 %3173
        %3175 = vrot.lane.b32.xlu0 %v3141, 96
        %v3176 = vpop.permute.xlu0 %3175
        %3177 = vrot.lane.b32.xlu0 %v3140, 96
        %v3178 = vpop.permute.xlu0 %3177
        %3179 = vrot.lane.b32.xlu0 %v3139, 96
        %v3180 = vpop.permute.xlu0 %3179
        %3181 = vrot.lane.b32.xlu0 %v3138, 96
        %v3182 = vpop.permute.xlu0 %3181
        %3183 = vrot.lane.b32.xlu0 %v3137, 96
        %v3184 = vpop.permute.xlu0 %3183
        %v3185 = vadd.f32 %v3103, %v3154
        %v3186 = vadd.f32 %v3104, %v3156
        %v3187 = vadd.f32 %v3105, %v3158
        %v3188 = vadd.f32 %v3106, %v3160
        %v3189 = vadd.f32 %v3107, %v3162
        %v3190 = vadd.f32 %v3108, %v3164
        %v3191 = vadd.f32 %v3109, %v3166
        %v3192 = vadd.f32 %v3110, %v3168
        %v3193 = vadd.f32 %v3111, %v3170
        %v3194 = vadd.f32 %v3112, %v3172
        %v3195 = vadd.f32 %v3113, %v3174
        %v3196 = vadd.f32 %v3114, %v3176
        %v3197 = vadd.f32 %v3115, %v3178
        %v3198 = vadd.f32 %v3116, %v3180
        %v3199 = vadd.f32 %v3117, %v3182
        %v3200 = vadd.f32 %v3118, %v3184
        %3201 = vrot.lane.b32.xlu0 %v3056, 88
        %v3202 = vpop.permute.xlu0 %3201
        %3203 = vrot.lane.b32.xlu0 %v3057, 88
        %v3204 = vpop.permute.xlu0 %3203
        %3205 = vrot.lane.b32.xlu0 %v3058, 88
        %v3206 = vpop.permute.xlu0 %3205
        %3207 = vrot.lane.b32.xlu0 %v3059, 88
        %v3208 = vpop.permute.xlu0 %3207
        %3209 = vrot.lane.b32.xlu0 %v3060, 88
        %v3210 = vpop.permute.xlu0 %3209
        %3211 = vrot.lane.b32.xlu0 %v3061, 88
        %v3212 = vpop.permute.xlu0 %3211
        %3213 = vrot.lane.b32.xlu0 %v3062, 88
        %v3214 = vpop.permute.xlu0 %3213
        %3215 = vrot.lane.b32.xlu0 %v3063, 88
        %v3216 = vpop.permute.xlu0 %3215
        %3217 = vrot.lane.b32.xlu0 %v3064, 88
        %v3218 = vpop.permute.xlu0 %3217
        %3219 = vrot.lane.b32.xlu0 %v3065, 88
        %v3220 = vpop.permute.xlu0 %3219
        %3221 = vrot.lane.b32.xlu0 %v3066, 88
        %v3222 = vpop.permute.xlu0 %3221
        %3223 = vrot.lane.b32.xlu0 %v3067, 88
        %v3224 = vpop.permute.xlu0 %3223
        %3225 = vrot.lane.b32.xlu0 %v3068, 88
        %v3226 = vpop.permute.xlu0 %3225
        %3227 = vrot.lane.b32.xlu0 %v3069, 88
        %v3228 = vpop.permute.xlu0 %3227
        %3229 = vrot.lane.b32.xlu0 %v3070, 88
        %v3230 = vpop.permute.xlu0 %3229
        %3231 = vrot.lane.b32.xlu0 %v3119, 88
        %v3232 = vpop.permute.xlu0 %3231
        %v3233 = vadd.f32 %v3185, %v3202
        %v3234 = vadd.f32 %v3186, %v3204
        %v3235 = vadd.f32 %v3187, %v3206
        %v3236 = vadd.f32 %v3188, %v3208
        %v3237 = vadd.f32 %v3189, %v3210
        %v3238 = vadd.f32 %v3190, %v3212
        %v3239 = vadd.f32 %v3191, %v3214
        %v3240 = vadd.f32 %v3192, %v3216
        %v3241 = vadd.f32 %v3193, %v3218
        %v3242 = vadd.f32 %v3194, %v3220
        %v3243 = vadd.f32 %v3195, %v3222
        %v3244 = vadd.f32 %v3196, %v3224
        %v3245 = vadd.f32 %v3197, %v3226
        %v3246 = vadd.f32 %v3198, %v3228
        %v3247 = vadd.f32 %v3199, %v3230
        %v3248 = vadd.f32 %v3200, %v3232
        %v3249 = vld [vmem:[#allocation2 + $0xe8] sm:$0xff]
        %v3250 = vld [vmem:[#allocation2 + $0xf0] sm:$0xff]
        %v3251 = vld [vmem:[#allocation2 + $0xf8] sm:$0xff]
        %v3252 = vld [vmem:[#allocation2 + $0x100] sm:$0xff]
        %v3253 = vld [vmem:[#allocation2 + $0x108] sm:$0xff]
        %v3254 = vld [vmem:[#allocation2 + $0x110] sm:$0xff]
        %v3255 = vld [vmem:[#allocation2 + $0x118] sm:$0xff]
        %v3256 = vld [vmem:[#allocation2 + $0x120] sm:$0xff]
        %v3257 = vld [vmem:[#allocation2 + $0x128] sm:$0xff]
        %v3258 = vld [vmem:[#allocation2 + $0x130] sm:$0xff]
        %v3259 = vld [vmem:[#allocation2 + $0x138] sm:$0xff]
        %3260 = vrot.lane.b32.xlu0 %v3067, 80
        %v3261 = vpop.permute.xlu0 %3260
        %3262 = vrot.lane.b32.xlu0 %v3068, 80
        %v3263 = vpop.permute.xlu0 %3262
        %3264 = vrot.lane.b32.xlu0 %v3069, 80
        %v3265 = vpop.permute.xlu0 %3264
        %3266 = vrot.lane.b32.xlu0 %v3070, 80
        %v3267 = vpop.permute.xlu0 %3266
        %3268 = vrot.lane.b32.xlu0 %v3119, 80
        %v3269 = vpop.permute.xlu0 %3268
        %3270 = vrot.lane.b32.xlu0 %v3249, 80
        %v3271 = vpop.permute.xlu0 %3270
        %3272 = vrot.lane.b32.xlu0 %v3250, 80
        %v3273 = vpop.permute.xlu0 %3272
        %3274 = vrot.lane.b32.xlu0 %v3251, 80
        %v3275 = vpop.permute.xlu0 %3274
        %3276 = vrot.lane.b32.xlu0 %v3252, 80
        %v3277 = vpop.permute.xlu0 %3276
        %3278 = vrot.lane.b32.xlu0 %v3253, 80
        %v3279 = vpop.permute.xlu0 %3278
        %3280 = vrot.lane.b32.xlu0 %v3254, 80
        %v3281 = vpop.permute.xlu0 %3280
        %3282 = vrot.lane.b32.xlu0 %v3255, 80
        %v3283 = vpop.permute.xlu0 %3282
        %3284 = vrot.lane.b32.xlu0 %v3256, 80
        %v3285 = vpop.permute.xlu0 %3284
        %3286 = vrot.lane.b32.xlu0 %v3257, 80
        %v3287 = vpop.permute.xlu0 %3286
        %3288 = vrot.lane.b32.xlu0 %v3258, 80
        %v3289 = vpop.permute.xlu0 %3288
        %3290 = vrot.lane.b32.xlu0 %v3259, 80
        %v3291 = vpop.permute.xlu0 %3290
        %v3292 = vadd.f32 %v3233, %v3261
        %v3293 = vadd.f32 %v3234, %v3263
        %v3294 = vadd.f32 %v3235, %v3265
        %v3295 = vadd.f32 %v3236, %v3267
        %v3296 = vadd.f32 %v3237, %v3269
        %v3297 = vadd.f32 %v3238, %v3271
        %v3298 = vadd.f32 %v3239, %v3273
        %v3299 = vadd.f32 %v3240, %v3275
        %v3300 = vadd.f32 %v3241, %v3277
        %v3301 = vadd.f32 %v3242, %v3279
        %v3302 = vadd.f32 %v3243, %v3281
        %v3303 = vadd.f32 %v3244, %v3283
        %v3304 = vadd.f32 %v3245, %v3285
        %v3305 = vadd.f32 %v3246, %v3287
        %v3306 = vadd.f32 %v3247, %v3289
        %v3307 = vadd.f32 %v3248, %v3291
        %v3308 = vld [vmem:[#allocation2 + $0x140] sm:$0xff]
        %v3309 = vrot.slane %v3249, 4
        %v3310 = vrot.slane %v3250, 4
        %v3311 = vrot.slane %v3251, 4
        %v3312 = vrot.slane %v3252, 4
        %v3313 = vrot.slane %v3253, 4
        %v3314 = vrot.slane %v3254, 4
        %v3315 = vrot.slane %v3255, 4
        %v3316 = vrot.slane %v3256, 4
        %v3317 = vrot.slane %v3257, 4
        %v3318 = vrot.slane %v3258, 4
        %v3319 = vrot.slane %v3259, 4
        %v3320 = vrot.slane %v3308, 4
        %v3321 = vsel %vm2942, %v3319, %v3320
        %v3322 = vsel %vm2942, %v3318, %v3319
        %v3323 = vsel %vm2942, %v3317, %v3318
        %v3324 = vsel %vm2942, %v3316, %v3317
        %v3325 = vsel %vm2942, %v3315, %v3316
        %v3326 = vsel %vm2942, %v3314, %v3315
        %v3327 = vsel %vm2942, %v3313, %v3314
        %v3328 = vsel %vm2942, %v3312, %v3313
        %v3329 = vsel %vm2942, %v3311, %v3312
        %v3330 = vsel %vm2942, %v3310, %v3311
        %v3331 = vsel %vm2942, %v3309, %v3310
        %v3332 = vsel %vm2942, %v3136, %v3309
        %3333 = vrot.lane.b32.xlu0 %v3140, 72
        %v3334 = vpop.permute.xlu0 %3333
        %3335 = vrot.lane.b32.xlu0 %v3139, 72
        %v3336 = vpop.permute.xlu0 %3335
        %3337 = vrot.lane.b32.xlu0 %v3138, 72
        %v3338 = vpop.permute.xlu0 %3337
        %3339 = vrot.lane.b32.xlu0 %v3137, 72
        %v3340 = vpop.permute.xlu0 %3339
        %3341 = vrot.lane.b32.xlu0 %v3332, 72
        %v3342 = vpop.permute.xlu0 %3341
        %3343 = vrot.lane.b32.xlu0 %v3331, 72
        %v3344 = vpop.permute.xlu0 %3343
        %3345 = vrot.lane.b32.xlu0 %v3330, 72
        %v3346 = vpop.permute.xlu0 %3345
        %3347 = vrot.lane.b32.xlu0 %v3329, 72
        %v3348 = vpop.permute.xlu0 %3347
        %3349 = vrot.lane.b32.xlu0 %v3328, 72
        %v3350 = vpop.permute.xlu0 %3349
        %3351 = vrot.lane.b32.xlu0 %v3327, 72
        %v3352 = vpop.permute.xlu0 %3351
        %3353 = vrot.lane.b32.xlu0 %v3326, 72
        %v3354 = vpop.permute.xlu0 %3353
        %3355 = vrot.lane.b32.xlu0 %v3325, 72
        %v3356 = vpop.permute.xlu0 %3355
        %3357 = vrot.lane.b32.xlu0 %v3324, 72
        %v3358 = vpop.permute.xlu0 %3357
        %3359 = vrot.lane.b32.xlu0 %v3323, 72
        %v3360 = vpop.permute.xlu0 %3359
        %3361 = vrot.lane.b32.xlu0 %v3322, 72
        %v3362 = vpop.permute.xlu0 %3361
        %3363 = vrot.lane.b32.xlu0 %v3321, 72
        %v3364 = vpop.permute.xlu0 %3363
        %v3365 = vadd.f32 %v3292, %v3334
        %v3366 = vadd.f32 %v3293, %v3336
        %v3367 = vadd.f32 %v3294, %v3338
        %v3368 = vadd.f32 %v3295, %v3340
        %v3369 = vadd.f32 %v3296, %v3342
        %v3370 = vadd.f32 %v3297, %v3344
        %v3371 = vadd.f32 %v3298, %v3346
        %v3372 = vadd.f32 %v3299, %v3348
        %v3373 = vadd.f32 %v3300, %v3350
        %v3374 = vadd.f32 %v3301, %v3352
        %v3375 = vadd.f32 %v3302, %v3354
        %v3376 = vadd.f32 %v3303, %v3356
        %v3377 = vadd.f32 %v3304, %v3358
        %v3378 = vadd.f32 %v3305, %v3360
        %v3379 = vadd.f32 %v3306, %v3362
        %v3380 = vadd.f32 %v3307, %v3364
        %3381 = vrot.lane.b32.xlu0 %v3068, 64
        %v3382 = vpop.permute.xlu0 %3381
        %3383 = vrot.lane.b32.xlu0 %v3069, 64
        %v3384 = vpop.permute.xlu0 %3383
        %3385 = vrot.lane.b32.xlu0 %v3070, 64
        %v3386 = vpop.permute.xlu0 %3385
        %3387 = vrot.lane.b32.xlu0 %v3119, 64
        %v3388 = vpop.permute.xlu0 %3387
        %3389 = vrot.lane.b32.xlu0 %v3249, 64
        %v3390 = vpop.permute.xlu0 %3389
        %3391 = vrot.lane.b32.xlu0 %v3250, 64
        %v3392 = vpop.permute.xlu0 %3391
        %3393 = vrot.lane.b32.xlu0 %v3251, 64
        %v3394 = vpop.permute.xlu0 %3393
        %3395 = vrot.lane.b32.xlu0 %v3252, 64
        %v3396 = vpop.permute.xlu0 %3395
        %3397 = vrot.lane.b32.xlu0 %v3253, 64
        %v3398 = vpop.permute.xlu0 %3397
        %3399 = vrot.lane.b32.xlu0 %v3254, 64
        %v3400 = vpop.permute.xlu0 %3399
        %3401 = vrot.lane.b32.xlu0 %v3255, 64
        %v3402 = vpop.permute.xlu0 %3401
        %3403 = vrot.lane.b32.xlu0 %v3256, 64
        %v3404 = vpop.permute.xlu0 %3403
        %3405 = vrot.lane.b32.xlu0 %v3257, 64
        %v3406 = vpop.permute.xlu0 %3405
        %3407 = vrot.lane.b32.xlu0 %v3258, 64
        %v3408 = vpop.permute.xlu0 %3407
        %3409 = vrot.lane.b32.xlu0 %v3259, 64
        %v3410 = vpop.permute.xlu0 %3409
        %3411 = vrot.lane.b32.xlu0 %v3308, 64
        %v3412 = vpop.permute.xlu0 %3411
        %v3413 = vadd.f32 %v3365, %v3382
        %v3414 = vadd.f32 %v3366, %v3384
        %v3415 = vadd.f32 %v3367, %v3386
        %v3416 = vadd.f32 %v3368, %v3388
        %v3417 = vadd.f32 %v3369, %v3390
        %v3418 = vadd.f32 %v3370, %v3392
        %v3419 = vadd.f32 %v3371, %v3394
        %v3420 = vadd.f32 %v3372, %v3396
        %v3421 = vadd.f32 %v3373, %v3398
        %v3422 = vadd.f32 %v3374, %v3400
        %v3423 = vadd.f32 %v3375, %v3402
        %v3424 = vadd.f32 %v3376, %v3404
        %v3425 = vadd.f32 %v3377, %v3406
        %v3426 = vadd.f32 %v3378, %v3408
        %v3427 = vadd.f32 %v3379, %v3410
        %v3428 = vadd.f32 %v3380, %v3412
        %v3430 = vperm.slane %v213, 0
        %v3432 = vadd.f32 %v3413, %v3430
        %v3433 = vadd.f32 %v3414, %v3430
        %v3434 = vadd.f32 %v3415, %v3430
        %v3435 = vadd.f32 %v3416, %v3430
        %v3436 = vadd.f32 %v3417, %v3430
        %v3437 = vadd.f32 %v3418, %v3430
        %v3438 = vadd.f32 %v3419, %v3430
        %v3439 = vadd.f32 %v3420, %v3430
        %v3440 = vadd.f32 %v3421, %v3430
        %v3441 = vadd.f32 %v3422, %v3430
        %v3442 = vadd.f32 %v3423, %v3430
        %v3443 = vadd.f32 %v3424, %v3430
        %v3444 = vadd.f32 %v3425, %v3430
        %v3445 = vadd.f32 %v3426, %v3430
        %v3446 = vadd.f32 %v3427, %v3430
        %v3447 = vadd.f32 %v3428, %v3430
        %v3448 = vmax.f32 %v3432, 0.0
        %v3449 = vmax.f32 %v3433, 0.0
        %v3450 = vmax.f32 %v3434, 0.0
        %v3451 = vmax.f32 %v3435, 0.0
        %v3452 = vmax.f32 %v3436, 0.0
        %v3453 = vmax.f32 %v3437, 0.0
        %v3454 = vmax.f32 %v3438, 0.0
        %v3455 = vmax.f32 %v3439, 0.0
        %v3456 = vmax.f32 %v3440, 0.0
        %v3457 = vmax.f32 %v3441, 0.0
        %v3458 = vmax.f32 %v3442, 0.0
        %v3459 = vmax.f32 %v3443, 0.0
        %v3460 = vmax.f32 %v3444, 0.0
        %v3461 = vmax.f32 %v3445, 0.0
        %v3462 = vmax.f32 %v3446, 0.0
        %v3463 = vmax.f32 %v3447, 0.0
        %3464 = vst [vmem:[%s190] sm:$0xff] %v3448
        %3465 = vst [vmem:[%s190 + $0x8] sm:$0xff] %v3449
        %3466 = vst [vmem:[%s190 + $0x10] sm:$0xff] %v3450
        %3467 = vst [vmem:[%s190 + $0x18] sm:$0xff] %v3451
        %3468 = vst [vmem:[%s190 + $0x20] sm:$0xff] %v3452
        %3469 = vst [vmem:[%s190 + $0x28] sm:$0xff] %v3453
        %3470 = vst [vmem:[%s190 + $0x30] sm:$0xff] %v3454
        %3471 = vst [vmem:[%s190 + $0x38] sm:$0xff] %v3455
        %3472 = vst [vmem:[%s190 + $0x40] sm:$0xff] %v3456
        %3473 = vst [vmem:[%s190 + $0x48] sm:$0xff] %v3457
        %3474 = vst [vmem:[%s190 + $0x50] sm:$0xff] %v3458
        %3475 = vst [vmem:[%s190 + $0x58] sm:$0xff] %v3459
        %3476 = vst [vmem:[%s190 + $0x60] sm:$0xff] %v3460
        %3477 = vst [vmem:[%s190 + $0x68] sm:$0xff] %v3461
        %3478 = vst [vmem:[%s190 + $0x70] sm:$0xff] %v3462
        %3479 = vst [vmem:[%s190 + $0x78] sm:$0xff] %v3463
        %v3480 = vld [vmem:[#allocation2 + $0x80] sm:$0xff]
        %v3481 = vld [vmem:[#allocation2 + $0x88] sm:$0xff]
        %v3482 = vld [vmem:[#allocation2 + $0x90] sm:$0xff]
        %v3483 = vld [vmem:[#allocation2 + $0x98] sm:$0xff]
        %v3484 = vld [vmem:[#allocation2 + $0xa0] sm:$0xff]
        %v3485 = vld [vmem:[#allocation2 + $0xa8] sm:$0xff]
        %v3486 = vld [vmem:[#allocation2 + $0xb0] sm:$0xff]
        %v3487 = vld [vmem:[#allocation2 + $0xb8] sm:$0xff]
        %v3488 = vld [vmem:[#allocation2 + $0xc0] sm:$0xff]
        %v3489 = vld [vmem:[#allocation2 + $0xc8] sm:$0xff]
        %v3490 = vld [vmem:[#allocation2 + $0xd0] sm:$0xff]
        %v3491 = vld [vmem:[#allocation2 + $0xd8] sm:$0xff]
        %v3492 = vld [vmem:[#allocation2 + $0xe0] sm:$0xff]
        %v3493 = vld [vmem:[#allocation2 + $0xe8] sm:$0xff]
        %v3494 = vld [vmem:[#allocation2 + $0xf0] sm:$0xff]
        %v3495 = vld [vmem:[#allocation2 + $0xf8] sm:$0xff]
        %v3496 = vld [vmem:[#allocation2 + $0x100] sm:$0xff]
        %v3497 = vrot.slane %v3480, 4
        %v3498 = vrot.slane %v3481, 4
        %v3499 = vrot.slane %v3482, 4
        %v3500 = vrot.slane %v3483, 4
        %v3501 = vrot.slane %v3484, 4
        %v3502 = vrot.slane %v3485, 4
        %v3503 = vrot.slane %v3486, 4
        %v3504 = vrot.slane %v3487, 4
        %v3505 = vrot.slane %v3488, 4
        %v3506 = vrot.slane %v3489, 4
        %v3507 = vrot.slane %v3490, 4
        %v3508 = vrot.slane %v3491, 4
        %v3509 = vrot.slane %v3492, 4
        %v3510 = vrot.slane %v3493, 4
        %v3511 = vrot.slane %v3494, 4
        %v3512 = vrot.slane %v3495, 4
        %v3513 = vrot.slane %v3496, 4
        %v3514 = vsel %vm2942, %v3512, %v3513
        %v3515 = vsel %vm2942, %v3511, %v3512
        %v3516 = vsel %vm2942, %v3510, %v3511
        %v3517 = vsel %vm2942, %v3509, %v3510
        %v3518 = vsel %vm2942, %v3508, %v3509
        %v3519 = vsel %vm2942, %v3507, %v3508
        %v3520 = vsel %vm2942, %v3506, %v3507
        %v3521 = vsel %vm2942, %v3505, %v3506
        %v3522 = vsel %vm2942, %v3504, %v3505
        %v3523 = vsel %vm2942, %v3503, %v3504
        %v3524 = vsel %vm2942, %v3502, %v3503
        %v3525 = vsel %vm2942, %v3501, %v3502
        %v3526 = vsel %vm2942, %v3500, %v3501
        %v3527 = vsel %vm2942, %v3499, %v3500
        %v3528 = vsel %vm2942, %v3498, %v3499
        %v3529 = vsel %vm2942, %v3497, %v3498
        %3530 = vrot.lane.b32.xlu0 %v3529, 120
        %v3531 = vpop.permute.xlu0 %3530
        %3532 = vrot.lane.b32.xlu0 %v3528, 120
        %v3533 = vpop.permute.xlu0 %3532
        %3534 = vrot.lane.b32.xlu0 %v3527, 120
        %v3535 = vpop.permute.xlu0 %3534
        %3536 = vrot.lane.b32.xlu0 %v3526, 120
        %v3537 = vpop.permute.xlu0 %3536
        %3538 = vrot.lane.b32.xlu0 %v3525, 120
        %v3539 = vpop.permute.xlu0 %3538
        %3540 = vrot.lane.b32.xlu0 %v3524, 120
        %v3541 = vpop.permute.xlu0 %3540
        %3542 = vrot.lane.b32.xlu0 %v3523, 120
        %v3543 = vpop.permute.xlu0 %3542
        %3544 = vrot.lane.b32.xlu0 %v3522, 120
        %v3545 = vpop.permute.xlu0 %3544
        %3546 = vrot.lane.b32.xlu0 %v3521, 120
        %v3547 = vpop.permute.xlu0 %3546
        %3548 = vrot.lane.b32.xlu0 %v3520, 120
        %v3549 = vpop.permute.xlu0 %3548
        %3550 = vrot.lane.b32.xlu0 %v3519, 120
        %v3551 = vpop.permute.xlu0 %3550
        %3552 = vrot.lane.b32.xlu0 %v3518, 120
        %v3553 = vpop.permute.xlu0 %3552
        %3554 = vrot.lane.b32.xlu0 %v3517, 120
        %v3555 = vpop.permute.xlu0 %3554
        %3556 = vrot.lane.b32.xlu0 %v3516, 120
        %v3557 = vpop.permute.xlu0 %3556
        %3558 = vrot.lane.b32.xlu0 %v3515, 120
        %v3559 = vpop.permute.xlu0 %3558
        %3560 = vrot.lane.b32.xlu0 %v3514, 120
        %v3561 = vpop.permute.xlu0 %3560
        %v3562 = vadd.f32 %v3480, %v3531
        %v3563 = vadd.f32 %v3481, %v3533
        %v3564 = vadd.f32 %v3482, %v3535
        %v3565 = vadd.f32 %v3483, %v3537
        %v3566 = vadd.f32 %v3484, %v3539
        %v3567 = vadd.f32 %v3485, %v3541
        %v3568 = vadd.f32 %v3486, %v3543
        %v3569 = vadd.f32 %v3487, %v3545
        %v3570 = vadd.f32 %v3488, %v3547
        %v3571 = vadd.f32 %v3489, %v3549
        %v3572 = vadd.f32 %v3490, %v3551
        %v3573 = vadd.f32 %v3491, %v3553
        %v3574 = vadd.f32 %v3492, %v3555
        %v3575 = vadd.f32 %v3493, %v3557
        %v3576 = vadd.f32 %v3494, %v3559
        %v3577 = vadd.f32 %v3495, %v3561
        %3578 = vrot.lane.b32.xlu0 %v3481, 112
        %v3579 = vpop.permute.xlu0 %3578
        %3580 = vrot.lane.b32.xlu0 %v3482, 112
        %v3581 = vpop.permute.xlu0 %3580
        %3582 = vrot.lane.b32.xlu0 %v3483, 112
        %v3583 = vpop.permute.xlu0 %3582
        %3584 = vrot.lane.b32.xlu0 %v3484, 112
        %v3585 = vpop.permute.xlu0 %3584
        %3586 = vrot.lane.b32.xlu0 %v3485, 112
        %v3587 = vpop.permute.xlu0 %3586
        %3588 = vrot.lane.b32.xlu0 %v3486, 112
        %v3589 = vpop.permute.xlu0 %3588
        %3590 = vrot.lane.b32.xlu0 %v3487, 112
        %v3591 = vpop.permute.xlu0 %3590
        %3592 = vrot.lane.b32.xlu0 %v3488, 112
        %v3593 = vpop.permute.xlu0 %3592
        %3594 = vrot.lane.b32.xlu0 %v3489, 112
        %v3595 = vpop.permute.xlu0 %3594
        %3596 = vrot.lane.b32.xlu0 %v3490, 112
        %v3597 = vpop.permute.xlu0 %3596
        %3598 = vrot.lane.b32.xlu0 %v3491, 112
        %v3599 = vpop.permute.xlu0 %3598
        %3600 = vrot.lane.b32.xlu0 %v3492, 112
        %v3601 = vpop.permute.xlu0 %3600
        %3602 = vrot.lane.b32.xlu0 %v3493, 112
        %v3603 = vpop.permute.xlu0 %3602
        %3604 = vrot.lane.b32.xlu0 %v3494, 112
        %v3605 = vpop.permute.xlu0 %3604
        %3606 = vrot.lane.b32.xlu0 %v3495, 112
        %v3607 = vpop.permute.xlu0 %3606
        %3608 = vrot.lane.b32.xlu0 %v3496, 112
        %v3609 = vpop.permute.xlu0 %3608
        %v3610 = vadd.f32 %v3562, %v3579
        %v3611 = vadd.f32 %v3563, %v3581
        %v3612 = vadd.f32 %v3564, %v3583
        %v3613 = vadd.f32 %v3565, %v3585
        %v3614 = vadd.f32 %v3566, %v3587
        %v3615 = vadd.f32 %v3567, %v3589
        %v3616 = vadd.f32 %v3568, %v3591
        %v3617 = vadd.f32 %v3569, %v3593
        %v3618 = vadd.f32 %v3570, %v3595
        %v3619 = vadd.f32 %v3571, %v3597
        %v3620 = vadd.f32 %v3572, %v3599
        %v3621 = vadd.f32 %v3573, %v3601
        %v3622 = vadd.f32 %v3574, %v3603
        %v3623 = vadd.f32 %v3575, %v3605
        %v3624 = vadd.f32 %v3576, %v3607
        %v3625 = vadd.f32 %v3577, %v3609
        %v3626 = vld [vmem:[#allocation2 + $0x108] sm:$0xff]
        %v3627 = vld [vmem:[#allocation2 + $0x110] sm:$0xff]
        %v3628 = vld [vmem:[#allocation2 + $0x118] sm:$0xff]
        %v3629 = vld [vmem:[#allocation2 + $0x120] sm:$0xff]
        %v3630 = vld [vmem:[#allocation2 + $0x128] sm:$0xff]
        %v3631 = vld [vmem:[#allocation2 + $0x130] sm:$0xff]
        %v3632 = vld [vmem:[#allocation2 + $0x138] sm:$0xff]
        %v3633 = vld [vmem:[#allocation2 + $0x140] sm:$0xff]
        %v3634 = vld [vmem:[#allocation2 + $0x148] sm:$0xff]
        %v3635 = vld [vmem:[#allocation2 + $0x150] sm:$0xff]
        %v3636 = vld [vmem:[#allocation2 + $0x158] sm:$0xff]
        %3637 = vrot.lane.b32.xlu0 %v3492, 104
        %v3638 = vpop.permute.xlu0 %3637
        %3639 = vrot.lane.b32.xlu0 %v3493, 104
        %v3640 = vpop.permute.xlu0 %3639
        %3641 = vrot.lane.b32.xlu0 %v3494, 104
        %v3642 = vpop.permute.xlu0 %3641
        %3643 = vrot.lane.b32.xlu0 %v3495, 104
        %v3644 = vpop.permute.xlu0 %3643
        %3645 = vrot.lane.b32.xlu0 %v3496, 104
        %v3646 = vpop.permute.xlu0 %3645
        %3647 = vrot.lane.b32.xlu0 %v3626, 104
        %v3648 = vpop.permute.xlu0 %3647
        %3649 = vrot.lane.b32.xlu0 %v3627, 104
        %v3650 = vpop.permute.xlu0 %3649
        %3651 = vrot.lane.b32.xlu0 %v3628, 104
        %v3652 = vpop.permute.xlu0 %3651
        %3653 = vrot.lane.b32.xlu0 %v3629, 104
        %v3654 = vpop.permute.xlu0 %3653
        %3655 = vrot.lane.b32.xlu0 %v3630, 104
        %v3656 = vpop.permute.xlu0 %3655
        %3657 = vrot.lane.b32.xlu0 %v3631, 104
        %v3658 = vpop.permute.xlu0 %3657
        %3659 = vrot.lane.b32.xlu0 %v3632, 104
        %v3660 = vpop.permute.xlu0 %3659
        %3661 = vrot.lane.b32.xlu0 %v3633, 104
        %v3662 = vpop.permute.xlu0 %3661
        %3663 = vrot.lane.b32.xlu0 %v3634, 104
        %v3664 = vpop.permute.xlu0 %3663
        %3665 = vrot.lane.b32.xlu0 %v3635, 104
        %v3666 = vpop.permute.xlu0 %3665
        %3667 = vrot.lane.b32.xlu0 %v3636, 104
        %v3668 = vpop.permute.xlu0 %3667
        %v3669 = vadd.f32 %v3610, %v3638
        %v3670 = vadd.f32 %v3611, %v3640
        %v3671 = vadd.f32 %v3612, %v3642
        %v3672 = vadd.f32 %v3613, %v3644
        %v3673 = vadd.f32 %v3614, %v3646
        %v3674 = vadd.f32 %v3615, %v3648
        %v3675 = vadd.f32 %v3616, %v3650
        %v3676 = vadd.f32 %v3617, %v3652
        %v3677 = vadd.f32 %v3618, %v3654
        %v3678 = vadd.f32 %v3619, %v3656
        %v3679 = vadd.f32 %v3620, %v3658
        %v3680 = vadd.f32 %v3621, %v3660
        %v3681 = vadd.f32 %v3622, %v3662
        %v3682 = vadd.f32 %v3623, %v3664
        %v3683 = vadd.f32 %v3624, %v3666
        %v3684 = vadd.f32 %v3625, %v3668
        %v3685 = vld [vmem:[#allocation2 + $0x160] sm:$0xff]
        %v3686 = vrot.slane %v3626, 4
        %v3687 = vrot.slane %v3627, 4
        %v3688 = vrot.slane %v3628, 4
        %v3689 = vrot.slane %v3629, 4
        %v3690 = vrot.slane %v3630, 4
        %v3691 = vrot.slane %v3631, 4
        %v3692 = vrot.slane %v3632, 4
        %v3693 = vrot.slane %v3633, 4
        %v3694 = vrot.slane %v3634, 4
        %v3695 = vrot.slane %v3635, 4
        %v3696 = vrot.slane %v3636, 4
        %v3697 = vrot.slane %v3685, 4
        %v3698 = vsel %vm2942, %v3696, %v3697
        %v3699 = vsel %vm2942, %v3695, %v3696
        %v3700 = vsel %vm2942, %v3694, %v3695
        %v3701 = vsel %vm2942, %v3693, %v3694
        %v3702 = vsel %vm2942, %v3692, %v3693
        %v3703 = vsel %vm2942, %v3691, %v3692
        %v3704 = vsel %vm2942, %v3690, %v3691
        %v3705 = vsel %vm2942, %v3689, %v3690
        %v3706 = vsel %vm2942, %v3688, %v3689
        %v3707 = vsel %vm2942, %v3687, %v3688
        %v3708 = vsel %vm2942, %v3686, %v3687
        %v3709 = vsel %vm2942, %v3513, %v3686
        %3710 = vrot.lane.b32.xlu0 %v3517, 96
        %v3711 = vpop.permute.xlu0 %3710
        %3712 = vrot.lane.b32.xlu0 %v3516, 96
        %v3713 = vpop.permute.xlu0 %3712
        %3714 = vrot.lane.b32.xlu0 %v3515, 96
        %v3715 = vpop.permute.xlu0 %3714
        %3716 = vrot.lane.b32.xlu0 %v3514, 96
        %v3717 = vpop.permute.xlu0 %3716
        %3718 = vrot.lane.b32.xlu0 %v3709, 96
        %v3719 = vpop.permute.xlu0 %3718
        %3720 = vrot.lane.b32.xlu0 %v3708, 96
        %v3721 = vpop.permute.xlu0 %3720
        %3722 = vrot.lane.b32.xlu0 %v3707, 96
        %v3723 = vpop.permute.xlu0 %3722
        %3724 = vrot.lane.b32.xlu0 %v3706, 96
        %v3725 = vpop.permute.xlu0 %3724
        %3726 = vrot.lane.b32.xlu0 %v3705, 96
        %v3727 = vpop.permute.xlu0 %3726
        %3728 = vrot.lane.b32.xlu0 %v3704, 96
        %v3729 = vpop.permute.xlu0 %3728
        %3730 = vrot.lane.b32.xlu0 %v3703, 96
        %v3731 = vpop.permute.xlu0 %3730
        %3732 = vrot.lane.b32.xlu0 %v3702, 96
        %v3733 = vpop.permute.xlu0 %3732
        %3734 = vrot.lane.b32.xlu0 %v3701, 96
        %v3735 = vpop.permute.xlu0 %3734
        %3736 = vrot.lane.b32.xlu0 %v3700, 96
        %v3737 = vpop.permute.xlu0 %3736
        %3738 = vrot.lane.b32.xlu0 %v3699, 96
        %v3739 = vpop.permute.xlu0 %3738
        %3740 = vrot.lane.b32.xlu0 %v3698, 96
        %v3741 = vpop.permute.xlu0 %3740
        %v3742 = vadd.f32 %v3669, %v3711
        %v3743 = vadd.f32 %v3670, %v3713
        %v3744 = vadd.f32 %v3671, %v3715
        %v3745 = vadd.f32 %v3672, %v3717
        %v3746 = vadd.f32 %v3673, %v3719
        %v3747 = vadd.f32 %v3674, %v3721
        %v3748 = vadd.f32 %v3675, %v3723
        %v3749 = vadd.f32 %v3676, %v3725
        %v3750 = vadd.f32 %v3677, %v3727
        %v3751 = vadd.f32 %v3678, %v3729
        %v3752 = vadd.f32 %v3679, %v3731
        %v3753 = vadd.f32 %v3680, %v3733
        %v3754 = vadd.f32 %v3681, %v3735
        %v3755 = vadd.f32 %v3682, %v3737
        %v3756 = vadd.f32 %v3683, %v3739
        %v3757 = vadd.f32 %v3684, %v3741
        %3758 = vrot.lane.b32.xlu0 %v3493, 88
        %v3759 = vpop.permute.xlu0 %3758
        %3760 = vrot.lane.b32.xlu0 %v3494, 88
        %v3761 = vpop.permute.xlu0 %3760
        %3762 = vrot.lane.b32.xlu0 %v3495, 88
        %v3763 = vpop.permute.xlu0 %3762
        %3764 = vrot.lane.b32.xlu0 %v3496, 88
        %v3765 = vpop.permute.xlu0 %3764
        %3766 = vrot.lane.b32.xlu0 %v3626, 88
        %v3767 = vpop.permute.xlu0 %3766
        %3768 = vrot.lane.b32.xlu0 %v3627, 88
        %v3769 = vpop.permute.xlu0 %3768
        %3770 = vrot.lane.b32.xlu0 %v3628, 88
        %v3771 = vpop.permute.xlu0 %3770
        %3772 = vrot.lane.b32.xlu0 %v3629, 88
        %v3773 = vpop.permute.xlu0 %3772
        %3774 = vrot.lane.b32.xlu0 %v3630, 88
        %v3775 = vpop.permute.xlu0 %3774
        %3776 = vrot.lane.b32.xlu0 %v3631, 88
        %v3777 = vpop.permute.xlu0 %3776
        %3778 = vrot.lane.b32.xlu0 %v3632, 88
        %v3779 = vpop.permute.xlu0 %3778
        %3780 = vrot.lane.b32.xlu0 %v3633, 88
        %v3781 = vpop.permute.xlu0 %3780
        %3782 = vrot.lane.b32.xlu0 %v3634, 88
        %v3783 = vpop.permute.xlu0 %3782
        %3784 = vrot.lane.b32.xlu0 %v3635, 88
        %v3785 = vpop.permute.xlu0 %3784
        %3786 = vrot.lane.b32.xlu0 %v3636, 88
        %v3787 = vpop.permute.xlu0 %3786
        %3788 = vrot.lane.b32.xlu0 %v3685, 88
        %v3789 = vpop.permute.xlu0 %3788
        %v3790 = vadd.f32 %v3742, %v3759
        %v3791 = vadd.f32 %v3743, %v3761
        %v3792 = vadd.f32 %v3744, %v3763
        %v3793 = vadd.f32 %v3745, %v3765
        %v3794 = vadd.f32 %v3746, %v3767
        %v3795 = vadd.f32 %v3747, %v3769
        %v3796 = vadd.f32 %v3748, %v3771
        %v3797 = vadd.f32 %v3749, %v3773
        %v3798 = vadd.f32 %v3750, %v3775
        %v3799 = vadd.f32 %v3751, %v3777
        %v3800 = vadd.f32 %v3752, %v3779
        %v3801 = vadd.f32 %v3753, %v3781
        %v3802 = vadd.f32 %v3754, %v3783
        %v3803 = vadd.f32 %v3755, %v3785
        %v3804 = vadd.f32 %v3756, %v3787
        %v3805 = vadd.f32 %v3757, %v3789
        %v3806 = vld [vmem:[#allocation2 + $0x168] sm:$0xff]
        %v3807 = vld [vmem:[#allocation2 + $0x170] sm:$0xff]
        %v3808 = vld [vmem:[#allocation2 + $0x178] sm:$0xff]
        %v3809 = vld [vmem:[#allocation2 + $0x180] sm:$0xff]
        %v3810 = vld [vmem:[#allocation2 + $0x188] sm:$0xff]
        %v3811 = vld [vmem:[#allocation2 + $0x190] sm:$0xff]
        %v3812 = vld [vmem:[#allocation2 + $0x198] sm:$0xff]
        %v3813 = vld [vmem:[#allocation2 + $0x1a0] sm:$0xff]
        %v3814 = vld [vmem:[#allocation2 + $0x1a8] sm:$0xff]
        %v3815 = vld [vmem:[#allocation2 + $0x1b0] sm:$0xff]
        %v3816 = vld [vmem:[#allocation2 + $0x1b8] sm:$0xff]
        %3817 = vrot.lane.b32.xlu0 %v3633, 80
        %v3818 = vpop.permute.xlu0 %3817
        %3819 = vrot.lane.b32.xlu0 %v3634, 80
        %v3820 = vpop.permute.xlu0 %3819
        %3821 = vrot.lane.b32.xlu0 %v3635, 80
        %v3822 = vpop.permute.xlu0 %3821
        %3823 = vrot.lane.b32.xlu0 %v3636, 80
        %v3824 = vpop.permute.xlu0 %3823
        %3825 = vrot.lane.b32.xlu0 %v3685, 80
        %v3826 = vpop.permute.xlu0 %3825
        %3827 = vrot.lane.b32.xlu0 %v3806, 80
        %v3828 = vpop.permute.xlu0 %3827
        %3829 = vrot.lane.b32.xlu0 %v3807, 80
        %v3830 = vpop.permute.xlu0 %3829
        %3831 = vrot.lane.b32.xlu0 %v3808, 80
        %v3832 = vpop.permute.xlu0 %3831
        %3833 = vrot.lane.b32.xlu0 %v3809, 80
        %v3834 = vpop.permute.xlu0 %3833
        %3835 = vrot.lane.b32.xlu0 %v3810, 80
        %v3836 = vpop.permute.xlu0 %3835
        %3837 = vrot.lane.b32.xlu0 %v3811, 80
        %v3838 = vpop.permute.xlu0 %3837
        %3839 = vrot.lane.b32.xlu0 %v3812, 80
        %v3840 = vpop.permute.xlu0 %3839
        %3841 = vrot.lane.b32.xlu0 %v3813, 80
        %v3842 = vpop.permute.xlu0 %3841
        %3843 = vrot.lane.b32.xlu0 %v3814, 80
        %v3844 = vpop.permute.xlu0 %3843
        %3845 = vrot.lane.b32.xlu0 %v3815, 80
        %v3846 = vpop.permute.xlu0 %3845
        %3847 = vrot.lane.b32.xlu0 %v3816, 80
        %v3848 = vpop.permute.xlu0 %3847
        %v3849 = vadd.f32 %v3790, %v3818
        %v3850 = vadd.f32 %v3791, %v3820
        %v3851 = vadd.f32 %v3792, %v3822
        %v3852 = vadd.f32 %v3793, %v3824
        %v3853 = vadd.f32 %v3794, %v3826
        %v3854 = vadd.f32 %v3795, %v3828
        %v3855 = vadd.f32 %v3796, %v3830
        %v3856 = vadd.f32 %v3797, %v3832
        %v3857 = vadd.f32 %v3798, %v3834
        %v3858 = vadd.f32 %v3799, %v3836
        %v3859 = vadd.f32 %v3800, %v3838
        %v3860 = vadd.f32 %v3801, %v3840
        %v3861 = vadd.f32 %v3802, %v3842
        %v3862 = vadd.f32 %v3803, %v3844
        %v3863 = vadd.f32 %v3804, %v3846
        %v3864 = vadd.f32 %v3805, %v3848
        %v3865 = vld [vmem:[#allocation2 + $0x1c0] sm:$0xff]
        %v3866 = vrot.slane %v3806, 4
        %v3867 = vrot.slane %v3807, 4
        %v3868 = vrot.slane %v3808, 4
        %v3869 = vrot.slane %v3809, 4
        %v3870 = vrot.slane %v3810, 4
        %v3871 = vrot.slane %v3811, 4
        %v3872 = vrot.slane %v3812, 4
        %v3873 = vrot.slane %v3813, 4
        %v3874 = vrot.slane %v3814, 4
        %v3875 = vrot.slane %v3815, 4
        %v3876 = vrot.slane %v3816, 4
        %v3877 = vrot.slane %v3865, 4
        %v3878 = vsel %vm2942, %v3876, %v3877
        %v3879 = vsel %vm2942, %v3875, %v3876
        %v3880 = vsel %vm2942, %v3874, %v3875
        %v3881 = vsel %vm2942, %v3873, %v3874
        %v3882 = vsel %vm2942, %v3872, %v3873
        %v3883 = vsel %vm2942, %v3871, %v3872
        %v3884 = vsel %vm2942, %v3870, %v3871
        %v3885 = vsel %vm2942, %v3869, %v3870
        %v3886 = vsel %vm2942, %v3868, %v3869
        %v3887 = vsel %vm2942, %v3867, %v3868
        %v3888 = vsel %vm2942, %v3866, %v3867
        %v3889 = vsel %vm2942, %v3697, %v3866
        %3890 = vrot.lane.b32.xlu0 %v3701, 72
        %v3891 = vpop.permute.xlu0 %3890
        %3892 = vrot.lane.b32.xlu0 %v3700, 72
        %v3893 = vpop.permute.xlu0 %3892
        %3894 = vrot.lane.b32.xlu0 %v3699, 72
        %v3895 = vpop.permute.xlu0 %3894
        %3896 = vrot.lane.b32.xlu0 %v3698, 72
        %v3897 = vpop.permute.xlu0 %3896
        %3898 = vrot.lane.b32.xlu0 %v3889, 72
        %v3899 = vpop.permute.xlu0 %3898
        %3900 = vrot.lane.b32.xlu0 %v3888, 72
        %v3901 = vpop.permute.xlu0 %3900
        %3902 = vrot.lane.b32.xlu0 %v3887, 72
        %v3903 = vpop.permute.xlu0 %3902
        %3904 = vrot.lane.b32.xlu0 %v3886, 72
        %v3905 = vpop.permute.xlu0 %3904
        %3906 = vrot.lane.b32.xlu0 %v3885, 72
        %v3907 = vpop.permute.xlu0 %3906
        %3908 = vrot.lane.b32.xlu0 %v3884, 72
        %v3909 = vpop.permute.xlu0 %3908
        %3910 = vrot.lane.b32.xlu0 %v3883, 72
        %v3911 = vpop.permute.xlu0 %3910
        %3912 = vrot.lane.b32.xlu0 %v3882, 72
        %v3913 = vpop.permute.xlu0 %3912
        %3914 = vrot.lane.b32.xlu0 %v3881, 72
        %v3915 = vpop.permute.xlu0 %3914
        %3916 = vrot.lane.b32.xlu0 %v3880, 72
        %v3917 = vpop.permute.xlu0 %3916
        %3918 = vrot.lane.b32.xlu0 %v3879, 72
        %v3919 = vpop.permute.xlu0 %3918
        %3920 = vrot.lane.b32.xlu0 %v3878, 72
        %v3921 = vpop.permute.xlu0 %3920
        %v3922 = vadd.f32 %v3849, %v3891
        %v3923 = vadd.f32 %v3850, %v3893
        %v3924 = vadd.f32 %v3851, %v3895
        %v3925 = vadd.f32 %v3852, %v3897
        %v3926 = vadd.f32 %v3853, %v3899
        %v3927 = vadd.f32 %v3854, %v3901
        %v3928 = vadd.f32 %v3855, %v3903
        %v3929 = vadd.f32 %v3856, %v3905
        %v3930 = vadd.f32 %v3857, %v3907
        %v3931 = vadd.f32 %v3858, %v3909
        %v3932 = vadd.f32 %v3859, %v3911
        %v3933 = vadd.f32 %v3860, %v3913
        %v3934 = vadd.f32 %v3861, %v3915
        %v3935 = vadd.f32 %v3862, %v3917
        %v3936 = vadd.f32 %v3863, %v3919
        %v3937 = vadd.f32 %v3864, %v3921
        %3938 = vrot.lane.b32.xlu0 %v3634, 64
        %v3939 = vpop.permute.xlu0 %3938
        %3940 = vrot.lane.b32.xlu0 %v3635, 64
        %v3941 = vpop.permute.xlu0 %3940
        %3942 = vrot.lane.b32.xlu0 %v3636, 64
        %v3943 = vpop.permute.xlu0 %3942
        %3944 = vrot.lane.b32.xlu0 %v3685, 64
        %v3945 = vpop.permute.xlu0 %3944
        %3946 = vrot.lane.b32.xlu0 %v3806, 64
        %v3947 = vpop.permute.xlu0 %3946
        %3948 = vrot.lane.b32.xlu0 %v3807, 64
        %v3949 = vpop.permute.xlu0 %3948
        %3950 = vrot.lane.b32.xlu0 %v3808, 64
        %v3951 = vpop.permute.xlu0 %3950
        %3952 = vrot.lane.b32.xlu0 %v3809, 64
        %v3953 = vpop.permute.xlu0 %3952
        %3954 = vrot.lane.b32.xlu0 %v3810, 64
        %v3955 = vpop.permute.xlu0 %3954
        %3956 = vrot.lane.b32.xlu0 %v3811, 64
        %v3957 = vpop.permute.xlu0 %3956
        %3958 = vrot.lane.b32.xlu0 %v3812, 64
        %v3959 = vpop.permute.xlu0 %3958
        %3960 = vrot.lane.b32.xlu0 %v3813, 64
        %v3961 = vpop.permute.xlu0 %3960
        %3962 = vrot.lane.b32.xlu0 %v3814, 64
        %v3963 = vpop.permute.xlu0 %3962
        %3964 = vrot.lane.b32.xlu0 %v3815, 64
        %v3965 = vpop.permute.xlu0 %3964
        %3966 = vrot.lane.b32.xlu0 %v3816, 64
        %v3967 = vpop.permute.xlu0 %3966
        %3968 = vrot.lane.b32.xlu0 %v3865, 64
        %v3969 = vpop.permute.xlu0 %3968
        %v3970 = vadd.f32 %v3922, %v3939
        %v3971 = vadd.f32 %v3923, %v3941
        %v3972 = vadd.f32 %v3924, %v3943
        %v3973 = vadd.f32 %v3925, %v3945
        %v3974 = vadd.f32 %v3926, %v3947
        %v3975 = vadd.f32 %v3927, %v3949
        %v3976 = vadd.f32 %v3928, %v3951
        %v3977 = vadd.f32 %v3929, %v3953
        %v3978 = vadd.f32 %v3930, %v3955
        %v3979 = vadd.f32 %v3931, %v3957
        %v3980 = vadd.f32 %v3932, %v3959
        %v3981 = vadd.f32 %v3933, %v3961
        %v3982 = vadd.f32 %v3934, %v3963
        %v3983 = vadd.f32 %v3935, %v3965
        %v3984 = vadd.f32 %v3936, %v3967
        %v3985 = vadd.f32 %v3937, %v3969
        %v3986 = vadd.f32 %v3970, %v3430
        %v3987 = vadd.f32 %v3971, %v3430
        %v3988 = vadd.f32 %v3972, %v3430
        %v3989 = vadd.f32 %v3973, %v3430
        %v3990 = vadd.f32 %v3974, %v3430
        %v3991 = vadd.f32 %v3975, %v3430
        %v3992 = vadd.f32 %v3976, %v3430
        %v3993 = vadd.f32 %v3977, %v3430
        %v3994 = vadd.f32 %v3978, %v3430
        %v3995 = vadd.f32 %v3979, %v3430
        %v3996 = vadd.f32 %v3980, %v3430
        %v3997 = vadd.f32 %v3981, %v3430
        %v3998 = vadd.f32 %v3982, %v3430
        %v3999 = vadd.f32 %v3983, %v3430
        %v4000 = vadd.f32 %v3984, %v3430
        %v4001 = vadd.f32 %v3985, %v3430
        %v4002 = vmax.f32 %v3986, 0.0
        %v4003 = vmax.f32 %v3987, 0.0
        %v4004 = vmax.f32 %v3988, 0.0
        %v4005 = vmax.f32 %v3989, 0.0
        %v4006 = vmax.f32 %v3990, 0.0
        %v4007 = vmax.f32 %v3991, 0.0
        %v4008 = vmax.f32 %v3992, 0.0
        %v4009 = vmax.f32 %v3993, 0.0
        %v4010 = vmax.f32 %v3994, 0.0
        %v4011 = vmax.f32 %v3995, 0.0
        %v4012 = vmax.f32 %v3996, 0.0
        %v4013 = vmax.f32 %v3997, 0.0
        %v4014 = vmax.f32 %v3998, 0.0
        %v4015 = vmax.f32 %v3999, 0.0
        %v4016 = vmax.f32 %v4000, 0.0
        %v4017 = vmax.f32 %v4001, 0.0
        %4018 = vst [vmem:[%s190 + $0x80] sm:$0xff] %v4002
        %4019 = vst [vmem:[%s190 + $0x88] sm:$0xff] %v4003
        %4020 = vst [vmem:[%s190 + $0x90] sm:$0xff] %v4004
        %4021 = vst [vmem:[%s190 + $0x98] sm:$0xff] %v4005
        %4022 = vst [vmem:[%s190 + $0xa0] sm:$0xff] %v4006
        %4023 = vst [vmem:[%s190 + $0xa8] sm:$0xff] %v4007
        %4024 = vst [vmem:[%s190 + $0xb0] sm:$0xff] %v4008
        %4025 = vst [vmem:[%s190 + $0xb8] sm:$0xff] %v4009
        %4026 = vst [vmem:[%s190 + $0xc0] sm:$0xff] %v4010
        %4027 = vst [vmem:[%s190 + $0xc8] sm:$0xff] %v4011
        %4028 = vst [vmem:[%s190 + $0xd0] sm:$0xff] %v4012
        %4029 = vst [vmem:[%s190 + $0xd8] sm:$0xff] %v4013
        %4030 = vst [vmem:[%s190 + $0xe0] sm:$0xff] %v4014
        %4031 = vst [vmem:[%s190 + $0xe8] sm:$0xff] %v4015
        %4032 = vst [vmem:[%s190 + $0xf0] sm:$0xff] %v4016
        %4033 = vst [vmem:[%s190 + $0xf8] sm:$0xff] %v4017
        %v4034 = vld [vmem:[#allocation2 + $0x100] sm:$0xff]
        %v4035 = vld [vmem:[#allocation2 + $0x108] sm:$0xff]
        %v4036 = vld [vmem:[#allocation2 + $0x110] sm:$0xff]
        %v4037 = vld [vmem:[#allocation2 + $0x118] sm:$0xff]
        %v4038 = vld [vmem:[#allocation2 + $0x120] sm:$0xff]
        %v4039 = vld [vmem:[#allocation2 + $0x128] sm:$0xff]
        %v4040 = vld [vmem:[#allocation2 + $0x130] sm:$0xff]
        %v4041 = vld [vmem:[#allocation2 + $0x138] sm:$0xff]
        %v4042 = vld [vmem:[#allocation2 + $0x140] sm:$0xff]
        %v4043 = vld [vmem:[#allocation2 + $0x148] sm:$0xff]
        %v4044 = vld [vmem:[#allocation2 + $0x150] sm:$0xff]
        %v4045 = vld [vmem:[#allocation2 + $0x158] sm:$0xff]
        %v4046 = vld [vmem:[#allocation2 + $0x160] sm:$0xff]
        %v4047 = vld [vmem:[#allocation2 + $0x168] sm:$0xff]
        %v4048 = vld [vmem:[#allocation2 + $0x170] sm:$0xff]
        %v4049 = vld [vmem:[#allocation2 + $0x178] sm:$0xff]
        %v4050 = vld [vmem:[#allocation2 + $0x180] sm:$0xff]
        %v4051 = vrot.slane %v4034, 4
        %v4052 = vrot.slane %v4035, 4
        %v4053 = vrot.slane %v4036, 4
        %v4054 = vrot.slane %v4037, 4
        %v4055 = vrot.slane %v4038, 4
        %v4056 = vrot.slane %v4039, 4
        %v4057 = vrot.slane %v4040, 4
        %v4058 = vrot.slane %v4041, 4
        %v4059 = vrot.slane %v4042, 4
        %v4060 = vrot.slane %v4043, 4
        %v4061 = vrot.slane %v4044, 4
        %v4062 = vrot.slane %v4045, 4
        %v4063 = vrot.slane %v4046, 4
        %v4064 = vrot.slane %v4047, 4
        %v4065 = vrot.slane %v4048, 4
        %v4066 = vrot.slane %v4049, 4
        %v4067 = vrot.slane %v4050, 4
        %v4068 = vsel %vm2942, %v4066, %v4067
        %v4069 = vsel %vm2942, %v4065, %v4066
        %v4070 = vsel %vm2942, %v4064, %v4065
        %v4071 = vsel %vm2942, %v4063, %v4064
        %v4072 = vsel %vm2942, %v4062, %v4063
        %v4073 = vsel %vm2942, %v4061, %v4062
        %v4074 = vsel %vm2942, %v4060, %v4061
        %v4075 = vsel %vm2942, %v4059, %v4060
        %v4076 = vsel %vm2942, %v4058, %v4059
        %v4077 = vsel %vm2942, %v4057, %v4058
        %v4078 = vsel %vm2942, %v4056, %v4057
        %v4079 = vsel %vm2942, %v4055, %v4056
        %v4080 = vsel %vm2942, %v4054, %v4055
        %v4081 = vsel %vm2942, %v4053, %v4054
        %v4082 = vsel %vm2942, %v4052, %v4053
        %v4083 = vsel %vm2942, %v4051, %v4052
        %4084 = vrot.lane.b32.xlu0 %v4083, 120
        %v4085 = vpop.permute.xlu0 %4084
        %4086 = vrot.lane.b32.xlu0 %v4082, 120
        %v4087 = vpop.permute.xlu0 %4086
        %4088 = vrot.lane.b32.xlu0 %v4081, 120
        %v4089 = vpop.permute.xlu0 %4088
        %4090 = vrot.lane.b32.xlu0 %v4080, 120
        %v4091 = vpop.permute.xlu0 %4090
        %4092 = vrot.lane.b32.xlu0 %v4079, 120
        %v4093 = vpop.permute.xlu0 %4092
        %4094 = vrot.lane.b32.xlu0 %v4078, 120
        %v4095 = vpop.permute.xlu0 %4094
        %4096 = vrot.lane.b32.xlu0 %v4077, 120
        %v4097 = vpop.permute.xlu0 %4096
        %4098 = vrot.lane.b32.xlu0 %v4076, 120
        %v4099 = vpop.permute.xlu0 %4098
        %4100 = vrot.lane.b32.xlu0 %v4075, 120
        %v4101 = vpop.permute.xlu0 %4100
        %4102 = vrot.lane.b32.xlu0 %v4074, 120
        %v4103 = vpop.permute.xlu0 %4102
        %4104 = vrot.lane.b32.xlu0 %v4073, 120
        %v4105 = vpop.permute.xlu0 %4104
        %4106 = vrot.lane.b32.xlu0 %v4072, 120
        %v4107 = vpop.permute.xlu0 %4106
        %4108 = vrot.lane.b32.xlu0 %v4071, 120
        %v4109 = vpop.permute.xlu0 %4108
        %4110 = vrot.lane.b32.xlu0 %v4070, 120
        %v4111 = vpop.permute.xlu0 %4110
        %4112 = vrot.lane.b32.xlu0 %v4069, 120
        %v4113 = vpop.permute.xlu0 %4112
        %4114 = vrot.lane.b32.xlu0 %v4068, 120
        %v4115 = vpop.permute.xlu0 %4114
        %v4116 = vadd.f32 %v4034, %v4085
        %v4117 = vadd.f32 %v4035, %v4087
        %v4118 = vadd.f32 %v4036, %v4089
        %v4119 = vadd.f32 %v4037, %v4091
        %v4120 = vadd.f32 %v4038, %v4093
        %v4121 = vadd.f32 %v4039, %v4095
        %v4122 = vadd.f32 %v4040, %v4097
        %v4123 = vadd.f32 %v4041, %v4099
        %v4124 = vadd.f32 %v4042, %v4101
        %v4125 = vadd.f32 %v4043, %v4103
        %v4126 = vadd.f32 %v4044, %v4105
        %v4127 = vadd.f32 %v4045, %v4107
        %v4128 = vadd.f32 %v4046, %v4109
        %v4129 = vadd.f32 %v4047, %v4111
        %v4130 = vadd.f32 %v4048, %v4113
        %v4131 = vadd.f32 %v4049, %v4115
        %4132 = vrot.lane.b32.xlu0 %v4035, 112
        %v4133 = vpop.permute.xlu0 %4132
        %4134 = vrot.lane.b32.xlu0 %v4036, 112
        %v4135 = vpop.permute.xlu0 %4134
        %4136 = vrot.lane.b32.xlu0 %v4037, 112
        %v4137 = vpop.permute.xlu0 %4136
        %4138 = vrot.lane.b32.xlu0 %v4038, 112
        %v4139 = vpop.permute.xlu0 %4138
        %4140 = vrot.lane.b32.xlu0 %v4039, 112
        %v4141 = vpop.permute.xlu0 %4140
        %4142 = vrot.lane.b32.xlu0 %v4040, 112
        %v4143 = vpop.permute.xlu0 %4142
        %4144 = vrot.lane.b32.xlu0 %v4041, 112
        %v4145 = vpop.permute.xlu0 %4144
        %4146 = vrot.lane.b32.xlu0 %v4042, 112
        %v4147 = vpop.permute.xlu0 %4146
        %4148 = vrot.lane.b32.xlu0 %v4043, 112
        %v4149 = vpop.permute.xlu0 %4148
        %4150 = vrot.lane.b32.xlu0 %v4044, 112
        %v4151 = vpop.permute.xlu0 %4150
        %4152 = vrot.lane.b32.xlu0 %v4045, 112
        %v4153 = vpop.permute.xlu0 %4152
        %4154 = vrot.lane.b32.xlu0 %v4046, 112
        %v4155 = vpop.permute.xlu0 %4154
        %4156 = vrot.lane.b32.xlu0 %v4047, 112
        %v4157 = vpop.permute.xlu0 %4156
        %4158 = vrot.lane.b32.xlu0 %v4048, 112
        %v4159 = vpop.permute.xlu0 %4158
        %4160 = vrot.lane.b32.xlu0 %v4049, 112
        %v4161 = vpop.permute.xlu0 %4160
        %4162 = vrot.lane.b32.xlu0 %v4050, 112
        %v4163 = vpop.permute.xlu0 %4162
        %v4164 = vadd.f32 %v4116, %v4133
        %v4165 = vadd.f32 %v4117, %v4135
        %v4166 = vadd.f32 %v4118, %v4137
        %v4167 = vadd.f32 %v4119, %v4139
        %v4168 = vadd.f32 %v4120, %v4141
        %v4169 = vadd.f32 %v4121, %v4143
        %v4170 = vadd.f32 %v4122, %v4145
        %v4171 = vadd.f32 %v4123, %v4147
        %v4172 = vadd.f32 %v4124, %v4149
        %v4173 = vadd.f32 %v4125, %v4151
        %v4174 = vadd.f32 %v4126, %v4153
        %v4175 = vadd.f32 %v4127, %v4155
        %v4176 = vadd.f32 %v4128, %v4157
        %v4177 = vadd.f32 %v4129, %v4159
        %v4178 = vadd.f32 %v4130, %v4161
        %v4179 = vadd.f32 %v4131, %v4163
        %v4180 = vld [vmem:[#allocation2 + $0x188] sm:$0xff]
        %v4181 = vld [vmem:[#allocation2 + $0x190] sm:$0xff]
        %v4182 = vld [vmem:[#allocation2 + $0x198] sm:$0xff]
        %v4183 = vld [vmem:[#allocation2 + $0x1a0] sm:$0xff]
        %v4184 = vld [vmem:[#allocation2 + $0x1a8] sm:$0xff]
        %v4185 = vld [vmem:[#allocation2 + $0x1b0] sm:$0xff]
        %v4186 = vld [vmem:[#allocation2 + $0x1b8] sm:$0xff]
        %v4187 = vld [vmem:[#allocation2 + $0x1c0] sm:$0xff]
        %v4188 = vld [vmem:[#allocation2 + $0x1c8] sm:$0xff]
        %v4189 = vld [vmem:[#allocation2 + $0x1d0] sm:$0xff]
        %v4190 = vld [vmem:[#allocation2 + $0x1d8] sm:$0xff]
        %4191 = vrot.lane.b32.xlu0 %v4046, 104
        %v4192 = vpop.permute.xlu0 %4191
        %4193 = vrot.lane.b32.xlu0 %v4047, 104
        %v4194 = vpop.permute.xlu0 %4193
        %4195 = vrot.lane.b32.xlu0 %v4048, 104
        %v4196 = vpop.permute.xlu0 %4195
        %4197 = vrot.lane.b32.xlu0 %v4049, 104
        %v4198 = vpop.permute.xlu0 %4197
        %4199 = vrot.lane.b32.xlu0 %v4050, 104
        %v4200 = vpop.permute.xlu0 %4199
        %4201 = vrot.lane.b32.xlu0 %v4180, 104
        %v4202 = vpop.permute.xlu0 %4201
        %4203 = vrot.lane.b32.xlu0 %v4181, 104
        %v4204 = vpop.permute.xlu0 %4203
        %4205 = vrot.lane.b32.xlu0 %v4182, 104
        %v4206 = vpop.permute.xlu0 %4205
        %4207 = vrot.lane.b32.xlu0 %v4183, 104
        %v4208 = vpop.permute.xlu0 %4207
        %4209 = vrot.lane.b32.xlu0 %v4184, 104
        %v4210 = vpop.permute.xlu0 %4209
        %4211 = vrot.lane.b32.xlu0 %v4185, 104
        %v4212 = vpop.permute.xlu0 %4211
        %4213 = vrot.lane.b32.xlu0 %v4186, 104
        %v4214 = vpop.permute.xlu0 %4213
        %4215 = vrot.lane.b32.xlu0 %v4187, 104
        %v4216 = vpop.permute.xlu0 %4215
        %4217 = vrot.lane.b32.xlu0 %v4188, 104
        %v4218 = vpop.permute.xlu0 %4217
        %4219 = vrot.lane.b32.xlu0 %v4189, 104
        %v4220 = vpop.permute.xlu0 %4219
        %4221 = vrot.lane.b32.xlu0 %v4190, 104
        %v4222 = vpop.permute.xlu0 %4221
        %v4223 = vadd.f32 %v4164, %v4192
        %v4224 = vadd.f32 %v4165, %v4194
        %v4225 = vadd.f32 %v4166, %v4196
        %v4226 = vadd.f32 %v4167, %v4198
        %v4227 = vadd.f32 %v4168, %v4200
        %v4228 = vadd.f32 %v4169, %v4202
        %v4229 = vadd.f32 %v4170, %v4204
        %v4230 = vadd.f32 %v4171, %v4206
        %v4231 = vadd.f32 %v4172, %v4208
        %v4232 = vadd.f32 %v4173, %v4210
        %v4233 = vadd.f32 %v4174, %v4212
        %v4234 = vadd.f32 %v4175, %v4214
        %v4235 = vadd.f32 %v4176, %v4216
        %v4236 = vadd.f32 %v4177, %v4218
        %v4237 = vadd.f32 %v4178, %v4220
        %v4238 = vadd.f32 %v4179, %v4222
        %v4239 = vld [vmem:[#allocation2 + $0x1e0] sm:$0xff]
        %v4240 = vrot.slane %v4180, 4
        %v4241 = vrot.slane %v4181, 4
        %v4242 = vrot.slane %v4182, 4
        %v4243 = vrot.slane %v4183, 4
        %v4244 = vrot.slane %v4184, 4
        %v4245 = vrot.slane %v4185, 4
        %v4246 = vrot.slane %v4186, 4
        %v4247 = vrot.slane %v4187, 4
        %v4248 = vrot.slane %v4188, 4
        %v4249 = vrot.slane %v4189, 4
        %v4250 = vrot.slane %v4190, 4
        %v4251 = vrot.slane %v4239, 4
        %v4252 = vsel %vm2942, %v4250, %v4251
        %v4253 = vsel %vm2942, %v4249, %v4250
        %v4254 = vsel %vm2942, %v4248, %v4249
        %v4255 = vsel %vm2942, %v4247, %v4248
        %v4256 = vsel %vm2942, %v4246, %v4247
        %v4257 = vsel %vm2942, %v4245, %v4246
        %v4258 = vsel %vm2942, %v4244, %v4245
        %v4259 = vsel %vm2942, %v4243, %v4244
        %v4260 = vsel %vm2942, %v4242, %v4243
        %v4261 = vsel %vm2942, %v4241, %v4242
        %v4262 = vsel %vm2942, %v4240, %v4241
        %v4263 = vsel %vm2942, %v4067, %v4240
        %4264 = vrot.lane.b32.xlu0 %v4071, 96
        %v4265 = vpop.permute.xlu0 %4264
        %4266 = vrot.lane.b32.xlu0 %v4070, 96
        %v4267 = vpop.permute.xlu0 %4266
        %4268 = vrot.lane.b32.xlu0 %v4069, 96
        %v4269 = vpop.permute.xlu0 %4268
        %4270 = vrot.lane.b32.xlu0 %v4068, 96
        %v4271 = vpop.permute.xlu0 %4270
        %4272 = vrot.lane.b32.xlu0 %v4263, 96
        %v4273 = vpop.permute.xlu0 %4272
        %4274 = vrot.lane.b32.xlu0 %v4262, 96
        %v4275 = vpop.permute.xlu0 %4274
        %4276 = vrot.lane.b32.xlu0 %v4261, 96
        %v4277 = vpop.permute.xlu0 %4276
        %4278 = vrot.lane.b32.xlu0 %v4260, 96
        %v4279 = vpop.permute.xlu0 %4278
        %4280 = vrot.lane.b32.xlu0 %v4259, 96
        %v4281 = vpop.permute.xlu0 %4280
        %4282 = vrot.lane.b32.xlu0 %v4258, 96
        %v4283 = vpop.permute.xlu0 %4282
        %4284 = vrot.lane.b32.xlu0 %v4257, 96
        %v4285 = vpop.permute.xlu0 %4284
        %4286 = vrot.lane.b32.xlu0 %v4256, 96
        %v4287 = vpop.permute.xlu0 %4286
        %4288 = vrot.lane.b32.xlu0 %v4255, 96
        %v4289 = vpop.permute.xlu0 %4288
        %4290 = vrot.lane.b32.xlu0 %v4254, 96
        %v4291 = vpop.permute.xlu0 %4290
        %4292 = vrot.lane.b32.xlu0 %v4253, 96
        %v4293 = vpop.permute.xlu0 %4292
        %4294 = vrot.lane.b32.xlu0 %v4252, 96
        %v4295 = vpop.permute.xlu0 %4294
        %v4296 = vadd.f32 %v4223, %v4265
        %v4297 = vadd.f32 %v4224, %v4267
        %v4298 = vadd.f32 %v4225, %v4269
        %v4299 = vadd.f32 %v4226, %v4271
        %v4300 = vadd.f32 %v4227, %v4273
        %v4301 = vadd.f32 %v4228, %v4275
        %v4302 = vadd.f32 %v4229, %v4277
        %v4303 = vadd.f32 %v4230, %v4279
        %v4304 = vadd.f32 %v4231, %v4281
        %v4305 = vadd.f32 %v4232, %v4283
        %v4306 = vadd.f32 %v4233, %v4285
        %v4307 = vadd.f32 %v4234, %v4287
        %v4308 = vadd.f32 %v4235, %v4289
        %v4309 = vadd.f32 %v4236, %v4291
        %v4310 = vadd.f32 %v4237, %v4293
        %v4311 = vadd.f32 %v4238, %v4295
        %4312 = vrot.lane.b32.xlu0 %v4047, 88
        %v4313 = vpop.permute.xlu0 %4312
        %4314 = vrot.lane.b32.xlu0 %v4048, 88
        %v4315 = vpop.permute.xlu0 %4314
        %4316 = vrot.lane.b32.xlu0 %v4049, 88
        %v4317 = vpop.permute.xlu0 %4316
        %4318 = vrot.lane.b32.xlu0 %v4050, 88
        %v4319 = vpop.permute.xlu0 %4318
        %4320 = vrot.lane.b32.xlu0 %v4180, 88
        %v4321 = vpop.permute.xlu0 %4320
        %4322 = vrot.lane.b32.xlu0 %v4181, 88
        %v4323 = vpop.permute.xlu0 %4322
        %4324 = vrot.lane.b32.xlu0 %v4182, 88
        %v4325 = vpop.permute.xlu0 %4324
        %4326 = vrot.lane.b32.xlu0 %v4183, 88
        %v4327 = vpop.permute.xlu0 %4326
        %4328 = vrot.lane.b32.xlu0 %v4184, 88
        %v4329 = vpop.permute.xlu0 %4328
        %4330 = vrot.lane.b32.xlu0 %v4185, 88
        %v4331 = vpop.permute.xlu0 %4330
        %4332 = vrot.lane.b32.xlu0 %v4186, 88
        %v4333 = vpop.permute.xlu0 %4332
        %4334 = vrot.lane.b32.xlu0 %v4187, 88
        %v4335 = vpop.permute.xlu0 %4334
        %4336 = vrot.lane.b32.xlu0 %v4188, 88
        %v4337 = vpop.permute.xlu0 %4336
        %4338 = vrot.lane.b32.xlu0 %v4189, 88
        %v4339 = vpop.permute.xlu0 %4338
        %4340 = vrot.lane.b32.xlu0 %v4190, 88
        %v4341 = vpop.permute.xlu0 %4340
        %4342 = vrot.lane.b32.xlu0 %v4239, 88
        %v4343 = vpop.permute.xlu0 %4342
        %v4344 = vadd.f32 %v4296, %v4313
        %v4345 = vadd.f32 %v4297, %v4315
        %v4346 = vadd.f32 %v4298, %v4317
        %v4347 = vadd.f32 %v4299, %v4319
        %v4348 = vadd.f32 %v4300, %v4321
        %v4349 = vadd.f32 %v4301, %v4323
        %v4350 = vadd.f32 %v4302, %v4325
        %v4351 = vadd.f32 %v4303, %v4327
        %v4352 = vadd.f32 %v4304, %v4329
        %v4353 = vadd.f32 %v4305, %v4331
        %v4354 = vadd.f32 %v4306, %v4333
        %v4355 = vadd.f32 %v4307, %v4335
        %v4356 = vadd.f32 %v4308, %v4337
        %v4357 = vadd.f32 %v4309, %v4339
        %v4358 = vadd.f32 %v4310, %v4341
        %v4359 = vadd.f32 %v4311, %v4343
        %v4360 = vld [vmem:[#allocation2 + $0x1e8] sm:$0xff]
        %v4361 = vld [vmem:[#allocation2 + $0x1f0] sm:$0xff]
        %v4362 = vld [vmem:[#allocation2 + $0x1f8] sm:$0xff]
        %v4363 = vld [vmem:[#allocation2 + $0x200] sm:$0xff]
        %v4364 = vld [vmem:[#allocation2 + $0x208] sm:$0xff]
        %v4365 = vld [vmem:[#allocation2 + $0x210] sm:$0xff]
        %v4366 = vld [vmem:[#allocation2 + $0x218] sm:$0xff]
        %v4367 = vld [vmem:[#allocation2 + $0x220] sm:$0xff]
        %v4368 = vld [vmem:[#allocation2 + $0x228] sm:$0xff]
        %v4369 = vld [vmem:[#allocation2 + $0x230] sm:$0xff]
        %v4370 = vld [vmem:[#allocation2 + $0x238] sm:$0xff]
        %4371 = vrot.lane.b32.xlu0 %v4187, 80
        %v4372 = vpop.permute.xlu0 %4371
        %4373 = vrot.lane.b32.xlu0 %v4188, 80
        %v4374 = vpop.permute.xlu0 %4373
        %4375 = vrot.lane.b32.xlu0 %v4189, 80
        %v4376 = vpop.permute.xlu0 %4375
        %4377 = vrot.lane.b32.xlu0 %v4190, 80
        %v4378 = vpop.permute.xlu0 %4377
        %4379 = vrot.lane.b32.xlu0 %v4239, 80
        %v4380 = vpop.permute.xlu0 %4379
        %4381 = vrot.lane.b32.xlu0 %v4360, 80
        %v4382 = vpop.permute.xlu0 %4381
        %4383 = vrot.lane.b32.xlu0 %v4361, 80
        %v4384 = vpop.permute.xlu0 %4383
        %4385 = vrot.lane.b32.xlu0 %v4362, 80
        %v4386 = vpop.permute.xlu0 %4385
        %4387 = vrot.lane.b32.xlu0 %v4363, 80
        %v4388 = vpop.permute.xlu0 %4387
        %4389 = vrot.lane.b32.xlu0 %v4364, 80
        %v4390 = vpop.permute.xlu0 %4389
        %4391 = vrot.lane.b32.xlu0 %v4365, 80
        %v4392 = vpop.permute.xlu0 %4391
        %4393 = vrot.lane.b32.xlu0 %v4366, 80
        %v4394 = vpop.permute.xlu0 %4393
        %4395 = vrot.lane.b32.xlu0 %v4367, 80
        %v4396 = vpop.permute.xlu0 %4395
        %4397 = vrot.lane.b32.xlu0 %v4368, 80
        %v4398 = vpop.permute.xlu0 %4397
        %4399 = vrot.lane.b32.xlu0 %v4369, 80
        %v4400 = vpop.permute.xlu0 %4399
        %4401 = vrot.lane.b32.xlu0 %v4370, 80
        %v4402 = vpop.permute.xlu0 %4401
        %v4403 = vadd.f32 %v4344, %v4372
        %v4404 = vadd.f32 %v4345, %v4374
        %v4405 = vadd.f32 %v4346, %v4376
        %v4406 = vadd.f32 %v4347, %v4378
        %v4407 = vadd.f32 %v4348, %v4380
        %v4408 = vadd.f32 %v4349, %v4382
        %v4409 = vadd.f32 %v4350, %v4384
        %v4410 = vadd.f32 %v4351, %v4386
        %v4411 = vadd.f32 %v4352, %v4388
        %v4412 = vadd.f32 %v4353, %v4390
        %v4413 = vadd.f32 %v4354, %v4392
        %v4414 = vadd.f32 %v4355, %v4394
        %v4415 = vadd.f32 %v4356, %v4396
        %v4416 = vadd.f32 %v4357, %v4398
        %v4417 = vadd.f32 %v4358, %v4400
        %v4418 = vadd.f32 %v4359, %v4402
        %v4419 = vld [vmem:[#allocation2 + $0x240] sm:$0xff]
        %v4420 = vrot.slane %v4360, 4
        %v4421 = vrot.slane %v4361, 4
        %v4422 = vrot.slane %v4362, 4
        %v4423 = vrot.slane %v4363, 4
        %v4424 = vrot.slane %v4364, 4
        %v4425 = vrot.slane %v4365, 4
        %v4426 = vrot.slane %v4366, 4
        %v4427 = vrot.slane %v4367, 4
        %v4428 = vrot.slane %v4368, 4
        %v4429 = vrot.slane %v4369, 4
        %v4430 = vrot.slane %v4370, 4
        %v4431 = vrot.slane %v4419, 4
        %v4432 = vsel %vm2942, %v4430, %v4431
        %v4433 = vsel %vm2942, %v4429, %v4430
        %v4434 = vsel %vm2942, %v4428, %v4429
        %v4435 = vsel %vm2942, %v4427, %v4428
        %v4436 = vsel %vm2942, %v4426, %v4427
        %v4437 = vsel %vm2942, %v4425, %v4426
        %v4438 = vsel %vm2942, %v4424, %v4425
        %v4439 = vsel %vm2942, %v4423, %v4424
        %v4440 = vsel %vm2942, %v4422, %v4423
        %v4441 = vsel %vm2942, %v4421, %v4422
        %v4442 = vsel %vm2942, %v4420, %v4421
        %v4443 = vsel %vm2942, %v4251, %v4420
        %4444 = vrot.lane.b32.xlu0 %v4255, 72
        %v4445 = vpop.permute.xlu0 %4444
        %4446 = vrot.lane.b32.xlu0 %v4254, 72
        %v4447 = vpop.permute.xlu0 %4446
        %4448 = vrot.lane.b32.xlu0 %v4253, 72
        %v4449 = vpop.permute.xlu0 %4448
        %4450 = vrot.lane.b32.xlu0 %v4252, 72
        %v4451 = vpop.permute.xlu0 %4450
        %4452 = vrot.lane.b32.xlu0 %v4443, 72
        %v4453 = vpop.permute.xlu0 %4452
        %4454 = vrot.lane.b32.xlu0 %v4442, 72
        %v4455 = vpop.permute.xlu0 %4454
        %4456 = vrot.lane.b32.xlu0 %v4441, 72
        %v4457 = vpop.permute.xlu0 %4456
        %4458 = vrot.lane.b32.xlu0 %v4440, 72
        %v4459 = vpop.permute.xlu0 %4458
        %4460 = vrot.lane.b32.xlu0 %v4439, 72
        %v4461 = vpop.permute.xlu0 %4460
        %4462 = vrot.lane.b32.xlu0 %v4438, 72
        %v4463 = vpop.permute.xlu0 %4462
        %4464 = vrot.lane.b32.xlu0 %v4437, 72
        %v4465 = vpop.permute.xlu0 %4464
        %4466 = vrot.lane.b32.xlu0 %v4436, 72
        %v4467 = vpop.permute.xlu0 %4466
        %4468 = vrot.lane.b32.xlu0 %v4435, 72
        %v4469 = vpop.permute.xlu0 %4468
        %4470 = vrot.lane.b32.xlu0 %v4434, 72
        %v4471 = vpop.permute.xlu0 %4470
        %4472 = vrot.lane.b32.xlu0 %v4433, 72
        %v4473 = vpop.permute.xlu0 %4472
        %4474 = vrot.lane.b32.xlu0 %v4432, 72
        %v4475 = vpop.permute.xlu0 %4474
        %v4476 = vadd.f32 %v4403, %v4445
        %v4477 = vadd.f32 %v4404, %v4447
        %v4478 = vadd.f32 %v4405, %v4449
        %v4479 = vadd.f32 %v4406, %v4451
        %v4480 = vadd.f32 %v4407, %v4453
        %v4481 = vadd.f32 %v4408, %v4455
        %v4482 = vadd.f32 %v4409, %v4457
        %v4483 = vadd.f32 %v4410, %v4459
        %v4484 = vadd.f32 %v4411, %v4461
        %v4485 = vadd.f32 %v4412, %v4463
        %v4486 = vadd.f32 %v4413, %v4465
        %v4487 = vadd.f32 %v4414, %v4467
        %v4488 = vadd.f32 %v4415, %v4469
        %v4489 = vadd.f32 %v4416, %v4471
        %v4490 = vadd.f32 %v4417, %v4473
        %v4491 = vadd.f32 %v4418, %v4475
        %4492 = vrot.lane.b32.xlu0 %v4188, 64
        %v4493 = vpop.permute.xlu0 %4492
        %4494 = vrot.lane.b32.xlu0 %v4189, 64
        %v4495 = vpop.permute.xlu0 %4494
        %4496 = vrot.lane.b32.xlu0 %v4190, 64
        %v4497 = vpop.permute.xlu0 %4496
        %4498 = vrot.lane.b32.xlu0 %v4239, 64
        %v4499 = vpop.permute.xlu0 %4498
        %4500 = vrot.lane.b32.xlu0 %v4360, 64
        %v4501 = vpop.permute.xlu0 %4500
        %4502 = vrot.lane.b32.xlu0 %v4361, 64
        %v4503 = vpop.permute.xlu0 %4502
        %4504 = vrot.lane.b32.xlu0 %v4362, 64
        %v4505 = vpop.permute.xlu0 %4504
        %4506 = vrot.lane.b32.xlu0 %v4363, 64
        %v4507 = vpop.permute.xlu0 %4506
        %4508 = vrot.lane.b32.xlu0 %v4364, 64
        %v4509 = vpop.permute.xlu0 %4508
        %4510 = vrot.lane.b32.xlu0 %v4365, 64
        %v4511 = vpop.permute.xlu0 %4510
        %4512 = vrot.lane.b32.xlu0 %v4366, 64
        %v4513 = vpop.permute.xlu0 %4512
        %4514 = vrot.lane.b32.xlu0 %v4367, 64
        %v4515 = vpop.permute.xlu0 %4514
        %4516 = vrot.lane.b32.xlu0 %v4368, 64
        %v4517 = vpop.permute.xlu0 %4516
        %4518 = vrot.lane.b32.xlu0 %v4369, 64
        %v4519 = vpop.permute.xlu0 %4518
        %4520 = vrot.lane.b32.xlu0 %v4370, 64
        %v4521 = vpop.permute.xlu0 %4520
        %4522 = vrot.lane.b32.xlu0 %v4419, 64
        %v4523 = vpop.permute.xlu0 %4522
        %v4524 = vadd.f32 %v4476, %v4493
        %v4525 = vadd.f32 %v4477, %v4495
        %v4526 = vadd.f32 %v4478, %v4497
        %v4527 = vadd.f32 %v4479, %v4499
        %v4528 = vadd.f32 %v4480, %v4501
        %v4529 = vadd.f32 %v4481, %v4503
        %v4530 = vadd.f32 %v4482, %v4505
        %v4531 = vadd.f32 %v4483, %v4507
        %v4532 = vadd.f32 %v4484, %v4509
        %v4533 = vadd.f32 %v4485, %v4511
        %v4534 = vadd.f32 %v4486, %v4513
        %v4535 = vadd.f32 %v4487, %v4515
        %v4536 = vadd.f32 %v4488, %v4517
        %v4537 = vadd.f32 %v4489, %v4519
        %v4538 = vadd.f32 %v4490, %v4521
        %v4539 = vadd.f32 %v4491, %v4523
        %v4540 = vadd.f32 %v4524, %v3430
        %v4541 = vadd.f32 %v4525, %v3430
        %v4542 = vadd.f32 %v4526, %v3430
        %v4543 = vadd.f32 %v4527, %v3430
        %v4544 = vadd.f32 %v4528, %v3430
        %v4545 = vadd.f32 %v4529, %v3430
        %v4546 = vadd.f32 %v4530, %v3430
        %v4547 = vadd.f32 %v4531, %v3430
        %v4548 = vadd.f32 %v4532, %v3430
        %v4549 = vadd.f32 %v4533, %v3430
        %v4550 = vadd.f32 %v4534, %v3430
        %v4551 = vadd.f32 %v4535, %v3430
        %v4552 = vadd.f32 %v4536, %v3430
        %v4553 = vadd.f32 %v4537, %v3430
        %v4554 = vadd.f32 %v4538, %v3430
        %v4555 = vadd.f32 %v4539, %v3430
        %v4556 = vmax.f32 %v4540, 0.0
        %v4557 = vmax.f32 %v4541, 0.0
        %v4558 = vmax.f32 %v4542, 0.0
        %v4559 = vmax.f32 %v4543, 0.0
        %v4560 = vmax.f32 %v4544, 0.0
        %v4561 = vmax.f32 %v4545, 0.0
        %v4562 = vmax.f32 %v4546, 0.0
        %v4563 = vmax.f32 %v4547, 0.0
        %v4564 = vmax.f32 %v4548, 0.0
        %v4565 = vmax.f32 %v4549, 0.0
        %v4566 = vmax.f32 %v4550, 0.0
        %v4567 = vmax.f32 %v4551, 0.0
        %v4568 = vmax.f32 %v4552, 0.0
        %v4569 = vmax.f32 %v4553, 0.0
        %v4570 = vmax.f32 %v4554, 0.0
        %v4571 = vmax.f32 %v4555, 0.0
        %4572 = vst [vmem:[%s190 + $0x100] sm:$0xff] %v4556
        %4573 = vst [vmem:[%s190 + $0x108] sm:$0xff] %v4557
        %4574 = vst [vmem:[%s190 + $0x110] sm:$0xff] %v4558
        %4575 = vst [vmem:[%s190 + $0x118] sm:$0xff] %v4559
        %4576 = vst [vmem:[%s190 + $0x120] sm:$0xff] %v4560
        %4577 = vst [vmem:[%s190 + $0x128] sm:$0xff] %v4561
        %4578 = vst [vmem:[%s190 + $0x130] sm:$0xff] %v4562
        %4579 = vst [vmem:[%s190 + $0x138] sm:$0xff] %v4563
        %4580 = vst [vmem:[%s190 + $0x140] sm:$0xff] %v4564
        %4581 = vst [vmem:[%s190 + $0x148] sm:$0xff] %v4565
        %4582 = vst [vmem:[%s190 + $0x150] sm:$0xff] %v4566
        %4583 = vst [vmem:[%s190 + $0x158] sm:$0xff] %v4567
        %4584 = vst [vmem:[%s190 + $0x160] sm:$0xff] %v4568
        %4585 = vst [vmem:[%s190 + $0x168] sm:$0xff] %v4569
        %4586 = vst [vmem:[%s190 + $0x170] sm:$0xff] %v4570
        %4587 = vst [vmem:[%s190 + $0x178] sm:$0xff] %v4571
        %s4588 = sand.u32 %s115, 1
        %s4589 = scalar_lea.sflag [#allocation4], %s4588
        %s4590 = sand.u32 %s115, 1
        %s4591 = smul.addr %s4590, 384
        %s4592 = scalar_lea.vmem [#allocation3], %s4591
        // Predicated region
        $region37: #{tpu_custom_call.1} parent=35 // pred_check
          %p4593 = pneg %p125
        $region38: #{tpu_custom_call.1} parent=35 // pred_check_branch
          %4595 = sbr.rel (%p4593) target = $region40
        $region39: #{tpu_custom_call.1} parent=35 // pred_region
          %4597 = vsyncadd %s4589, 0
          %s4598 = smul.addr %s18, 48
          %s4599 = smul.addr %s4598, 8
          %s4600 = scalar_lea.hbm %s4, %s4599
          %s4601 = sshll.u32 %s4592, 4
          %s4602 = int_to_ptr.vmem [resolvable:$true] %s4601
          %s4603 = sshll.u32 %s4600, 4
          %s4604 = int_to_ptr.hbm [resolvable:$true] %s4603
          %4609 = dma.vmem_to_hbm [thread:$0]  %s4602, 6144, %s4604, %s4589, 128, 128, 8
        $region40: #{tpu_custom_call.1} parent=35 // pred_fallthru
          _
      $region36: #{tpu_custom_call.1} parent=5 // pred_fallthru
        _
      %p4610 = scmp.le.s32.totalorder 2, %s13
      // Predicated region
      $region41: #{tpu_custom_call.1} parent=5 // pred_check
        %p4611 = pneg %p4610
      $region42: #{tpu_custom_call.1} parent=5 // pred_check_branch
        %4613 = sbr.rel (%p4611) target = $region44
      $region43: #{tpu_custom_call.1} parent=5 // pred_region
        %s4614 = ssub.s32 %s13, 2
        // Predicated region
        $region45: #{tpu_custom_call.1} parent=43 // pred_check
          %p4615 = pneg %p131
        $region46: #{tpu_custom_call.1} parent=43 // pred_check_branch
          %4617 = sbr.rel (%p4615) target = $region48
        $region47: #{tpu_custom_call.1} parent=43 // pred_region
          %s4618 = sand.u32 %s116, 1
          %s4619 = scalar_lea.sflag [#allocation4], %s4618
          %s4620 = sand.u32 %s116, 1
          %s4621 = smul.addr %s4620, 384
          %s4622 = scalar_lea.vmem [#allocation3], %s4621
          %4624 = dma.done %s4619, 6144
        $region48: #{tpu_custom_call.1} parent=43 // pred_fallthru
          _
      $region44: #{tpu_custom_call.1} parent=5 // pred_fallthru
        _
    $region6: #{tpu_custom_call.1} parent=1 // loop_footer
      %s17 = sadd.s32 1, %s13
    $region7: #{tpu_custom_call.1} parent=1 // loop_footer_branch
      %12 = sbr.rel target = $region3
    $region8: #{tpu_custom_call.1} parent=1 // loop_exit
      _
    %4625 = vsyncpa [#allocation4], 1
    %s4626 = scalar_lea.sflag [#allocation4], 1
    %4627 = vsyncpa %s4626, 1

</llo_original>
